<compile_context>
chip_gen: v7x
topology: tpu7x:2x2x1
jax: 0.10.0
libtpu: 0.0.40
codegen_flags: <defaults>
</compile_context>

<pallas_src>
import functools

import jax
import jax.numpy as jnp
from jax.experimental import pallas as pl
from jax.experimental.pallas import tpu as pltpu


_SQRT_HALF = 0.7071067811865476


@functools.lru_cache(maxsize=1)
def _vmem_limit():
    """Scoped-VMEM budget: capacity-aware (tight on v7x, generous on v5e/v6e)."""
    try:
        cap = pltpu.get_tpu_info().vmem_capacity_bytes
        return int(min(max(cap - 24 * 1024 * 1024, 32 * 1024 * 1024),
                       100 * 1024 * 1024))
    except Exception:
        return 48 * 1024 * 1024          # safe everywhere (within v7x's 64 MiB)


@functools.lru_cache(maxsize=1)
def _score_dtype():
    """bf16 scoring path only on chips with bf16 VPU/EUP (v6e / v7x)."""
    try:
        kind = jax.devices()[0].device_kind.lower()
    except Exception:
        return jnp.float32
    if ("v6" in kind) or ("v7" in kind):
        return jnp.bfloat16
    return jnp.float32


def _erf(x):
    # Abramowitz & Stegun 7.1.26 rational approximation. Dtype-preserving (works in bf16).
    p = 0.3275911
    a1, a2, a3, a4, a5 = (0.254829592, -0.284496736, 1.421413741,
                          -1.453152027, 1.061405429)
    one = jnp.asarray(1.0, x.dtype)
    sgn = jnp.where(x >= 0, one, -one)
    ax = jnp.abs(x)
    t = 1.0 / (1.0 + p * ax)
    poly = ((((a5 * t + a4) * t + a3) * t + a2) * t + a1) * t
    return sgn * (1.0 - poly * jnp.exp(-ax * ax))


def _gelu(x):
    # exact (erf-based) GELU -- matches torch.nn.GELU() default (approximate='none').
    return 0.5 * x * (1.0 + _erf(x * _SQRT_HALF))


def _row_block(m, cap=512):
    """Row-tile size: full array if small, else a 512-row (8-aligned) tile."""
    return m if m <= cap else cap


def _attn_tile(t, cap=128):
    """Query/key tile size: largest power-of-two divisor of t up to 128."""
    for cand in (128, 64, 32, 16, 8):
        if cand <= cap and t % cand == 0:
            return cand
    return t


def _bf16(x):
    return x.astype(jnp.bfloat16)


# ----------------------------------------------------------------------------
# Kernel 1: GeluFeedForward   y = gelu(x @ W1 + b1) @ W2 + b2   (row-tiled)
# ----------------------------------------------------------------------------
def _mlp_kernel(x_ref, w1_ref, b1_ref, w2_ref, b2_ref, o_ref):
    h = jnp.dot(_bf16(x_ref[...]), _bf16(w1_ref[...]),
                preferred_element_type=jnp.float32) + b1_ref[...]
    h = _gelu(h)
    o_ref[...] = jnp.dot(_bf16(h), _bf16(w2_ref[...]),
                         preferred_element_type=jnp.float32) + b2_ref[...]


def gelu_feed_forward(x2d, w1, b1, w2, b2):
    m, din = x2d.shape
    dh = w1.shape[1]
    dout = w2.shape[1]
    tm = _row_block(m)
    return pl.pallas_call(
        _mlp_kernel,
        out_shape=jax.ShapeDtypeStruct((m, dout), jnp.float32),
        grid=(pl.cdiv(m, tm),),
        in_specs=[
            pl.BlockSpec((tm, din), lambda i: (i, 0)),
            pl.BlockSpec((din, dh), lambda i: (0, 0)),
            pl.BlockSpec((1, dh), lambda i: (0, 0)),
            pl.BlockSpec((dh, dout), lambda i: (0, 0)),
            pl.BlockSpec((1, dout), lambda i: (0, 0)),
        ],
        out_specs=pl.BlockSpec((tm, dout), lambda i: (i, 0)),
        compiler_params=pltpu.CompilerParams(
            dimension_semantics=("parallel",),
            vmem_limit_bytes=_vmem_limit()),
    )(x2d, w1, b1, w2, b2)


# ----------------------------------------------------------------------------
# Kernel 2: Block FFN with LayerNorm + residual (row-tiled)
#           y = x + gelu(LN(x) @ W1) @ W2        (GeluFeedForward bias=False)
# ----------------------------------------------------------------------------
def _ln_ffn_kernel(x_ref, g_ref, b_ref, w1_ref, w2_ref, o_ref):
    x = x_ref[...]
    mu = jnp.mean(x, axis=-1, keepdims=True)
    var = jnp.mean((x - mu) ** 2, axis=-1, keepdims=True)   # biased, like torch LN
    xn = (x - mu) * jax.lax.rsqrt(var + 1e-5) * g_ref[...] + b_ref[...]
    h = _gelu(jnp.dot(_bf16(xn), _bf16(w1_ref[...]),
                      preferred_element_type=jnp.float32))
    o_ref[...] = x + jnp.dot(_bf16(h), _bf16(w2_ref[...]),
                             preferred_element_type=jnp.float32)


def ln_ffn_residual(x2d, gamma, beta, w1, w2):
    m, c = x2d.shape
    dh = w1.shape[1]
    tm = _row_block(m)
    return pl.pallas_call(
        _ln_ffn_kernel,
        out_shape=jax.ShapeDtypeStruct((m, c), jnp.float32),
        grid=(pl.cdiv(m, tm),),
        in_specs=[
            pl.BlockSpec((tm, c), lambda i: (i, 0)),
            pl.BlockSpec((1, c), lambda i: (0, 0)),
            pl.BlockSpec((1, c), lambda i: (0, 0)),
            pl.BlockSpec((c, dh), lambda i: (0, 0)),
            pl.BlockSpec((dh, c), lambda i: (0, 0)),
        ],
        out_specs=pl.BlockSpec((tm, c), lambda i: (i, 0)),
        compiler_params=pltpu.CompilerParams(
            dimension_semantics=("parallel",),
            vmem_limit_bytes=_vmem_limit()),
    )(x2d, gamma, beta, w1, w2)


# ----------------------------------------------------------------------------
# Kernel 3: batch-invariant contraction  pdc[h] = pos_dist_flat @ W1_d[h] + b1[h]
# (computed once per layer, not per batch; b1 folded here; emitted in bf16 to
#  halve the HBM traffic re-read every layer by the attention kernel)
# ----------------------------------------------------------------------------
def _pdc_kernel(de_ref, w1d_ref, b1_ref, o_ref):
    acc = jnp.dot(_bf16(de_ref[...]), _bf16(w1d_ref[0]),
                  preferred_element_type=jnp.float32) + b1_ref[0]
    o_ref[0] = acc.astype(o_ref.dtype)


def pos_dist_contract(de_flat, w1d, b1):
    m, c2 = de_flat.shape           # (t*t, 2c)
    nh, _, c = w1d.shape            # (nh, 2c, c)
    tm = _row_block(m)
    return pl.pallas_call(
        _pdc_kernel,
        out_shape=jax.ShapeDtypeStruct((nh, m, c), jnp.bfloat16),
        # heads innermost -> the (tm, 2c) `de` tile stays resident across heads (no re-DMA)
        grid=(pl.cdiv(m, tm), nh),
        in_specs=[
            pl.BlockSpec((tm, c2), lambda i, h: (i, 0)),
            pl.BlockSpec((1, c2, c), lambda i, h: (h, 0, 0)),
            pl.BlockSpec((1, 1, c), lambda i, h: (h, 0, 0)),
        ],
        out_specs=pl.BlockSpec((1, tm, c), lambda i, h: (h, i, 0)),
        compiler_params=pltpu.CompilerParams(
            dimension_semantics=("parallel", "parallel"),
            vmem_limit_bytes=_vmem_limit()),
    )(de_flat, w1d, b1)


# ----------------------------------------------------------------------------
# Kernel 4: fused multi-head NNAttention + residual, flash-style over key tiles.
#   grid = (batch, q_tile, k_tile);  k_tile axis is 'arbitrary' (accumulation).
#   Per-head scoring MLP GeluFeedForward(4c -> c -> 1) on concat([k, q, pos_dist]) is
#   decomposed across the concat axis (W1 = [W1_k; W1_q; W1_d]) -- exact by linearity.
#   b1 is pre-folded into pdc, b2 is a softmax no-op (dropped), scale pre-folded into W2.
#   Fully-masked key tiles (k > q) are skipped; their input index_maps are clamped to
#   min(k, q) so no DMA is issued for skipped steps.
# ----------------------------------------------------------------------------
def _attn_kernel(xq_ref, peq_ref, xk_ref, pek_ref, pdc_ref,
                 w1k_ref, w1q_ref, w2_ref, wv_ref, bv_ref,
                 o_ref, xqp_ref, m_ref, l_ref, acc_ref, *, nh, cd):
    qi = pl.program_id(1)
    ki = pl.program_id(2)
    tq = xq_ref.shape[1]
    tk = xk_ref.shape[1]
    c = xq_ref.shape[2]
    hs = o_ref.shape[2] // nh

    @pl.when(ki == 0)
    def _init():
        # query-side projection computed once per (batch, q-tile), reused for every k-tile
        x1q = xq_ref[0] + peq_ref[...]
        xqp_ref[...] = jnp.dot(_bf16(x1q), _bf16(w1q_ref[...]),
                               preferred_element_type=jnp.float32).astype(cd)
        m_ref[...] = jnp.full_like(m_ref, -1e30)
        l_ref[...] = jnp.zeros_like(l_ref)
        acc_ref[...] = jnp.zeros_like(acc_ref)

    @pl.when(ki <= qi)                   # causal tile skip (upper-triangle tiles are dead)
    def _compute():
        xk = xk_ref[0]                                                     # (tk, c) f32
        x1k = xk + pek_ref[...]
        xkp = jnp.dot(_bf16(x1k), _bf16(w1k_ref[...]),
                      preferred_element_type=jnp.float32).astype(cd)       # (tk, nh*c)
        v_all = jnp.dot(_bf16(xk), _bf16(wv_ref[...]),
                        preferred_element_type=jnp.float32) + bv_ref[...]  # (tk, nh*hs)

        row = qi * tq + jax.lax.broadcasted_iota(jnp.int32, (tq, tk), 0)
        col = ki * tk + jax.lax.broadcasted_iota(jnp.int32, (tq, tk), 1)
        keep = col <= row                       # causal (tril) mask, built in-kernel
        neg = jnp.float32(-1e30)                # large finite negative instead of -inf

        xqp = xqp_ref[...]                      # (tq, nh*c) in cd
        w2 = w2_ref[...].astype(cd)             # (1, nh*c)  per-head (c,1) W2 rows, scale folded

        for h in range(nh):                     # static unroll; per-head state lives in scratch
            lo = h * c
            a = (xqp[:, lo:lo + c][:, None, :] +
                 xkp[:, lo:lo + c][None, :, :] +
                 pdc_ref[h].astype(cd))         # (tq, tk, c) in cd (b1 already inside pdc)
            a = _gelu(a)
            # (c -> 1) Linear as VPU multiply + f32 lane reduction (no 1-lane MXU matmul)
            s = jnp.sum((a * w2[:, lo:lo + c]).astype(jnp.float32), axis=-1)   # (tq, tk)
            s = jnp.where(keep, s, neg)

            m_old = m_ref[h]                                            # (tq, 1)
            m_new = jnp.maximum(m_old, jnp.max(s, axis=-1, keepdims=True))
            alpha = jnp.exp(m_old - m_new)
            p = jnp.exp(s - m_new)                                      # (tq, tk) f32
            l_ref[h] = alpha * l_ref[h] + jnp.sum(p, axis=-1, keepdims=True)
            pv = jnp.dot(_bf16(p), _bf16(v_all[:, h * hs:(h + 1) * hs]),
                         preferred_element_type=jnp.float32)            # (tq, hs)
            acc_ref[:, h * hs:(h + 1) * hs] = (
                alpha * acc_ref[:, h * hs:(h + 1) * hs] + pv)
            m_ref[h] = m_new

    @pl.when(ki == qi)                    # last *kept* key tile for this q tile -> finalize
    def _finalize():
        parts = []
        for h in range(nh):
            inv = pl.reciprocal(l_ref[h], approx=True)      # softmax denom on the EUP slot
            parts.append(acc_ref[:, h * hs:(h + 1) * hs] * inv)
        # Block residual fused: x = x + sa(x, ...)  (requires nh*hs == c, as in the module)
        o_ref[0] = xq_ref[0] + jnp.concatenate(parts, axis=-1)


def multi_head_attention(x, pe, pdc, blk):
    b, t, c = x.shape
    nh = pdc.shape[0]
    hs = blk['wv'].shape[1] // nh
    assert nh * hs == c, "residual add requires n_head * head_size == n_embed"
    tile = _attn_tile(t)
    nq = t // tile
    cd = _score_dtype()
    kernel = functools.partial(_attn_kernel, nh=nh, cd=cd)
    clamp = jnp.minimum                      # no DMA re-issue for skipped (k > q) tiles
    return pl.pallas_call(
        kernel,
        out_shape=jax.ShapeDtypeStruct((b, t, nh * hs), jnp.float32),
        grid=(b, nq, nq),
        in_specs=[
            pl.BlockSpec((1, tile, c), lambda bi, qi, ki: (bi, qi, 0)),              # x (q rows)
            pl.BlockSpec((tile, c), lambda bi, qi, ki: (qi, 0)),                     # pe (q rows)
            pl.BlockSpec((1, tile, c), lambda bi, qi, ki: (bi, clamp(ki, qi), 0)),   # x (k rows)
            pl.BlockSpec((tile, c), lambda bi, qi, ki: (clamp(ki, qi), 0)),          # pe (k rows)
            pl.BlockSpec((nh, tile, tile, c),
                         lambda bi, qi, ki: (0, qi, clamp(ki, qi), 0)),              # pdc (bf16)
            pl.BlockSpec((c, nh * c), lambda bi, qi, ki: (0, 0)),                    # W1_k stacked
            pl.BlockSpec((c, nh * c), lambda bi, qi, ki: (0, 0)),                    # W1_q stacked
            pl.BlockSpec((1, nh * c), lambda bi, qi, ki: (0, 0)),                    # W2 (scaled)
            pl.BlockSpec((c, nh * hs), lambda bi, qi, ki: (0, 0)),                   # Wv stacked
            pl.BlockSpec((1, nh * hs), lambda bi, qi, ki: (0, 0)),                   # bv stacked
        ],
        out_specs=pl.BlockSpec((1, tile, nh * hs), lambda bi, qi, ki: (bi, qi, 0)),
        scratch_shapes=[
            pltpu.VMEM((tile, nh * c), cd),            # query-side projection
            pltpu.VMEM((nh, tile, 1), jnp.float32),    # running max
            pltpu.VMEM((nh, tile, 1), jnp.float32),    # running sum
            pltpu.VMEM((tile, nh * hs), jnp.float32),  # PV accumulator (lane-dense)
        ],
        compiler_params=pltpu.CompilerParams(
            dimension_semantics=("parallel", "parallel", "arbitrary"),
            vmem_limit_bytes=_vmem_limit()),
    )(x, pe, x, pe, pdc, blk['att_w1k'], blk['att_w1q'], blk['att_w2'],
      blk['wv'], blk['bv'])


# ----------------------------------------------------------------------------
# Full model forward (glue = reshapes / embedding gathers, all metadata-only)
# ----------------------------------------------------------------------------
def transformer_forward(params, x, cfg):
    b, t, cin = x.shape
    c = cfg['n_embed']
    bs = cfg['block_size']
    hd = cfg['hidden_size']
    nh = cfg['n_head']
    assert t == bs, "pos_dist_emb is built with block_size, so t must equal block_size"

    zeros_h = jnp.zeros((1, hd), jnp.float32)
    zeros_c = jnp.zeros((1, c), jnp.float32)

    # ffwd1: GeluFeedForward(input_embed -> hidden -> n_embed, bias=False)
    h = gelu_feed_forward(x.reshape(b * t, cin),
                          params['ffwd1_w1'], zeros_h,
                          params['ffwd1_w2'], zeros_c).reshape(b, t, c)

    # PositionalEmbedding: FF on the UN-broadcast (t, c) table (batch-invariant)
    p = params['pos_ff']
    pe = gelu_feed_forward(params['pos_table'][:t],
                           p['w1'], p['b1'], p['w2'], p['b2'])            # (t, c)

    # DistancePositionalEmbedding: FF on the UN-broadcast (bs*bs, c) gather
    dist_idx = jnp.tril(jnp.arange(bs)[:, None] - jnp.arange(bs)[None, :])
    de = params['dist_table'][dist_idx].reshape(bs * bs, c)
    p = params['dist_ff']
    de = gelu_feed_forward(de, p['w1'], p['b1'], p['w2'], p['b2'])        # (bs*bs, 2c)

    # BlockSequence
    for blk in params['blocks']:
        # batch-invariant contraction (with b1 folded), once per (layer, head), bf16 output
        pdc = pos_dist_contract(de, blk['att_w1d'],
                                blk['att_b1']).reshape(nh, bs, bs, c)
        h = multi_head_attention(h, pe, pdc, blk)                         # x = x + sa(x,...)
        h = ln_ffn_residual(h.reshape(b * t, c), blk['ln_g'], blk['ln_b'],
                            blk['ff_w1'], blk['ff_w2']).reshape(b, t, c)  # x = x + ffwd(ln2(x))

    # ffwd2: GeluFeedForward(n_embed -> hidden -> input_embed, bias=True)
    p = params['ffwd2']
    out = gelu_feed_forward(h.reshape(b * t, c), p['w1'], p['b1'],
                            p['w2'], p['b2']).reshape(b, t, cin)
    return out


# ----------------------------------------------------------------------------
# Deterministic parameter init (shapes follow the module __init__; per-head attention
# weights are stored pre-stacked along the lane axis for the fused kernel; the
# c**-0.5 scale is pre-folded into att_w2; att_b2 is kept for parity but is a softmax
# no-op and is never used)
# ----------------------------------------------------------------------------
def init_params(key, cfg):
    c = cfg['n_embed']
    cin = cfg['input_embed']
    hd = cfg['hidden_size']
    bs = cfg['block_size']
    nh = cfg['n_head']
    hs = cfg['head_size']
    scale = float(c) ** (-0.5)
    keys = iter(jax.random.split(key, 256))

    def w(shape, s=0.05):
        return s * jax.random.normal(next(keys), shape, jnp.float32)

    params = {
        'pos_table': w((bs, c), 1.0),
        'pos_ff': dict(w1=w((c, c)), b1=w((1, c)), w2=w((c, c)), b2=w((1, c))),
        'dist_table': w((bs, c), 1.0),
        'dist_ff': dict(w1=w((c, c)), b1=w((1, c)), w2=w((c, 2 * c)), b2=w((1, 2 * c))),
        'ffwd1_w1': w((cin, hd)), 'ffwd1_w2': w((hd, c)),
        'ffwd2': dict(w1=w((c, hd)), b1=w((1, hd)), w2=w((hd, cin)), b2=w((1, cin))),
        'blocks': [],
    }
    for _ in range(cfg['n_layer']):
        att_w1 = w((nh, 4 * c, c), 0.1)      # scoring-MLP first Linear, per head; split by input
        w1k = att_w1[:, :c, :]               # (nh, c, c)   acts on k (index j)
        w1q = att_w1[:, c:2 * c, :]          # (nh, c, c)   acts on q (index i)
        w1d = att_w1[:, 2 * c:, :]           # (nh, 2c, c)  acts on pos_dist_emb
        b1 = w((nh, c))
        wv = w((nh, c, hs), 0.1)             # value Linear per head
        params['blocks'].append(dict(
            att_w1k=jnp.transpose(w1k, (1, 0, 2)).reshape(c, nh * c),   # heads along lanes
            att_w1q=jnp.transpose(w1q, (1, 0, 2)).reshape(c, nh * c),
            att_w1d=w1d,                                                # per-head, for pdc kernel
            att_b1=b1[:, None, :],                                      # (nh,1,c) folded into pdc
            att_w2=(w((nh, c), 0.1) * scale).reshape(1, nh * c),        # scale pre-folded
            att_b2=w((nh,)),                # softmax-invariant (uniform along keys) -> unused
            wv=jnp.transpose(wv, (1, 0, 2)).reshape(c, nh * hs),
            bv=w((nh, hs)).reshape(1, nh * hs),
            ln_g=jnp.ones((1, c), jnp.float32),     # torch LayerNorm default init
            ln_b=jnp.zeros((1, c), jnp.float32),
            ff_w1=w((c, hd), 0.1),
            ff_w2=w((hd, c), 0.1),
        ))
    return params


if __name__ == "__main__":
    cfg = dict(input_embed=4, n_embed=16, n_head=2, head_size=8,
               hidden_size=64, n_layer=2, block_size=8, dropout=0.1)
    key = jax.random.PRNGKey(0)
    pkey, xkey = jax.random.split(key)
    params = init_params(pkey, cfg)

    b, t = 2, cfg['block_size']          # t must equal block_size (as in the torch module)
    x = jax.random.normal(xkey, (b, t, cfg['input_embed']), jnp.float32)

    fwd = jax.jit(functools.partial(transformer_forward, cfg=cfg))
    out = fwd(params, x)
    jax.block_until_ready(out)
    assert out.shape == (b, t, cfg['input_embed'])
    print("KERNEL_OK")
</pallas_src>

<mosaic_0001>
module attributes {stable_mosaic.version = 11 : i64} {
  func.func @_mlp_kernel(%arg0: i32, %arg1: memref<8x16xf32, #tpu.memory_space<vmem>>, %arg2: memref<16x16xf32, #tpu.memory_space<vmem>>, %arg3: memref<1x16xf32, #tpu.memory_space<vmem>>, %arg4: memref<16x16xf32, #tpu.memory_space<vmem>>, %arg5: memref<1x16xf32, #tpu.memory_space<vmem>>, %arg6: memref<8x16xf32, #tpu.memory_space<vmem>>) attributes {dimension_semantics = [#tpu.dimension_semantics<parallel>], iteration_bounds = array<i64: 1>, scalar_prefetch = 0 : i64, scratch_operands = 0 : i64, tpu.core_type = #tpu.core_type<tc>, window_params = [{transform_indices = @transform_0, window_bounds = array<i64: 8, 16>}, {pipeline_mode = #tpu.pipeline_mode<synchronous>, transform_indices = @transform_1, window_bounds = array<i64: 16, 16>}, {pipeline_mode = #tpu.pipeline_mode<synchronous>, transform_indices = @transform_2, window_bounds = array<i64: 1, 16>}, {pipeline_mode = #tpu.pipeline_mode<synchronous>, transform_indices = @transform_3, window_bounds = array<i64: 16, 16>}, {pipeline_mode = #tpu.pipeline_mode<synchronous>, transform_indices = @transform_4, window_bounds = array<i64: 1, 16>}, {transform_indices = @transform_5, window_bounds = array<i64: 8, 16>}]} {
    %c0 = arith.constant 0 : index
    %c0_0 = arith.constant 0 : index
    %0 = vector.load %arg1[%c0, %c0_0] : memref<8x16xf32, #tpu.memory_space<vmem>>, vector<8x16xf32>
    %1 = arith.truncf %0 : vector<8x16xf32> to vector<8x16xbf16>
    %c0_1 = arith.constant 0 : index
    %c0_2 = arith.constant 0 : index
    %2 = vector.load %arg2[%c0_1, %c0_2] : memref<16x16xf32, #tpu.memory_space<vmem>>, vector<16x16xf32>
    %3 = arith.truncf %2 : vector<16x16xf32> to vector<16x16xbf16>
    %cst = arith.constant dense<0.000000e+00> : vector<8x16xf32>
    %4 = tpu.matmul %1, %3, %cst {dimension_numbers = #tpu.dot_dimension_numbers<[1], [0], [0], [1], [0, 0, 1, 1], [], []>} : vector<8x16xbf16>, vector<16x16xbf16>, vector<8x16xf32> -> vector<8x16xf32>
    %c0_3 = arith.constant 0 : index
    %c0_4 = arith.constant 0 : index
    %5 = vector.load %arg3[%c0_3, %c0_4] : memref<1x16xf32, #tpu.memory_space<vmem>>, vector<1x16xf32>
    %6 = vector.broadcast %5 : vector<1x16xf32> to vector<8x16xf32>
    %7 = arith.addf %4, %6 : vector<8x16xf32>
    %cst_5 = arith.constant 5.000000e-01 : f32
    %8 = vector.broadcast %cst_5 : f32 to vector<8x16xf32>
    %9 = arith.mulf %8, %7 : vector<8x16xf32>
    %cst_6 = arith.constant 0.707106769 : f32
    %10 = vector.broadcast %cst_6 : f32 to vector<8x16xf32>
    %11 = arith.mulf %7, %10 : vector<8x16xf32>
    %cst_7 = arith.constant 0.000000e+00 : f32
    %12 = vector.broadcast %cst_7 : f32 to vector<8x16xf32>
    %13 = arith.cmpf oge, %11, %12 : vector<8x16xf32>
    %cst_8 = arith.constant 0.000000e+00 : f32
    %cst_9 = arith.constant 1.000000e+00 : f32
    %14 = arith.subf %cst_8, %cst_9 : f32
    %cst_10 = arith.constant 1.000000e+00 : f32
    %15 = vector.broadcast %cst_10 : f32 to vector<8x16xf32>
    %16 = vector.broadcast %14 : f32 to vector<8x16xf32>
    %17 = arith.select %13, %15, %16 : vector<8x16xi1>, vector<8x16xf32>
    %18 = math.absf %11 : vector<8x16xf32>
    %cst_11 = arith.constant 0.327591091 : f32
    %19 = vector.broadcast %cst_11 : f32 to vector<8x16xf32>
    %20 = arith.mulf %19, %18 : vector<8x16xf32>
    %cst_12 = arith.constant 1.000000e+00 : f32
    %21 = vector.broadcast %cst_12 : f32 to vector<8x16xf32>
    %22 = arith.addf %21, %20 : vector<8x16xf32>
    %cst_13 = arith.constant 1.000000e+00 : f32
    %23 = vector.broadcast %cst_13 : f32 to vector<8x16xf32>
    %24 = arith.divf %23, %22 : vector<8x16xf32>
    %cst_14 = arith.constant 1.06140542 : f32
    %25 = vector.broadcast %cst_14 : f32 to vector<8x16xf32>
    %26 = arith.mulf %25, %24 : vector<8x16xf32>
    %cst_15 = arith.constant -1.45315206 : f32
    %27 = vector.broadcast %cst_15 : f32 to vector<8x16xf32>
    %28 = arith.addf %26, %27 : vector<8x16xf32>
    %29 = arith.mulf %28, %24 : vector<8x16xf32>
    %cst_16 = arith.constant 1.42141378 : f32
    %30 = vector.broadcast %cst_16 : f32 to vector<8x16xf32>
    %31 = arith.addf %29, %30 : vector<8x16xf32>
    %32 = arith.mulf %31, %24 : vector<8x16xf32>
    %cst_17 = arith.constant -0.284496725 : f32
    %33 = vector.broadcast %cst_17 : f32 to vector<8x16xf32>
    %34 = arith.addf %32, %33 : vector<8x16xf32>
    %35 = arith.mulf %34, %24 : vector<8x16xf32>
    %cst_18 = arith.constant 0.254829586 : f32
    %36 = vector.broadcast %cst_18 : f32 to vector<8x16xf32>
    %37 = arith.addf %35, %36 : vector<8x16xf32>
    %38 = arith.mulf %37, %24 : vector<8x16xf32>
    %cst_19 = arith.constant 0.000000e+00 : f32
    %39 = vector.broadcast %cst_19 : f32 to vector<8x16xf32>
    %40 = arith.subf %39, %18 : vector<8x16xf32>
    %41 = arith.mulf %40, %18 : vector<8x16xf32>
    %42 = math.exp %41 : vector<8x16xf32>
    %43 = arith.mulf %38, %42 : vector<8x16xf32>
    %cst_20 = arith.constant 1.000000e+00 : f32
    %44 = vector.broadcast %cst_20 : f32 to vector<8x16xf32>
    %45 = arith.subf %44, %43 : vector<8x16xf32>
    %46 = arith.mulf %17, %45 : vector<8x16xf32>
    %cst_21 = arith.constant 1.000000e+00 : f32
    %47 = vector.broadcast %cst_21 : f32 to vector<8x16xf32>
    %48 = arith.addf %47, %46 : vector<8x16xf32>
    %49 = arith.mulf %9, %48 : vector<8x16xf32>
    %50 = arith.truncf %49 : vector<8x16xf32> to vector<8x16xbf16>
    %c0_22 = arith.constant 0 : index
    %c0_23 = arith.constant 0 : index
    %51 = vector.load %arg4[%c0_22, %c0_23] : memref<16x16xf32, #tpu.memory_space<vmem>>, vector<16x16xf32>
    %52 = arith.truncf %51 : vector<16x16xf32> to vector<16x16xbf16>
    %cst_24 = arith.constant dense<0.000000e+00> : vector<8x16xf32>
    %53 = tpu.matmul %50, %52, %cst_24 {dimension_numbers = #tpu.dot_dimension_numbers<[1], [0], [0], [1], [0, 0, 1, 1], [], []>} : vector<8x16xbf16>, vector<16x16xbf16>, vector<8x16xf32> -> vector<8x16xf32>
    %c0_25 = arith.constant 0 : index
    %c0_26 = arith.constant 0 : index
    %54 = vector.load %arg5[%c0_25, %c0_26] : memref<1x16xf32, #tpu.memory_space<vmem>>, vector<1x16xf32>
    %55 = vector.broadcast %54 : vector<1x16xf32> to vector<8x16xf32>
    %56 = arith.addf %53, %55 : vector<8x16xf32>
    %c0_27 = arith.constant 0 : index
    %c0_28 = arith.constant 0 : index
    %57 = vector.load %arg6[%c0_27, %c0_28] : memref<8x16xf32, #tpu.memory_space<vmem>>, vector<8x16xf32>
    tpu.vector_store %arg6[%c0_27, %c0_28], %56 {strides = array<i32>} : memref<8x16xf32, #tpu.memory_space<vmem>>, vector<8x16xf32>,
    return
  }
  func.func @transform_0(%arg0: i32) -> (i32, i32) {
    %c0_i32 = arith.constant 0 : i32
    %c0_i32_0 = arith.constant 0 : i32
    return %arg0, %c0_i32 : i32, i32
  }
  func.func @transform_1(%arg0: i32) -> (i32, i32) {
    %c0_i32 = arith.constant 0 : i32
    %c0_i32_0 = arith.constant 0 : i32
    %c0_i32_1 = arith.constant 0 : i32
    return %c0_i32, %c0_i32_0 : i32, i32
  }
  func.func @transform_2(%arg0: i32) -> (i32, i32) {
    %c0_i32 = arith.constant 0 : i32
    %c0_i32_0 = arith.constant 0 : i32
    %c0_i32_1 = arith.constant 0 : i32
    return %c0_i32, %c0_i32_0 : i32, i32
  }
  func.func @transform_3(%arg0: i32) -> (i32, i32) {
    %c0_i32 = arith.constant 0 : i32
    %c0_i32_0 = arith.constant 0 : i32
    %c0_i32_1 = arith.constant 0 : i32
    return %c0_i32, %c0_i32_0 : i32, i32
  }
  func.func @transform_4(%arg0: i32) -> (i32, i32) {
    %c0_i32 = arith.constant 0 : i32
    %c0_i32_0 = arith.constant 0 : i32
    %c0_i32_1 = arith.constant 0 : i32
    return %c0_i32, %c0_i32_0 : i32, i32
  }
  func.func @transform_5(%arg0: i32) -> (i32, i32) {
    %c0_i32 = arith.constant 0 : i32
    %c0_i32_0 = arith.constant 0 : i32
    return %arg0, %c0_i32 : i32, i32
  }
}

module attributes {stable_mosaic.version = 11 : i64} {
  func.func @_mlp_kernel(%arg0: i32, %arg1: memref<16x4xf32, #tpu.memory_space<vmem>>, %arg2: memref<4x64xf32, #tpu.memory_space<vmem>>, %arg3: memref<1x64xf32, #tpu.memory_space<vmem>>, %arg4: memref<64x16xf32, #tpu.memory_space<vmem>>, %arg5: memref<1x16xf32, #tpu.memory_space<vmem>>, %arg6: memref<16x16xf32, #tpu.memory_space<vmem>>) attributes {dimension_semantics = [#tpu.dimension_semantics<parallel>], iteration_bounds = array<i64: 1>, scalar_prefetch = 0 : i64, scratch_operands = 0 : i64, tpu.core_type = #tpu.core_type<tc>, window_params = [{transform_indices = @transform_0, window_bounds = array<i64: 16, 4>}, {pipeline_mode = #tpu.pipeline_mode<synchronous>, transform_indices = @transform_1, window_bounds = array<i64: 4, 64>}, {pipeline_mode = #tpu.pipeline_mode<synchronous>, transform_indices = @transform_2, window_bounds = array<i64: 1, 64>}, {pipeline_mode = #tpu.pipeline_mode<synchronous>, transform_indices = @transform_3, window_bounds = array<i64: 64, 16>}, {pipeline_mode = #tpu.pipeline_mode<synchronous>, transform_indices = @transform_4, window_bounds = array<i64: 1, 16>}, {transform_indices = @transform_5, window_bounds = array<i64: 16, 16>}]} {
    %c0 = arith.constant 0 : index
    %c0_0 = arith.constant 0 : index
    %0 = vector.load %arg1[%c0, %c0_0] : memref<16x4xf32, #tpu.memory_space<vmem>>, vector<16x4xf32>
    %1 = arith.truncf %0 : vector<16x4xf32> to vector<16x4xbf16>
    %c0_1 = arith.constant 0 : index
    %c0_2 = arith.constant 0 : index
    %2 = vector.load %arg2[%c0_1, %c0_2] : memref<4x64xf32, #tpu.memory_space<vmem>>, vector<4x64xf32>
    %3 = arith.truncf %2 : vector<4x64xf32> to vector<4x64xbf16>
    %cst = arith.constant dense<0.000000e+00> : vector<16x64xf32>
    %4 = tpu.matmul %1, %3, %cst {dimension_numbers = #tpu.dot_dimension_numbers<[1], [0], [0], [1], [0, 0, 1, 1], [], []>} : vector<16x4xbf16>, vector<4x64xbf16>, vector<16x64xf32> -> vector<16x64xf32>
    %c0_3 = arith.constant 0 : index
    %c0_4 = arith.constant 0 : index
    %5 = vector.load %arg3[%c0_3, %c0_4] : memref<1x64xf32, #tpu.memory_space<vmem>>, vector<1x64xf32>
    %6 = vector.broadcast %5 : vector<1x64xf32> to vector<16x64xf32>
    %7 = arith.addf %4, %6 : vector<16x64xf32>
    %cst_5 = arith.constant 5.000000e-01 : f32
    %8 = vector.broadcast %cst_5 : f32 to vector<16x64xf32>
    %9 = arith.mulf %8, %7 : vector<16x64xf32>
    %cst_6 = arith.constant 0.707106769 : f32
    %10 = vector.broadcast %cst_6 : f32 to vector<16x64xf32>
    %11 = arith.mulf %7, %10 : vector<16x64xf32>
    %cst_7 = arith.constant 0.000000e+00 : f32
    %12 = vector.broadcast %cst_7 : f32 to vector<16x64xf32>
    %13 = arith.cmpf oge, %11, %12 : vector<16x64xf32>
    %cst_8 = arith.constant 0.000000e+00 : f32
    %cst_9 = arith.constant 1.000000e+00 : f32
    %14 = arith.subf %cst_8, %cst_9 : f32
    %cst_10 = arith.constant 1.000000e+00 : f32
    %15 = vector.broadcast %cst_10 : f32 to vector<16x64xf32>
    %16 = vector.broadcast %14 : f32 to vector<16x64xf32>
    %17 = arith.select %13, %15, %16 : vector<16x64xi1>, vector<16x64xf32>
    %18 = math.absf %11 : vector<16x64xf32>
    %cst_11 = arith.constant 0.327591091 : f32
    %19 = vector.broadcast %cst_11 : f32 to vector<16x64xf32>
    %20 = arith.mulf %19, %18 : vector<16x64xf32>
    %cst_12 = arith.constant 1.000000e+00 : f32
    %21 = vector.broadcast %cst_12 : f32 to vector<16x64xf32>
    %22 = arith.addf %21, %20 : vector<16x64xf32>
    %cst_13 = arith.constant 1.000000e+00 : f32
    %23 = vector.broadcast %cst_13 : f32 to vector<16x64xf32>
    %24 = arith.divf %23, %22 : vector<16x64xf32>
    %cst_14 = arith.constant 1.06140542 : f32
    %25 = vector.broadcast %cst_14 : f32 to vector<16x64xf32>
    %26 = arith.mulf %25, %24 : vector<16x64xf32>
    %cst_15 = arith.constant -1.45315206 : f32
    %27 = vector.broadcast %cst_15 : f32 to vector<16x64xf32>
    %28 = arith.addf %26, %27 : vector<16x64xf32>
    %29 = arith.mulf %28, %24 : vector<16x64xf32>
    %cst_16 = arith.constant 1.42141378 : f32
    %30 = vector.broadcast %cst_16 : f32 to vector<16x64xf32>
    %31 = arith.addf %29, %30 : vector<16x64xf32>
    %32 = arith.mulf %31, %24 : vector<16x64xf32>
    %cst_17 = arith.constant -0.284496725 : f32
    %33 = vector.broadcast %cst_17 : f32 to vector<16x64xf32>
    %34 = arith.addf %32, %33 : vector<16x64xf32>
    %35 = arith.mulf %34, %24 : vector<16x64xf32>
    %cst_18 = arith.constant 0.254829586 : f32
    %36 = vector.broadcast %cst_18 : f32 to vector<16x64xf32>
    %37 = arith.addf %35, %36 : vector<16x64xf32>
    %38 = arith.mulf %37, %24 : vector<16x64xf32>
    %cst_19 = arith.constant 0.000000e+00 : f32
    %39 = vector.broadcast %cst_19 : f32 to vector<16x64xf32>
    %40 = arith.subf %39, %18 : vector<16x64xf32>
    %41 = arith.mulf %40, %18 : vector<16x64xf32>
    %42 = math.exp %41 : vector<16x64xf32>
    %43 = arith.mulf %38, %42 : vector<16x64xf32>
    %cst_20 = arith.constant 1.000000e+00 : f32
    %44 = vector.broadcast %cst_20 : f32 to vector<16x64xf32>
    %45 = arith.subf %44, %43 : vector<16x64xf32>
    %46 = arith.mulf %17, %45 : vector<16x64xf32>
    %cst_21 = arith.constant 1.000000e+00 : f32
    %47 = vector.broadcast %cst_21 : f32 to vector<16x64xf32>
    %48 = arith.addf %47, %46 : vector<16x64xf32>
    %49 = arith.mulf %9, %48 : vector<16x64xf32>
    %50 = arith.truncf %49 : vector<16x64xf32> to vector<16x64xbf16>
    %c0_22 = arith.constant 0 : index
    %c0_23 = arith.constant 0 : index
    %51 = vector.load %arg4[%c0_22, %c0_23] : memref<64x16xf32, #tpu.memory_space<vmem>>, vector<64x16xf32>
    %52 = arith.truncf %51 : vector<64x16xf32> to vector<64x16xbf16>
    %cst_24 = arith.constant dense<0.000000e+00> : vector<16x16xf32>
    %53 = tpu.matmul %50, %52, %cst_24 {dimension_numbers = #tpu.dot_dimension_numbers<[1], [0], [0], [1], [0, 0, 1, 1], [], []>} : vector<16x64xbf16>, vector<64x16xbf16>, vector<16x16xf32> -> vector<16x16xf32>
    %c0_25 = arith.constant 0 : index
    %c0_26 = arith.constant 0 : index
    %54 = vector.load %arg5[%c0_25, %c0_26] : memref<1x16xf32, #tpu.memory_space<vmem>>, vector<1x16xf32>
    %55 = vector.broadcast %54 : vector<1x16xf32> to vector<16x16xf32>
    %56 = arith.addf %53, %55 : vector<16x16xf32>
    %c0_27 = arith.constant 0 : index
    %c0_28 = arith.constant 0 : index
    %57 = vector.load %arg6[%c0_27, %c0_28] : memref<16x16xf32, #tpu.memory_space<vmem>>, vector<16x16xf32>
    tpu.vector_store %arg6[%c0_27, %c0_28], %56 {strides = array<i32>} : memref<16x16xf32, #tpu.memory_space<vmem>>, vector<16x16xf32>,
    return
  }
  func.func @transform_0(%arg0: i32) -> (i32, i32) {
    %c0_i32 = arith.constant 0 : i32
    %c0_i32_0 = arith.constant 0 : i32
    return %arg0, %c0_i32 : i32, i32
  }
  func.func @transform_1(%arg0: i32) -> (i32, i32) {
    %c0_i32 = arith.constant 0 : i32
    %c0_i32_0 = arith.constant 0 : i32
    %c0_i32_1 = arith.constant 0 : i32
    return %c0_i32, %c0_i32_0 : i32, i32
  }
  func.func @transform_2(%arg0: i32) -> (i32, i32) {
    %c0_i32 = arith.constant 0 : i32
    %c0_i32_0 = arith.constant 0 : i32
    %c0_i32_1 = arith.constant 0 : i32
    return %c0_i32, %c0_i32_0 : i32, i32
  }
  func.func @transform_3(%arg0: i32) -> (i32, i32) {
    %c0_i32 = arith.constant 0 : i32
    %c0_i32_0 = arith.constant 0 : i32
    %c0_i32_1 = arith.constant 0 : i32
    return %c0_i32, %c0_i32_0 : i32, i32
  }
  func.func @transform_4(%arg0: i32) -> (i32, i32) {
    %c0_i32 = arith.constant 0 : i32
    %c0_i32_0 = arith.constant 0 : i32
    %c0_i32_1 = arith.constant 0 : i32
    return %c0_i32, %c0_i32_0 : i32, i32
  }
  func.func @transform_5(%arg0: i32) -> (i32, i32) {
    %c0_i32 = arith.constant 0 : i32
    %c0_i32_0 = arith.constant 0 : i32
    return %arg0, %c0_i32 : i32, i32
  }
}

module attributes {stable_mosaic.version = 11 : i64} {
  func.func @_mlp_kernel(%arg0: i32, %arg1: memref<64x16xf32, #tpu.memory_space<vmem>>, %arg2: memref<16x16xf32, #tpu.memory_space<vmem>>, %arg3: memref<1x16xf32, #tpu.memory_space<vmem>>, %arg4: memref<16x32xf32, #tpu.memory_space<vmem>>, %arg5: memref<1x32xf32, #tpu.memory_space<vmem>>, %arg6: memref<64x32xf32, #tpu.memory_space<vmem>>) attributes {dimension_semantics = [#tpu.dimension_semantics<parallel>], iteration_bounds = array<i64: 1>, scalar_prefetch = 0 : i64, scratch_operands = 0 : i64, tpu.core_type = #tpu.core_type<tc>, window_params = [{transform_indices = @transform_0, window_bounds = array<i64: 64, 16>}, {pipeline_mode = #tpu.pipeline_mode<synchronous>, transform_indices = @transform_1, window_bounds = array<i64: 16, 16>}, {pipeline_mode = #tpu.pipeline_mode<synchronous>, transform_indices = @transform_2, window_bounds = array<i64: 1, 16>}, {pipeline_mode = #tpu.pipeline_mode<synchronous>, transform_indices = @transform_3, window_bounds = array<i64: 16, 32>}, {pipeline_mode = #tpu.pipeline_mode<synchronous>, transform_indices = @transform_4, window_bounds = array<i64: 1, 32>}, {transform_indices = @transform_5, window_bounds = array<i64: 64, 32>}]} {
    %c0 = arith.constant 0 : index
    %c0_0 = arith.constant 0 : index
    %0 = vector.load %arg1[%c0, %c0_0] : memref<64x16xf32, #tpu.memory_space<vmem>>, vector<64x16xf32>
    %1 = arith.truncf %0 : vector<64x16xf32> to vector<64x16xbf16>
    %c0_1 = arith.constant 0 : index
    %c0_2 = arith.constant 0 : index
    %2 = vector.load %arg2[%c0_1, %c0_2] : memref<16x16xf32, #tpu.memory_space<vmem>>, vector<16x16xf32>
    %3 = arith.truncf %2 : vector<16x16xf32> to vector<16x16xbf16>
    %cst = arith.constant dense<0.000000e+00> : vector<64x16xf32>
    %4 = tpu.matmul %1, %3, %cst {dimension_numbers = #tpu.dot_dimension_numbers<[1], [0], [0], [1], [0, 0, 1, 1], [], []>} : vector<64x16xbf16>, vector<16x16xbf16>, vector<64x16xf32> -> vector<64x16xf32>
    %c0_3 = arith.constant 0 : index
    %c0_4 = arith.constant 0 : index
    %5 = vector.load %arg3[%c0_3, %c0_4] : memref<1x16xf32, #tpu.memory_space<vmem>>, vector<1x16xf32>
    %6 = vector.broadcast %5 : vector<1x16xf32> to vector<64x16xf32>
    %7 = arith.addf %4, %6 : vector<64x16xf32>
    %cst_5 = arith.constant 5.000000e-01 : f32
    %8 = vector.broadcast %cst_5 : f32 to vector<64x16xf32>
    %9 = arith.mulf %8, %7 : vector<64x16xf32>
    %cst_6 = arith.constant 0.707106769 : f32
    %10 = vector.broadcast %cst_6 : f32 to vector<64x16xf32>
    %11 = arith.mulf %7, %10 : vector<64x16xf32>
    %cst_7 = arith.constant 0.000000e+00 : f32
    %12 = vector.broadcast %cst_7 : f32 to vector<64x16xf32>
    %13 = arith.cmpf oge, %11, %12 : vector<64x16xf32>
    %cst_8 = arith.constant 0.000000e+00 : f32
    %cst_9 = arith.constant 1.000000e+00 : f32
    %14 = arith.subf %cst_8, %cst_9 : f32
    %cst_10 = arith.constant 1.000000e+00 : f32
    %15 = vector.broadcast %cst_10 : f32 to vector<64x16xf32>
    %16 = vector.broadcast %14 : f32 to vector<64x16xf32>
    %17 = arith.select %13, %15, %16 : vector<64x16xi1>, vector<64x16xf32>
    %18 = math.absf %11 : vector<64x16xf32>
    %cst_11 = arith.constant 0.327591091 : f32
    %19 = vector.broadcast %cst_11 : f32 to vector<64x16xf32>
    %20 = arith.mulf %19, %18 : vector<64x16xf32>
    %cst_12 = arith.constant 1.000000e+00 : f32
    %21 = vector.broadcast %cst_12 : f32 to vector<64x16xf32>
    %22 = arith.addf %21, %20 : vector<64x16xf32>
    %cst_13 = arith.constant 1.000000e+00 : f32
    %23 = vector.broadcast %cst_13 : f32 to vector<64x16xf32>
    %24 = arith.divf %23, %22 : vector<64x16xf32>
    %cst_14 = arith.constant 1.06140542 : f32
    %25 = vector.broadcast %cst_14 : f32 to vector<64x16xf32>
    %26 = arith.mulf %25, %24 : vector<64x16xf32>
    %cst_15 = arith.constant -1.45315206 : f32
    %27 = vector.broadcast %cst_15 : f32 to vector<64x16xf32>
    %28 = arith.addf %26, %27 : vector<64x16xf32>
    %29 = arith.mulf %28, %24 : vector<64x16xf32>
    %cst_16 = arith.constant 1.42141378 : f32
    %30 = vector.broadcast %cst_16 : f32 to vector<64x16xf32>
    %31 = arith.addf %29, %30 : vector<64x16xf32>
    %32 = arith.mulf %31, %24 : vector<64x16xf32>
    %cst_17 = arith.constant -0.284496725 : f32
    %33 = vector.broadcast %cst_17 : f32 to vector<64x16xf32>
    %34 = arith.addf %32, %33 : vector<64x16xf32>
    %35 = arith.mulf %34, %24 : vector<64x16xf32>
    %cst_18 = arith.constant 0.254829586 : f32
    %36 = vector.broadcast %cst_18 : f32 to vector<64x16xf32>
    %37 = arith.addf %35, %36 : vector<64x16xf32>
    %38 = arith.mulf %37, %24 : vector<64x16xf32>
    %cst_19 = arith.constant 0.000000e+00 : f32
    %39 = vector.broadcast %cst_19 : f32 to vector<64x16xf32>
    %40 = arith.subf %39, %18 : vector<64x16xf32>
    %41 = arith.mulf %40, %18 : vector<64x16xf32>
    %42 = math.exp %41 : vector<64x16xf32>
    %43 = arith.mulf %38, %42 : vector<64x16xf32>
    %cst_20 = arith.constant 1.000000e+00 : f32
    %44 = vector.broadcast %cst_20 : f32 to vector<64x16xf32>
    %45 = arith.subf %44, %43 : vector<64x16xf32>
    %46 = arith.mulf %17, %45 : vector<64x16xf32>
    %cst_21 = arith.constant 1.000000e+00 : f32
    %47 = vector.broadcast %cst_21 : f32 to vector<64x16xf32>
    %48 = arith.addf %47, %46 : vector<64x16xf32>
    %49 = arith.mulf %9, %48 : vector<64x16xf32>
    %50 = arith.truncf %49 : vector<64x16xf32> to vector<64x16xbf16>
    %c0_22 = arith.constant 0 : index
    %c0_23 = arith.constant 0 : index
    %51 = vector.load %arg4[%c0_22, %c0_23] : memref<16x32xf32, #tpu.memory_space<vmem>>, vector<16x32xf32>
    %52 = arith.truncf %51 : vector<16x32xf32> to vector<16x32xbf16>
    %cst_24 = arith.constant dense<0.000000e+00> : vector<64x32xf32>
    %53 = tpu.matmul %50, %52, %cst_24 {dimension_numbers = #tpu.dot_dimension_numbers<[1], [0], [0], [1], [0, 0, 1, 1], [], []>} : vector<64x16xbf16>, vector<16x32xbf16>, vector<64x32xf32> -> vector<64x32xf32>
    %c0_25 = arith.constant 0 : index
    %c0_26 = arith.constant 0 : index
    %54 = vector.load %arg5[%c0_25, %c0_26] : memref<1x32xf32, #tpu.memory_space<vmem>>, vector<1x32xf32>
    %55 = vector.broadcast %54 : vector<1x32xf32> to vector<64x32xf32>
    %56 = arith.addf %53, %55 : vector<64x32xf32>
    %c0_27 = arith.constant 0 : index
    %c0_28 = arith.constant 0 : index
    %57 = vector.load %arg6[%c0_27, %c0_28] : memref<64x32xf32, #tpu.memory_space<vmem>>, vector<64x32xf32>
    tpu.vector_store %arg6[%c0_27, %c0_28], %56 {strides = array<i32>} : memref<64x32xf32, #tpu.memory_space<vmem>>, vector<64x32xf32>,
    return
  }
  func.func @transform_0(%arg0: i32) -> (i32, i32) {
    %c0_i32 = arith.constant 0 : i32
    %c0_i32_0 = arith.constant 0 : i32
    return %arg0, %c0_i32 : i32, i32
  }
  func.func @transform_1(%arg0: i32) -> (i32, i32) {
    %c0_i32 = arith.constant 0 : i32
    %c0_i32_0 = arith.constant 0 : i32
    %c0_i32_1 = arith.constant 0 : i32
    return %c0_i32, %c0_i32_0 : i32, i32
  }
  func.func @transform_2(%arg0: i32) -> (i32, i32) {
    %c0_i32 = arith.constant 0 : i32
    %c0_i32_0 = arith.constant 0 : i32
    %c0_i32_1 = arith.constant 0 : i32
    return %c0_i32, %c0_i32_0 : i32, i32
  }
  func.func @transform_3(%arg0: i32) -> (i32, i32) {
    %c0_i32 = arith.constant 0 : i32
    %c0_i32_0 = arith.constant 0 : i32
    %c0_i32_1 = arith.constant 0 : i32
    return %c0_i32, %c0_i32_0 : i32, i32
  }
  func.func @transform_4(%arg0: i32) -> (i32, i32) {
    %c0_i32 = arith.constant 0 : i32
    %c0_i32_0 = arith.constant 0 : i32
    %c0_i32_1 = arith.constant 0 : i32
    return %c0_i32, %c0_i32_0 : i32, i32
  }
  func.func @transform_5(%arg0: i32) -> (i32, i32) {
    %c0_i32 = arith.constant 0 : i32
    %c0_i32_0 = arith.constant 0 : i32
    return %arg0, %c0_i32 : i32, i32
  }
}

module attributes {stable_mosaic.version = 11 : i64} {
  func.func @_pdc_kernel(%arg0: i32, %arg1: i32, %arg2: memref<64x32xf32, #tpu.memory_space<vmem>>, %arg3: memref<1x32x16xf32, #tpu.memory_space<vmem>>, %arg4: memref<1x1x16xf32, #tpu.memory_space<vmem>>, %arg5: memref<1x64x16xbf16, #tpu.memory_space<vmem>>) attributes {dimension_semantics = [#tpu.dimension_semantics<parallel>, #tpu.dimension_semantics<parallel>], iteration_bounds = array<i64: 1, 2>, scalar_prefetch = 0 : i64, scratch_operands = 0 : i64, tpu.core_type = #tpu.core_type<tc>, window_params = [{transform_indices = @transform_0, window_bounds = array<i64: 64, 32>}, {transform_indices = @transform_1, window_bounds = array<i64: 1, 32, 16>}, {transform_indices = @transform_2, window_bounds = array<i64: 1, 1, 16>}, {transform_indices = @transform_3, window_bounds = array<i64: 1, 64, 16>}]} {
    %c0 = arith.constant 0 : index
    %c0_0 = arith.constant 0 : index
    %0 = vector.load %arg2[%c0, %c0_0] : memref<64x32xf32, #tpu.memory_space<vmem>>, vector<64x32xf32>
    %1 = arith.truncf %0 : vector<64x32xf32> to vector<64x32xbf16>
    %c0_1 = arith.constant 0 : index
    %c0_2 = arith.constant 0 : index
    %c0_3 = arith.constant 0 : index
    %2 = vector.load %arg3[%c0_1, %c0_2, %c0_3] : memref<1x32x16xf32, #tpu.memory_space<vmem>>, vector<1x32x16xf32>
    %3 = vector.shape_cast %2 : vector<1x32x16xf32> to vector<32x16xf32>
    %4 = arith.truncf %3 : vector<32x16xf32> to vector<32x16xbf16>
    %cst = arith.constant dense<0.000000e+00> : vector<64x16xf32>
    %5 = tpu.matmul %1, %4, %cst {dimension_numbers = #tpu.dot_dimension_numbers<[1], [0], [0], [1], [0, 0, 1, 1], [], []>} : vector<64x32xbf16>, vector<32x16xbf16>, vector<64x16xf32> -> vector<64x16xf32>
    %c0_4 = arith.constant 0 : index
    %c0_5 = arith.constant 0 : index
    %c0_6 = arith.constant 0 : index
    %6 = vector.load %arg4[%c0_4, %c0_5, %c0_6] : memref<1x1x16xf32, #tpu.memory_space<vmem>>, vector<1x1x16xf32>
    %7 = vector.shape_cast %6 : vector<1x1x16xf32> to vector<1x16xf32>
    %8 = vector.broadcast %7 : vector<1x16xf32> to vector<64x16xf32>
    %9 = arith.addf %5, %8 : vector<64x16xf32>
    %10 = arith.truncf %9 : vector<64x16xf32> to vector<64x16xbf16>
    %c0_7 = arith.constant 0 : index
    %c0_8 = arith.constant 0 : index
    %c0_9 = arith.constant 0 : index
    %11 = vector.load %arg5[%c0_7, %c0_8, %c0_9] : memref<1x64x16xbf16, #tpu.memory_space<vmem>>, vector<1x64x16xbf16>
    %12 = vector.shape_cast %11 : vector<1x64x16xbf16> to vector<64x16xbf16>
    %13 = vector.shape_cast %10 : vector<64x16xbf16> to vector<1x64x16xbf16>
    tpu.vector_store %arg5[%c0_7, %c0_8, %c0_9], %13 {strides = array<i32>} : memref<1x64x16xbf16, #tpu.memory_space<vmem>>, vector<1x64x16xbf16>,
    return
  }
  func.func @transform_0(%arg0: i32, %arg1: i32) -> (i32, i32) {
    %c0_i32 = arith.constant 0 : i32
    %c0_i32_0 = arith.constant 0 : i32
    return %arg0, %c0_i32 : i32, i32
  }
  func.func @transform_1(%arg0: i32, %arg1: i32) -> (i32, i32, i32) {
    %c0_i32 = arith.constant 0 : i32
    %c0_i32_0 = arith.constant 0 : i32
    %c0_i32_1 = arith.constant 0 : i32
    return %arg1, %c0_i32, %c0_i32_0 : i32, i32, i32
  }
  func.func @transform_2(%arg0: i32, %arg1: i32) -> (i32, i32, i32) {
    %c0_i32 = arith.constant 0 : i32
    %c0_i32_0 = arith.constant 0 : i32
    %c0_i32_1 = arith.constant 0 : i32
    return %arg1, %c0_i32, %c0_i32_0 : i32, i32, i32
  }
  func.func @transform_3(%arg0: i32, %arg1: i32) -> (i32, i32, i32) {
    %c0_i32 = arith.constant 0 : i32
    %c0_i32_0 = arith.constant 0 : i32
    return %arg1, %arg0, %c0_i32 : i32, i32, i32
  }
}

module attributes {stable_mosaic.version = 11 : i64} {
  func.func @_ln_ffn_kernel(%arg0: i32, %arg1: memref<16x16xf32, #tpu.memory_space<vmem>>, %arg2: memref<1x16xf32, #tpu.memory_space<vmem>>, %arg3: memref<1x16xf32, #tpu.memory_space<vmem>>, %arg4: memref<16x64xf32, #tpu.memory_space<vmem>>, %arg5: memref<64x16xf32, #tpu.memory_space<vmem>>, %arg6: memref<16x16xf32, #tpu.memory_space<vmem>>) attributes {dimension_semantics = [#tpu.dimension_semantics<parallel>], iteration_bounds = array<i64: 1>, scalar_prefetch = 0 : i64, scratch_operands = 0 : i64, tpu.core_type = #tpu.core_type<tc>, window_params = [{transform_indices = @transform_0, window_bounds = array<i64: 16, 16>}, {pipeline_mode = #tpu.pipeline_mode<synchronous>, transform_indices = @transform_1, window_bounds = array<i64: 1, 16>}, {pipeline_mode = #tpu.pipeline_mode<synchronous>, transform_indices = @transform_2, window_bounds = array<i64: 1, 16>}, {pipeline_mode = #tpu.pipeline_mode<synchronous>, transform_indices = @transform_3, window_bounds = array<i64: 16, 64>}, {pipeline_mode = #tpu.pipeline_mode<synchronous>, transform_indices = @transform_4, window_bounds = array<i64: 64, 16>}, {transform_indices = @transform_5, window_bounds = array<i64: 16, 16>}]} {
    %c0 = arith.constant 0 : index
    %c0_0 = arith.constant 0 : index
    %0 = vector.load %arg1[%c0, %c0_0] : memref<16x16xf32, #tpu.memory_space<vmem>>, vector<16x16xf32>
    %cst = arith.constant dense<0.000000e+00> : vector<16xf32>
    %1 = vector.multi_reduction <add>, %0, %cst [1] : vector<16x16xf32> to vector<16xf32>
    %2 = vector.shape_cast %1 : vector<16xf32> to vector<16x1xf32>
    %cst_1 = arith.constant 1.600000e+01 : f32
    %3 = vector.broadcast %cst_1 : f32 to vector<16x1xf32>
    %4 = arith.divf %2, %3 : vector<16x1xf32>
    %5 = vector.broadcast %4 : vector<16x1xf32> to vector<16x16xf32>
    %6 = arith.subf %0, %5 : vector<16x16xf32>
    %7 = arith.mulf %6, %6 : vector<16x16xf32>
    %cst_2 = arith.constant dense<0.000000e+00> : vector<16xf32>
    %8 = vector.multi_reduction <add>, %7, %cst_2 [1] : vector<16x16xf32> to vector<16xf32>
    %9 = vector.shape_cast %8 : vector<16xf32> to vector<16x1xf32>
    %cst_3 = arith.constant 1.600000e+01 : f32
    %10 = vector.broadcast %cst_3 : f32 to vector<16x1xf32>
    %11 = arith.divf %9, %10 : vector<16x1xf32>
    %12 = vector.broadcast %4 : vector<16x1xf32> to vector<16x16xf32>
    %13 = arith.subf %0, %12 : vector<16x16xf32>
    %cst_4 = arith.constant 9.99999974E-6 : f32
    %14 = vector.broadcast %cst_4 : f32 to vector<16x1xf32>
    %15 = arith.addf %11, %14 : vector<16x1xf32>
    %16 = math.rsqrt %15 : vector<16x1xf32>
    %17 = vector.broadcast %16 : vector<16x1xf32> to vector<16x16xf32>
    %18 = arith.mulf %13, %17 : vector<16x16xf32>
    %c0_5 = arith.constant 0 : index
    %c0_6 = arith.constant 0 : index
    %19 = vector.load %arg2[%c0_5, %c0_6] : memref<1x16xf32, #tpu.memory_space<vmem>>, vector<1x16xf32>
    %20 = vector.broadcast %19 : vector<1x16xf32> to vector<16x16xf32>
    %21 = arith.mulf %18, %20 : vector<16x16xf32>
    %c0_7 = arith.constant 0 : index
    %c0_8 = arith.constant 0 : index
    %22 = vector.load %arg3[%c0_7, %c0_8] : memref<1x16xf32, #tpu.memory_space<vmem>>, vector<1x16xf32>
    %23 = vector.broadcast %22 : vector<1x16xf32> to vector<16x16xf32>
    %24 = arith.addf %21, %23 : vector<16x16xf32>
    %25 = arith.truncf %24 : vector<16x16xf32> to vector<16x16xbf16>
    %c0_9 = arith.constant 0 : index
    %c0_10 = arith.constant 0 : index
    %26 = vector.load %arg4[%c0_9, %c0_10] : memref<16x64xf32, #tpu.memory_space<vmem>>, vector<16x64xf32>
    %27 = arith.truncf %26 : vector<16x64xf32> to vector<16x64xbf16>
    %cst_11 = arith.constant dense<0.000000e+00> : vector<16x64xf32>
    %28 = tpu.matmul %25, %27, %cst_11 {dimension_numbers = #tpu.dot_dimension_numbers<[1], [0], [0], [1], [0, 0, 1, 1], [], []>} : vector<16x16xbf16>, vector<16x64xbf16>, vector<16x64xf32> -> vector<16x64xf32>
    %cst_12 = arith.constant 5.000000e-01 : f32
    %29 = vector.broadcast %cst_12 : f32 to vector<16x64xf32>
    %30 = arith.mulf %29, %28 : vector<16x64xf32>
    %cst_13 = arith.constant 0.707106769 : f32
    %31 = vector.broadcast %cst_13 : f32 to vector<16x64xf32>
    %32 = arith.mulf %28, %31 : vector<16x64xf32>
    %cst_14 = arith.constant 0.000000e+00 : f32
    %33 = vector.broadcast %cst_14 : f32 to vector<16x64xf32>
    %34 = arith.cmpf oge, %32, %33 : vector<16x64xf32>
    %cst_15 = arith.constant 0.000000e+00 : f32
    %cst_16 = arith.constant 1.000000e+00 : f32
    %35 = arith.subf %cst_15, %cst_16 : f32
    %cst_17 = arith.constant 1.000000e+00 : f32
    %36 = vector.broadcast %cst_17 : f32 to vector<16x64xf32>
    %37 = vector.broadcast %35 : f32 to vector<16x64xf32>
    %38 = arith.select %34, %36, %37 : vector<16x64xi1>, vector<16x64xf32>
    %39 = math.absf %32 : vector<16x64xf32>
    %cst_18 = arith.constant 0.327591091 : f32
    %40 = vector.broadcast %cst_18 : f32 to vector<16x64xf32>
    %41 = arith.mulf %40, %39 : vector<16x64xf32>
    %cst_19 = arith.constant 1.000000e+00 : f32
    %42 = vector.broadcast %cst_19 : f32 to vector<16x64xf32>
    %43 = arith.addf %42, %41 : vector<16x64xf32>
    %cst_20 = arith.constant 1.000000e+00 : f32
    %44 = vector.broadcast %cst_20 : f32 to vector<16x64xf32>
    %45 = arith.divf %44, %43 : vector<16x64xf32>
    %cst_21 = arith.constant 1.06140542 : f32
    %46 = vector.broadcast %cst_21 : f32 to vector<16x64xf32>
    %47 = arith.mulf %46, %45 : vector<16x64xf32>
    %cst_22 = arith.constant -1.45315206 : f32
    %48 = vector.broadcast %cst_22 : f32 to vector<16x64xf32>
    %49 = arith.addf %47, %48 : vector<16x64xf32>
    %50 = arith.mulf %49, %45 : vector<16x64xf32>
    %cst_23 = arith.constant 1.42141378 : f32
    %51 = vector.broadcast %cst_23 : f32 to vector<16x64xf32>
    %52 = arith.addf %50, %51 : vector<16x64xf32>
    %53 = arith.mulf %52, %45 : vector<16x64xf32>
    %cst_24 = arith.constant -0.284496725 : f32
    %54 = vector.broadcast %cst_24 : f32 to vector<16x64xf32>
    %55 = arith.addf %53, %54 : vector<16x64xf32>
    %56 = arith.mulf %55, %45 : vector<16x64xf32>
    %cst_25 = arith.constant 0.254829586 : f32
    %57 = vector.broadcast %cst_25 : f32 to vector<16x64xf32>
    %58 = arith.addf %56, %57 : vector<16x64xf32>
    %59 = arith.mulf %58, %45 : vector<16x64xf32>
    %cst_26 = arith.constant 0.000000e+00 : f32
    %60 = vector.broadcast %cst_26 : f32 to vector<16x64xf32>
    %61 = arith.subf %60, %39 : vector<16x64xf32>
    %62 = arith.mulf %61, %39 : vector<16x64xf32>
    %63 = math.exp %62 : vector<16x64xf32>
    %64 = arith.mulf %59, %63 : vector<16x64xf32>
    %cst_27 = arith.constant 1.000000e+00 : f32
    %65 = vector.broadcast %cst_27 : f32 to vector<16x64xf32>
    %66 = arith.subf %65, %64 : vector<16x64xf32>
    %67 = arith.mulf %38, %66 : vector<16x64xf32>
    %cst_28 = arith.constant 1.000000e+00 : f32
    %68 = vector.broadcast %cst_28 : f32 to vector<16x64xf32>
    %69 = arith.addf %68, %67 : vector<16x64xf32>
    %70 = arith.mulf %30, %69 : vector<16x64xf32>
    %71 = arith.truncf %70 : vector<16x64xf32> to vector<16x64xbf16>
    %c0_29 = arith.constant 0 : index
    %c0_30 = arith.constant 0 : index
    %72 = vector.load %arg5[%c0_29, %c0_30] : memref<64x16xf32, #tpu.memory_space<vmem>>, vector<64x16xf32>
    %73 = arith.truncf %72 : vector<64x16xf32> to vector<64x16xbf16>
    %cst_31 = arith.constant dense<0.000000e+00> : vector<16x16xf32>
    %74 = tpu.matmul %71, %73, %cst_31 {dimension_numbers = #tpu.dot_dimension_numbers<[1], [0], [0], [1], [0, 0, 1, 1], [], []>} : vector<16x64xbf16>, vector<64x16xbf16>, vector<16x16xf32> -> vector<16x16xf32>
    %75 = arith.addf %0, %74 : vector<16x16xf32>
    %c0_32 = arith.constant 0 : index
    %c0_33 = arith.constant 0 : index
    %76 = vector.load %arg6[%c0_32, %c0_33] : memref<16x16xf32, #tpu.memory_space<vmem>>, vector<16x16xf32>
    tpu.vector_store %arg6[%c0_32, %c0_33], %75 {strides = array<i32>} : memref<16x16xf32, #tpu.memory_space<vmem>>, vector<16x16xf32>,
    return
  }
  func.func @transform_0(%arg0: i32) -> (i32, i32) {
    %c0_i32 = arith.constant 0 : i32
    %c0_i32_0 = arith.constant 0 : i32
    return %arg0, %c0_i32 : i32, i32
  }
  func.func @transform_1(%arg0: i32) -> (i32, i32) {
    %c0_i32 = arith.constant 0 : i32
    %c0_i32_0 = arith.constant 0 : i32
    %c0_i32_1 = arith.constant 0 : i32
    return %c0_i32, %c0_i32_0 : i32, i32
  }
  func.func @transform_2(%arg0: i32) -> (i32, i32) {
    %c0_i32 = arith.constant 0 : i32
    %c0_i32_0 = arith.constant 0 : i32
    %c0_i32_1 = arith.constant 0 : i32
    return %c0_i32, %c0_i32_0 : i32, i32
  }
  func.func @transform_3(%arg0: i32) -> (i32, i32) {
    %c0_i32 = arith.constant 0 : i32
    %c0_i32_0 = arith.constant 0 : i32
    %c0_i32_1 = arith.constant 0 : i32
    return %c0_i32, %c0_i32_0 : i32, i32
  }
  func.func @transform_4(%arg0: i32) -> (i32, i32) {
    %c0_i32 = arith.constant 0 : i32
    %c0_i32_0 = arith.constant 0 : i32
    %c0_i32_1 = arith.constant 0 : i32
    return %c0_i32, %c0_i32_0 : i32, i32
  }
  func.func @transform_5(%arg0: i32) -> (i32, i32) {
    %c0_i32 = arith.constant 0 : i32
    %c0_i32_0 = arith.constant 0 : i32
    return %arg0, %c0_i32 : i32, i32
  }
}

module attributes {stable_mosaic.version = 11 : i64} {
  func.func @_mlp_kernel(%arg0: i32, %arg1: memref<16x16xf32, #tpu.memory_space<vmem>>, %arg2: memref<16x64xf32, #tpu.memory_space<vmem>>, %arg3: memref<1x64xf32, #tpu.memory_space<vmem>>, %arg4: memref<64x4xf32, #tpu.memory_space<vmem>>, %arg5: memref<1x4xf32, #tpu.memory_space<vmem>>, %arg6: memref<16x4xf32, #tpu.memory_space<vmem>>) attributes {dimension_semantics = [#tpu.dimension_semantics<parallel>], iteration_bounds = array<i64: 1>, scalar_prefetch = 0 : i64, scratch_operands = 0 : i64, tpu.core_type = #tpu.core_type<tc>, window_params = [{transform_indices = @transform_0, window_bounds = array<i64: 16, 16>}, {pipeline_mode = #tpu.pipeline_mode<synchronous>, transform_indices = @transform_1, window_bounds = array<i64: 16, 64>}, {pipeline_mode = #tpu.pipeline_mode<synchronous>, transform_indices = @transform_2, window_bounds = array<i64: 1, 64>}, {pipeline_mode = #tpu.pipeline_mode<synchronous>, transform_indices = @transform_3, window_bounds = array<i64: 64, 4>}, {pipeline_mode = #tpu.pipeline_mode<synchronous>, transform_indices = @transform_4, window_bounds = array<i64: 1, 4>}, {transform_indices = @transform_5, window_bounds = array<i64: 16, 4>}]} {
    %c0 = arith.constant 0 : index
    %c0_0 = arith.constant 0 : index
    %0 = vector.load %arg1[%c0, %c0_0] : memref<16x16xf32, #tpu.memory_space<vmem>>, vector<16x16xf32>
    %1 = arith.truncf %0 : vector<16x16xf32> to vector<16x16xbf16>
    %c0_1 = arith.constant 0 : index
    %c0_2 = arith.constant 0 : index
    %2 = vector.load %arg2[%c0_1, %c0_2] : memref<16x64xf32, #tpu.memory_space<vmem>>, vector<16x64xf32>
    %3 = arith.truncf %2 : vector<16x64xf32> to vector<16x64xbf16>
    %cst = arith.constant dense<0.000000e+00> : vector<16x64xf32>
    %4 = tpu.matmul %1, %3, %cst {dimension_numbers = #tpu.dot_dimension_numbers<[1], [0], [0], [1], [0, 0, 1, 1], [], []>} : vector<16x16xbf16>, vector<16x64xbf16>, vector<16x64xf32> -> vector<16x64xf32>
    %c0_3 = arith.constant 0 : index
    %c0_4 = arith.constant 0 : index
    %5 = vector.load %arg3[%c0_3, %c0_4] : memref<1x64xf32, #tpu.memory_space<vmem>>, vector<1x64xf32>
    %6 = vector.broadcast %5 : vector<1x64xf32> to vector<16x64xf32>
    %7 = arith.addf %4, %6 : vector<16x64xf32>
    %cst_5 = arith.constant 5.000000e-01 : f32
    %8 = vector.broadcast %cst_5 : f32 to vector<16x64xf32>
    %9 = arith.mulf %8, %7 : vector<16x64xf32>
    %cst_6 = arith.constant 0.707106769 : f32
    %10 = vector.broadcast %cst_6 : f32 to vector<16x64xf32>
    %11 = arith.mulf %7, %10 : vector<16x64xf32>
    %cst_7 = arith.constant 0.000000e+00 : f32
    %12 = vector.broadcast %cst_7 : f32 to vector<16x64xf32>
    %13 = arith.cmpf oge, %11, %12 : vector<16x64xf32>
    %cst_8 = arith.constant 0.000000e+00 : f32
    %cst_9 = arith.constant 1.000000e+00 : f32
    %14 = arith.subf %cst_8, %cst_9 : f32
    %cst_10 = arith.constant 1.000000e+00 : f32
    %15 = vector.broadcast %cst_10 : f32 to vector<16x64xf32>
    %16 = vector.broadcast %14 : f32 to vector<16x64xf32>
    %17 = arith.select %13, %15, %16 : vector<16x64xi1>, vector<16x64xf32>
    %18 = math.absf %11 : vector<16x64xf32>
    %cst_11 = arith.constant 0.327591091 : f32
    %19 = vector.broadcast %cst_11 : f32 to vector<16x64xf32>
    %20 = arith.mulf %19, %18 : vector<16x64xf32>
    %cst_12 = arith.constant 1.000000e+00 : f32
    %21 = vector.broadcast %cst_12 : f32 to vector<16x64xf32>
    %22 = arith.addf %21, %20 : vector<16x64xf32>
    %cst_13 = arith.constant 1.000000e+00 : f32
    %23 = vector.broadcast %cst_13 : f32 to vector<16x64xf32>
    %24 = arith.divf %23, %22 : vector<16x64xf32>
    %cst_14 = arith.constant 1.06140542 : f32
    %25 = vector.broadcast %cst_14 : f32 to vector<16x64xf32>
    %26 = arith.mulf %25, %24 : vector<16x64xf32>
    %cst_15 = arith.constant -1.45315206 : f32
    %27 = vector.broadcast %cst_15 : f32 to vector<16x64xf32>
    %28 = arith.addf %26, %27 : vector<16x64xf32>
    %29 = arith.mulf %28, %24 : vector<16x64xf32>
    %cst_16 = arith.constant 1.42141378 : f32
    %30 = vector.broadcast %cst_16 : f32 to vector<16x64xf32>
    %31 = arith.addf %29, %30 : vector<16x64xf32>
    %32 = arith.mulf %31, %24 : vector<16x64xf32>
    %cst_17 = arith.constant -0.284496725 : f32
    %33 = vector.broadcast %cst_17 : f32 to vector<16x64xf32>
    %34 = arith.addf %32, %33 : vector<16x64xf32>
    %35 = arith.mulf %34, %24 : vector<16x64xf32>
    %cst_18 = arith.constant 0.254829586 : f32
    %36 = vector.broadcast %cst_18 : f32 to vector<16x64xf32>
    %37 = arith.addf %35, %36 : vector<16x64xf32>
    %38 = arith.mulf %37, %24 : vector<16x64xf32>
    %cst_19 = arith.constant 0.000000e+00 : f32
    %39 = vector.broadcast %cst_19 : f32 to vector<16x64xf32>
    %40 = arith.subf %39, %18 : vector<16x64xf32>
    %41 = arith.mulf %40, %18 : vector<16x64xf32>
    %42 = math.exp %41 : vector<16x64xf32>
    %43 = arith.mulf %38, %42 : vector<16x64xf32>
    %cst_20 = arith.constant 1.000000e+00 : f32
    %44 = vector.broadcast %cst_20 : f32 to vector<16x64xf32>
    %45 = arith.subf %44, %43 : vector<16x64xf32>
    %46 = arith.mulf %17, %45 : vector<16x64xf32>
    %cst_21 = arith.constant 1.000000e+00 : f32
    %47 = vector.broadcast %cst_21 : f32 to vector<16x64xf32>
    %48 = arith.addf %47, %46 : vector<16x64xf32>
    %49 = arith.mulf %9, %48 : vector<16x64xf32>
    %50 = arith.truncf %49 : vector<16x64xf32> to vector<16x64xbf16>
    %c0_22 = arith.constant 0 : index
    %c0_23 = arith.constant 0 : index
    %51 = vector.load %arg4[%c0_22, %c0_23] : memref<64x4xf32, #tpu.memory_space<vmem>>, vector<64x4xf32>
    %52 = arith.truncf %51 : vector<64x4xf32> to vector<64x4xbf16>
    %cst_24 = arith.constant dense<0.000000e+00> : vector<16x4xf32>
    %53 = tpu.matmul %50, %52, %cst_24 {dimension_numbers = #tpu.dot_dimension_numbers<[1], [0], [0], [1], [0, 0, 1, 1], [], []>} : vector<16x64xbf16>, vector<64x4xbf16>, vector<16x4xf32> -> vector<16x4xf32>
    %c0_25 = arith.constant 0 : index
    %c0_26 = arith.constant 0 : index
    %54 = vector.load %arg5[%c0_25, %c0_26] : memref<1x4xf32, #tpu.memory_space<vmem>>, vector<1x4xf32>
    %55 = vector.broadcast %54 : vector<1x4xf32> to vector<16x4xf32>
    %56 = arith.addf %53, %55 : vector<16x4xf32>
    %c0_27 = arith.constant 0 : index
    %c0_28 = arith.constant 0 : index
    %57 = vector.load %arg6[%c0_27, %c0_28] : memref<16x4xf32, #tpu.memory_space<vmem>>, vector<16x4xf32>
    tpu.vector_store %arg6[%c0_27, %c0_28], %56 {strides = array<i32>} : memref<16x4xf32, #tpu.memory_space<vmem>>, vector<16x4xf32>,
    return
  }
  func.func @transform_0(%arg0: i32) -> (i32, i32) {
    %c0_i32 = arith.constant 0 : i32
    %c0_i32_0 = arith.constant 0 : i32
    return %arg0, %c0_i32 : i32, i32
  }
  func.func @transform_1(%arg0: i32) -> (i32, i32) {
    %c0_i32 = arith.constant 0 : i32
    %c0_i32_0 = arith.constant 0 : i32
    %c0_i32_1 = arith.constant 0 : i32
    return %c0_i32, %c0_i32_0 : i32, i32
  }
  func.func @transform_2(%arg0: i32) -> (i32, i32) {
    %c0_i32 = arith.constant 0 : i32
    %c0_i32_0 = arith.constant 0 : i32
    %c0_i32_1 = arith.constant 0 : i32
    return %c0_i32, %c0_i32_0 : i32, i32
  }
  func.func @transform_3(%arg0: i32) -> (i32, i32) {
    %c0_i32 = arith.constant 0 : i32
    %c0_i32_0 = arith.constant 0 : i32
    %c0_i32_1 = arith.constant 0 : i32
    return %c0_i32, %c0_i32_0 : i32, i32
  }
  func.func @transform_4(%arg0: i32) -> (i32, i32) {
    %c0_i32 = arith.constant 0 : i32
    %c0_i32_0 = arith.constant 0 : i32
    %c0_i32_1 = arith.constant 0 : i32
    return %c0_i32, %c0_i32_0 : i32, i32
  }
  func.func @transform_5(%arg0: i32) -> (i32, i32) {
    %c0_i32 = arith.constant 0 : i32
    %c0_i32_0 = arith.constant 0 : i32
    return %arg0, %c0_i32 : i32, i32
  }
}

module attributes {stable_mosaic.version = 11 : i64} {
  func.func @_attn_kernel(%arg0: i32, %arg1: i32, %arg2: i32, %arg3: memref<1x8x16xf32, #tpu.memory_space<vmem>>, %arg4: memref<8x16xf32, #tpu.memory_space<vmem>>, %arg5: memref<1x8x16xf32, #tpu.memory_space<vmem>>, %arg6: memref<8x16xf32, #tpu.memory_space<vmem>>, %arg7: memref<2x8x8x16xbf16, #tpu.memory_space<vmem>>, %arg8: memref<16x32xf32, #tpu.memory_space<vmem>>, %arg9: memref<16x32xf32, #tpu.memory_space<vmem>>, %arg10: memref<1x32xf32, #tpu.memory_space<vmem>>, %arg11: memref<16x16xf32, #tpu.memory_space<vmem>>, %arg12: memref<1x16xf32, #tpu.memory_space<vmem>>, %arg13: memref<1x8x16xf32, #tpu.memory_space<vmem>>, %arg14: memref<8x32xf32, #tpu.memory_space<vmem>>, %arg15: memref<2x8x1xf32, #tpu.memory_space<vmem>>, %arg16: memref<2x8x1xf32, #tpu.memory_space<vmem>>, %arg17: memref<8x16xf32, #tpu.memory_space<vmem>>) attributes {dimension_semantics = [#tpu.dimension_semantics<parallel>, #tpu.dimension_semantics<parallel>, #tpu.dimension_semantics<arbitrary>], iteration_bounds = array<i64: 2, 1, 1>, scalar_prefetch = 0 : i64, scratch_operands = 4 : i64, tpu.core_type = #tpu.core_type<tc>, window_params = [{transform_indices = @transform_0, window_bounds = array<i64: 1, 8, 16>}, {transform_indices = @transform_1, window_bounds = array<i64: 8, 16>}, {transform_indices = @transform_2, window_bounds = array<i64: 1, 8, 16>}, {transform_indices = @transform_3, window_bounds = array<i64: 8, 16>}, {transform_indices = @transform_4, window_bounds = array<i64: 2, 8, 8, 16>}, {pipeline_mode = #tpu.pipeline_mode<synchronous>, transform_indices = @transform_5, window_bounds = array<i64: 16, 32>}, {pipeline_mode = #tpu.pipeline_mode<synchronous>, transform_indices = @transform_6, window_bounds = array<i64: 16, 32>}, {pipeline_mode = #tpu.pipeline_mode<synchronous>, transform_indices = @transform_7, window_bounds = array<i64: 1, 32>}, {pipeline_mode = #tpu.pipeline_mode<synchronous>, transform_indices = @transform_8, window_bounds = array<i64: 16, 16>}, {pipeline_mode = #tpu.pipeline_mode<synchronous>, transform_indices = @transform_9, window_bounds = array<i64: 1, 16>}, {transform_indices = @transform_10, window_bounds = array<i64: 1, 8, 16>}]} {
    %c0_i32 = arith.constant 0 : i32
    %0 = arith.cmpi eq, %arg2, %c0_i32 : i32
    %1 = arith.extui %0 : i1 to i32
    %c0_i32_0 = arith.constant 0 : i32
    %2 = arith.cmpi ne, %1, %c0_i32_0 : i32
    scf.if %2 {
      %c0 = arith.constant 0 : index
      %c0_3 = arith.constant 0 : index
      %c0_4 = arith.constant 0 : index
      %9 = vector.load %arg3[%c0, %c0_3, %c0_4] : memref<1x8x16xf32, #tpu.memory_space<vmem>>, vector<1x8x16xf32>
      %10 = vector.shape_cast %9 : vector<1x8x16xf32> to vector<8x16xf32>
      %c0_5 = arith.constant 0 : index
      %c0_6 = arith.constant 0 : index
      %11 = vector.load %arg4[%c0_5, %c0_6] : memref<8x16xf32, #tpu.memory_space<vmem>>, vector<8x16xf32>
      %12 = arith.addf %10, %11 : vector<8x16xf32>
      %13 = arith.truncf %12 : vector<8x16xf32> to vector<8x16xbf16>
      %c0_7 = arith.constant 0 : index
      %c0_8 = arith.constant 0 : index
      %14 = vector.load %arg9[%c0_7, %c0_8] : memref<16x32xf32, #tpu.memory_space<vmem>>, vector<16x32xf32>
      %15 = arith.truncf %14 : vector<16x32xf32> to vector<16x32xbf16>
      %cst = arith.constant dense<0.000000e+00> : vector<8x32xf32>
      %16 = tpu.matmul %13, %15, %cst {dimension_numbers = #tpu.dot_dimension_numbers<[1], [0], [0], [1], [0, 0, 1, 1], [], []>} : vector<8x16xbf16>, vector<16x32xbf16>, vector<8x32xf32> -> vector<8x32xf32>
      %c0_9 = arith.constant 0 : index
      %c0_10 = arith.constant 0 : index
      %17 = vector.load %arg14[%c0_9, %c0_10] : memref<8x32xf32, #tpu.memory_space<vmem>>, vector<8x32xf32>
      tpu.vector_store %arg14[%c0_9, %c0_10], %16 {strides = array<i32>} : memref<8x32xf32, #tpu.memory_space<vmem>>, vector<8x32xf32>,
      %cst_11 = arith.constant -1.000000e+30 : f32
      %18 = vector.broadcast %cst_11 : f32 to vector<2x8x1xf32>
      %c0_12 = arith.constant 0 : index
      %c0_13 = arith.constant 0 : index
      %c0_14 = arith.constant 0 : index
      %19 = vector.load %arg15[%c0_12, %c0_13, %c0_14] : memref<2x8x1xf32, #tpu.memory_space<vmem>>, vector<2x8x1xf32>
      tpu.vector_store %arg15[%c0_12, %c0_13, %c0_14], %18 {strides = array<i32>} : memref<2x8x1xf32, #tpu.memory_space<vmem>>, vector<2x8x1xf32>,
      %cst_15 = arith.constant 0.000000e+00 : f32
      %20 = vector.broadcast %cst_15 : f32 to vector<2x8x1xf32>
      %c0_16 = arith.constant 0 : index
      %c0_17 = arith.constant 0 : index
      %c0_18 = arith.constant 0 : index
      %21 = vector.load %arg16[%c0_16, %c0_17, %c0_18] : memref<2x8x1xf32, #tpu.memory_space<vmem>>, vector<2x8x1xf32>
      tpu.vector_store %arg16[%c0_16, %c0_17, %c0_18], %20 {strides = array<i32>} : memref<2x8x1xf32, #tpu.memory_space<vmem>>, vector<2x8x1xf32>,
      %cst_19 = arith.constant 0.000000e+00 : f32
      %22 = vector.broadcast %cst_19 : f32 to vector<8x16xf32>
      %c0_20 = arith.constant 0 : index
      %c0_21 = arith.constant 0 : index
      %23 = vector.load %arg17[%c0_20, %c0_21] : memref<8x16xf32, #tpu.memory_space<vmem>>, vector<8x16xf32>
      tpu.vector_store %arg17[%c0_20, %c0_21], %22 {strides = array<i32>} : memref<8x16xf32, #tpu.memory_space<vmem>>, vector<8x16xf32>,
    } else {
    }
    %3 = arith.cmpi sle, %arg2, %arg1 : i32
    %4 = arith.extui %3 : i1 to i32
    %c0_i32_1 = arith.constant 0 : i32
    %5 = arith.cmpi ne, %4, %c0_i32_1 : i32
    scf.if %5 {
      %c0 = arith.constant 0 : index
      %c0_3 = arith.constant 0 : index
      %c0_4 = arith.constant 0 : index
      %9 = vector.load %arg5[%c0, %c0_3, %c0_4] : memref<1x8x16xf32, #tpu.memory_space<vmem>>, vector<1x8x16xf32>
      %10 = vector.shape_cast %9 : vector<1x8x16xf32> to vector<8x16xf32>
      %c0_5 = arith.constant 0 : index
      %c0_6 = arith.constant 0 : index
      %11 = vector.load %arg6[%c0_5, %c0_6] : memref<8x16xf32, #tpu.memory_space<vmem>>, vector<8x16xf32>
      %12 = arith.addf %10, %11 : vector<8x16xf32>
      %13 = arith.truncf %12 : vector<8x16xf32> to vector<8x16xbf16>
      %c0_7 = arith.constant 0 : index
      %c0_8 = arith.constant 0 : index
      %14 = vector.load %arg8[%c0_7, %c0_8] : memref<16x32xf32, #tpu.memory_space<vmem>>, vector<16x32xf32>
      %15 = arith.truncf %14 : vector<16x32xf32> to vector<16x32xbf16>
      %cst = arith.constant dense<0.000000e+00> : vector<8x32xf32>
      %16 = tpu.matmul %13, %15, %cst {dimension_numbers = #tpu.dot_dimension_numbers<[1], [0], [0], [1], [0, 0, 1, 1], [], []>} : vector<8x16xbf16>, vector<16x32xbf16>, vector<8x32xf32> -> vector<8x32xf32>
      %17 = arith.truncf %10 : vector<8x16xf32> to vector<8x16xbf16>
      %c0_9 = arith.constant 0 : index
      %c0_10 = arith.constant 0 : index
      %18 = vector.load %arg11[%c0_9, %c0_10] : memref<16x16xf32, #tpu.memory_space<vmem>>, vector<16x16xf32>
      %19 = arith.truncf %18 : vector<16x16xf32> to vector<16x16xbf16>
      %cst_11 = arith.constant dense<0.000000e+00> : vector<8x16xf32>
      %20 = tpu.matmul %17, %19, %cst_11 {dimension_numbers = #tpu.dot_dimension_numbers<[1], [0], [0], [1], [0, 0, 1, 1], [], []>} : vector<8x16xbf16>, vector<16x16xbf16>, vector<8x16xf32> -> vector<8x16xf32>
      %c0_12 = arith.constant 0 : index
      %c0_13 = arith.constant 0 : index
      %21 = vector.load %arg12[%c0_12, %c0_13] : memref<1x16xf32, #tpu.memory_space<vmem>>, vector<1x16xf32>
      %22 = vector.broadcast %21 : vector<1x16xf32> to vector<8x16xf32>
      %23 = arith.addf %20, %22 : vector<8x16xf32>
      %c8_i32 = arith.constant 8 : i32
      %24 = arith.muli %arg1, %c8_i32 : i32
      %25 = tpu.iota {dimensions = array<i32: 0>} : vector<8x8xi32>
      %26 = vector.broadcast %24 : i32 to vector<8x8xi32>
      %27 = arith.addi %26, %25 : vector<8x8xi32>
      %c8_i32_14 = arith.constant 8 : i32
      %28 = arith.muli %arg2, %c8_i32_14 : i32
      %29 = tpu.iota {dimensions = array<i32: 1>} : vector<8x8xi32>
      %30 = vector.broadcast %28 : i32 to vector<8x8xi32>
      %31 = arith.addi %30, %29 : vector<8x8xi32>
      %32 = arith.cmpi sle, %31, %27 : vector<8x8xi32>
      %c0_15 = arith.constant 0 : index
      %c0_16 = arith.constant 0 : index
      %33 = vector.load %arg14[%c0_15, %c0_16] : memref<8x32xf32, #tpu.memory_space<vmem>>, vector<8x32xf32>
      %c0_17 = arith.constant 0 : index
      %c0_18 = arith.constant 0 : index
      %34 = vector.load %arg10[%c0_17, %c0_18] : memref<1x32xf32, #tpu.memory_space<vmem>>, vector<1x32xf32>
      %35 = vector.extract_strided_slice %33 {offsets = [0, 0], sizes = [8, 16], strides = [1, 1]} : vector<8x32xf32> to vector<8x16xf32>
      %36 = vector.shape_cast %35 : vector<8x16xf32> to vector<8x1x16xf32>
      %37 = vector.extract_strided_slice %16 {offsets = [0, 0], sizes = [8, 16], strides = [1, 1]} : vector<8x32xf32> to vector<8x16xf32>
      %38 = vector.shape_cast %37 : vector<8x16xf32> to vector<1x8x16xf32>
      %39 = vector.broadcast %36 : vector<8x1x16xf32> to vector<8x8x16xf32>
      %40 = vector.broadcast %38 : vector<1x8x16xf32> to vector<8x8x16xf32>
      %41 = arith.addf %39, %40 : vector<8x8x16xf32>
      %c0_19 = arith.constant 0 : index
      %c0_20 = arith.constant 0 : index
      %c0_21 = arith.constant 0 : index
      %c0_22 = arith.constant 0 : index
      %42 = vector.load %arg7[%c0_19, %c0_20, %c0_21, %c0_22] : memref<2x8x8x16xbf16, #tpu.memory_space<vmem>>, vector<1x8x8x16xbf16>
      %43 = vector.shape_cast %42 : vector<1x8x8x16xbf16> to vector<8x8x16xbf16>
      %44 = arith.extf %43 : vector<8x8x16xbf16> to vector<8x8x16xf32>
      %45 = arith.addf %41, %44 : vector<8x8x16xf32>
      %cst_23 = arith.constant 5.000000e-01 : f32
      %46 = vector.broadcast %cst_23 : f32 to vector<8x8x16xf32>
      %47 = arith.mulf %46, %45 : vector<8x8x16xf32>
      %cst_24 = arith.constant 0.707106769 : f32
      %48 = vector.broadcast %cst_24 : f32 to vector<8x8x16xf32>
      %49 = arith.mulf %45, %48 : vector<8x8x16xf32>
      %cst_25 = arith.constant 0.000000e+00 : f32
      %50 = vector.broadcast %cst_25 : f32 to vector<8x8x16xf32>
      %51 = arith.cmpf oge, %49, %50 : vector<8x8x16xf32>
      %cst_26 = arith.constant 0.000000e+00 : f32
      %cst_27 = arith.constant 1.000000e+00 : f32
      %52 = arith.subf %cst_26, %cst_27 : f32
      %cst_28 = arith.constant 1.000000e+00 : f32
      %53 = vector.broadcast %cst_28 : f32 to vector<8x8x16xf32>
      %54 = vector.broadcast %52 : f32 to vector<8x8x16xf32>
      %55 = arith.select %51, %53, %54 : vector<8x8x16xi1>, vector<8x8x16xf32>
      %56 = math.absf %49 : vector<8x8x16xf32>
      %cst_29 = arith.constant 0.327591091 : f32
      %57 = vector.broadcast %cst_29 : f32 to vector<8x8x16xf32>
      %58 = arith.mulf %57, %56 : vector<8x8x16xf32>
      %cst_30 = arith.constant 1.000000e+00 : f32
      %59 = vector.broadcast %cst_30 : f32 to vector<8x8x16xf32>
      %60 = arith.addf %59, %58 : vector<8x8x16xf32>
      %cst_31 = arith.constant 1.000000e+00 : f32
      %61 = vector.broadcast %cst_31 : f32 to vector<8x8x16xf32>
      %62 = arith.divf %61, %60 : vector<8x8x16xf32>
      %cst_32 = arith.constant 1.06140542 : f32
      %63 = vector.broadcast %cst_32 : f32 to vector<8x8x16xf32>
      %64 = arith.mulf %63, %62 : vector<8x8x16xf32>
      %cst_33 = arith.constant -1.45315206 : f32
      %65 = vector.broadcast %cst_33 : f32 to vector<8x8x16xf32>
      %66 = arith.addf %64, %65 : vector<8x8x16xf32>
      %67 = arith.mulf %66, %62 : vector<8x8x16xf32>
      %cst_34 = arith.constant 1.42141378 : f32
      %68 = vector.broadcast %cst_34 : f32 to vector<8x8x16xf32>
      %69 = arith.addf %67, %68 : vector<8x8x16xf32>
      %70 = arith.mulf %69, %62 : vector<8x8x16xf32>
      %cst_35 = arith.constant -0.284496725 : f32
      %71 = vector.broadcast %cst_35 : f32 to vector<8x8x16xf32>
      %72 = arith.addf %70, %71 : vector<8x8x16xf32>
      %73 = arith.mulf %72, %62 : vector<8x8x16xf32>
      %cst_36 = arith.constant 0.254829586 : f32
      %74 = vector.broadcast %cst_36 : f32 to vector<8x8x16xf32>
      %75 = arith.addf %73, %74 : vector<8x8x16xf32>
      %76 = arith.mulf %75, %62 : vector<8x8x16xf32>
      %cst_37 = arith.constant 0.000000e+00 : f32
      %77 = vector.broadcast %cst_37 : f32 to vector<8x8x16xf32>
      %78 = arith.subf %77, %56 : vector<8x8x16xf32>
      %79 = arith.mulf %78, %56 : vector<8x8x16xf32>
      %80 = math.exp %79 : vector<8x8x16xf32>
      %81 = arith.mulf %76, %80 : vector<8x8x16xf32>
      %cst_38 = arith.constant 1.000000e+00 : f32
      %82 = vector.broadcast %cst_38 : f32 to vector<8x8x16xf32>
      %83 = arith.subf %82, %81 : vector<8x8x16xf32>
      %84 = arith.mulf %55, %83 : vector<8x8x16xf32>
      %cst_39 = arith.constant 1.000000e+00 : f32
      %85 = vector.broadcast %cst_39 : f32 to vector<8x8x16xf32>
      %86 = arith.addf %85, %84 : vector<8x8x16xf32>
      %87 = arith.mulf %47, %86 : vector<8x8x16xf32>
      %88 = vector.extract_strided_slice %34 {offsets = [0, 0], sizes = [1, 16], strides = [1, 1]} : vector<1x32xf32> to vector<1x16xf32>
      %89 = vector.shape_cast %88 : vector<1x16xf32> to vector<1x1x16xf32>
      %90 = vector.broadcast %89 : vector<1x1x16xf32> to vector<8x8x16xf32>
      %91 = arith.mulf %87, %90 : vector<8x8x16xf32>
      %cst_40 = arith.constant dense<0.000000e+00> : vector<8x8xf32>
      %92 = vector.multi_reduction <add>, %91, %cst_40 [2] : vector<8x8x16xf32> to vector<8x8xf32>
      %cst_41 = arith.constant -1.000000e+30 : f32
      %93 = vector.broadcast %cst_41 : f32 to vector<8x8xf32>
      %94 = arith.select %32, %92, %93 : vector<8x8xi1>, vector<8x8xf32>
      %c0_42 = arith.constant 0 : index
      %c0_43 = arith.constant 0 : index
      %c0_44 = arith.constant 0 : index
      %95 = vector.load %arg15[%c0_42, %c0_43, %c0_44] : memref<2x8x1xf32, #tpu.memory_space<vmem>>, vector<1x8x1xf32>
      %96 = vector.shape_cast %95 : vector<1x8x1xf32> to vector<8x1xf32>
      %cst_45 = arith.constant dense<0xFF800000> : vector<8xf32>
      %97 = vector.multi_reduction <maximumf>, %94, %cst_45 [1] : vector<8x8xf32> to vector<8xf32>
      %98 = vector.shape_cast %97 : vector<8xf32> to vector<8x1xf32>
      %99 = arith.maximumf %96, %98 : vector<8x1xf32>
      %100 = arith.subf %96, %99 : vector<8x1xf32>
      %101 = math.exp %100 : vector<8x1xf32>
      %102 = vector.broadcast %99 : vector<8x1xf32> to vector<8x8xf32>
      %103 = arith.subf %94, %102 : vector<8x8xf32>
      %104 = math.exp %103 : vector<8x8xf32>
      %c0_46 = arith.constant 0 : index
      %c0_47 = arith.constant 0 : index
      %c0_48 = arith.constant 0 : index
      %105 = vector.load %arg16[%c0_46, %c0_47, %c0_48] : memref<2x8x1xf32, #tpu.memory_space<vmem>>, vector<1x8x1xf32>
      %106 = vector.shape_cast %105 : vector<1x8x1xf32> to vector<8x1xf32>
      %107 = arith.mulf %101, %106 : vector<8x1xf32>
      %cst_49 = arith.constant dense<0.000000e+00> : vector<8xf32>
      %108 = vector.multi_reduction <add>, %104, %cst_49 [1] : vector<8x8xf32> to vector<8xf32>
      %109 = vector.shape_cast %108 : vector<8xf32> to vector<8x1xf32>
      %110 = arith.addf %107, %109 : vector<8x1xf32>
      %c0_50 = arith.constant 0 : index
      %c0_51 = arith.constant 0 : index
      %c0_52 = arith.constant 0 : index
      %111 = vector.load %arg16[%c0_50, %c0_51, %c0_52] : memref<2x8x1xf32, #tpu.memory_space<vmem>>, vector<1x8x1xf32>
      %112 = vector.shape_cast %111 : vector<1x8x1xf32> to vector<8x1xf32>
      %113 = vector.shape_cast %110 : vector<8x1xf32> to vector<1x8x1xf32>
      tpu.vector_store %arg16[%c0_50, %c0_51, %c0_52], %113 {strides = array<i32>} : memref<2x8x1xf32, #tpu.memory_space<vmem>>, vector<1x8x1xf32>,
      %114 = arith.truncf %104 : vector<8x8xf32> to vector<8x8xbf16>
      %115 = vector.extract_strided_slice %23 {offsets = [0, 0], sizes = [8, 8], strides = [1, 1]} : vector<8x16xf32> to vector<8x8xf32>
      %116 = arith.truncf %115 : vector<8x8xf32> to vector<8x8xbf16>
      %cst_53 = arith.constant dense<0.000000e+00> : vector<8x8xf32>
      %117 = tpu.matmul %114, %116, %cst_53 {dimension_numbers = #tpu.dot_dimension_numbers<[1], [0], [0], [1], [0, 0, 1, 1], [], []>} : vector<8x8xbf16>, vector<8x8xbf16>, vector<8x8xf32> -> vector<8x8xf32>
      %c0_54 = arith.constant 0 : index
      %c0_55 = arith.constant 0 : index
      %118 = vector.load %arg17[%c0_54, %c0_55] : memref<8x16xf32, #tpu.memory_space<vmem>>, vector<8x8xf32>
      %119 = vector.broadcast %101 : vector<8x1xf32> to vector<8x8xf32>
      %120 = arith.mulf %119, %118 : vector<8x8xf32>
      %121 = arith.addf %120, %117 : vector<8x8xf32>
      %c0_56 = arith.constant 0 : index
      %c0_57 = arith.constant 0 : index
      %122 = vector.load %arg17[%c0_56, %c0_57] : memref<8x16xf32, #tpu.memory_space<vmem>>, vector<8x8xf32>
      tpu.vector_store %arg17[%c0_56, %c0_57], %121 {strides = array<i32>} : memref<8x16xf32, #tpu.memory_space<vmem>>, vector<8x8xf32>,
      %c0_58 = arith.constant 0 : index
      %c0_59 = arith.constant 0 : index
      %c0_60 = arith.constant 0 : index
      %123 = vector.load %arg15[%c0_58, %c0_59, %c0_60] : memref<2x8x1xf32, #tpu.memory_space<vmem>>, vector<1x8x1xf32>
      %124 = vector.shape_cast %123 : vector<1x8x1xf32> to vector<8x1xf32>
      %125 = vector.shape_cast %99 : vector<8x1xf32> to vector<1x8x1xf32>
      tpu.vector_store %arg15[%c0_58, %c0_59, %c0_60], %125 {strides = array<i32>} : memref<2x8x1xf32, #tpu.memory_space<vmem>>, vector<1x8x1xf32>,
      %126 = vector.extract_strided_slice %33 {offsets = [0, 16], sizes = [8, 16], strides = [1, 1]} : vector<8x32xf32> to vector<8x16xf32>
      %127 = vector.shape_cast %126 : vector<8x16xf32> to vector<8x1x16xf32>
      %128 = vector.extract_strided_slice %16 {offsets = [0, 16], sizes = [8, 16], strides = [1, 1]} : vector<8x32xf32> to vector<8x16xf32>
      %129 = vector.shape_cast %128 : vector<8x16xf32> to vector<1x8x16xf32>
      %130 = vector.broadcast %127 : vector<8x1x16xf32> to vector<8x8x16xf32>
      %131 = vector.broadcast %129 : vector<1x8x16xf32> to vector<8x8x16xf32>
      %132 = arith.addf %130, %131 : vector<8x8x16xf32>
      %c1 = arith.constant 1 : index
      %c0_61 = arith.constant 0 : index
      %c0_62 = arith.constant 0 : index
      %c0_63 = arith.constant 0 : index
      %133 = vector.load %arg7[%c1, %c0_61, %c0_62, %c0_63] : memref<2x8x8x16xbf16, #tpu.memory_space<vmem>>, vector<1x8x8x16xbf16>
      %134 = vector.shape_cast %133 : vector<1x8x8x16xbf16> to vector<8x8x16xbf16>
      %135 = arith.extf %134 : vector<8x8x16xbf16> to vector<8x8x16xf32>
      %136 = arith.addf %132, %135 : vector<8x8x16xf32>
      %cst_64 = arith.constant 5.000000e-01 : f32
      %137 = vector.broadcast %cst_64 : f32 to vector<8x8x16xf32>
      %138 = arith.mulf %137, %136 : vector<8x8x16xf32>
      %cst_65 = arith.constant 0.707106769 : f32
      %139 = vector.broadcast %cst_65 : f32 to vector<8x8x16xf32>
      %140 = arith.mulf %136, %139 : vector<8x8x16xf32>
      %cst_66 = arith.constant 0.000000e+00 : f32
      %141 = vector.broadcast %cst_66 : f32 to vector<8x8x16xf32>
      %142 = arith.cmpf oge, %140, %141 : vector<8x8x16xf32>
      %cst_67 = arith.constant 0.000000e+00 : f32
      %cst_68 = arith.constant 1.000000e+00 : f32
      %143 = arith.subf %cst_67, %cst_68 : f32
      %cst_69 = arith.constant 1.000000e+00 : f32
      %144 = vector.broadcast %cst_69 : f32 to vector<8x8x16xf32>
      %145 = vector.broadcast %143 : f32 to vector<8x8x16xf32>
      %146 = arith.select %142, %144, %145 : vector<8x8x16xi1>, vector<8x8x16xf32>
      %147 = math.absf %140 : vector<8x8x16xf32>
      %cst_70 = arith.constant 0.327591091 : f32
      %148 = vector.broadcast %cst_70 : f32 to vector<8x8x16xf32>
      %149 = arith.mulf %148, %147 : vector<8x8x16xf32>
      %cst_71 = arith.constant 1.000000e+00 : f32
      %150 = vector.broadcast %cst_71 : f32 to vector<8x8x16xf32>
      %151 = arith.addf %150, %149 : vector<8x8x16xf32>
      %cst_72 = arith.constant 1.000000e+00 : f32
      %152 = vector.broadcast %cst_72 : f32 to vector<8x8x16xf32>
      %153 = arith.divf %152, %151 : vector<8x8x16xf32>
      %cst_73 = arith.constant 1.06140542 : f32
      %154 = vector.broadcast %cst_73 : f32 to vector<8x8x16xf32>
      %155 = arith.mulf %154, %153 : vector<8x8x16xf32>
      %cst_74 = arith.constant -1.45315206 : f32
      %156 = vector.broadcast %cst_74 : f32 to vector<8x8x16xf32>
      %157 = arith.addf %155, %156 : vector<8x8x16xf32>
      %158 = arith.mulf %157, %153 : vector<8x8x16xf32>
      %cst_75 = arith.constant 1.42141378 : f32
      %159 = vector.broadcast %cst_75 : f32 to vector<8x8x16xf32>
      %160 = arith.addf %158, %159 : vector<8x8x16xf32>
      %161 = arith.mulf %160, %153 : vector<8x8x16xf32>
      %cst_76 = arith.constant -0.284496725 : f32
      %162 = vector.broadcast %cst_76 : f32 to vector<8x8x16xf32>
      %163 = arith.addf %161, %162 : vector<8x8x16xf32>
      %164 = arith.mulf %163, %153 : vector<8x8x16xf32>
      %cst_77 = arith.constant 0.254829586 : f32
      %165 = vector.broadcast %cst_77 : f32 to vector<8x8x16xf32>
      %166 = arith.addf %164, %165 : vector<8x8x16xf32>
      %167 = arith.mulf %166, %153 : vector<8x8x16xf32>
      %cst_78 = arith.constant 0.000000e+00 : f32
      %168 = vector.broadcast %cst_78 : f32 to vector<8x8x16xf32>
      %169 = arith.subf %168, %147 : vector<8x8x16xf32>
      %170 = arith.mulf %169, %147 : vector<8x8x16xf32>
      %171 = math.exp %170 : vector<8x8x16xf32>
      %172 = arith.mulf %167, %171 : vector<8x8x16xf32>
      %cst_79 = arith.constant 1.000000e+00 : f32
      %173 = vector.broadcast %cst_79 : f32 to vector<8x8x16xf32>
      %174 = arith.subf %173, %172 : vector<8x8x16xf32>
      %175 = arith.mulf %146, %174 : vector<8x8x16xf32>
      %cst_80 = arith.constant 1.000000e+00 : f32
      %176 = vector.broadcast %cst_80 : f32 to vector<8x8x16xf32>
      %177 = arith.addf %176, %175 : vector<8x8x16xf32>
      %178 = arith.mulf %138, %177 : vector<8x8x16xf32>
      %179 = vector.extract_strided_slice %34 {offsets = [0, 16], sizes = [1, 16], strides = [1, 1]} : vector<1x32xf32> to vector<1x16xf32>
      %180 = vector.shape_cast %179 : vector<1x16xf32> to vector<1x1x16xf32>
      %181 = vector.broadcast %180 : vector<1x1x16xf32> to vector<8x8x16xf32>
      %182 = arith.mulf %178, %181 : vector<8x8x16xf32>
      %cst_81 = arith.constant dense<0.000000e+00> : vector<8x8xf32>
      %183 = vector.multi_reduction <add>, %182, %cst_81 [2] : vector<8x8x16xf32> to vector<8x8xf32>
      %cst_82 = arith.constant -1.000000e+30 : f32
      %184 = vector.broadcast %cst_82 : f32 to vector<8x8xf32>
      %185 = arith.select %32, %183, %184 : vector<8x8xi1>, vector<8x8xf32>
      %c1_83 = arith.constant 1 : index
      %c0_84 = arith.constant 0 : index
      %c0_85 = arith.constant 0 : index
      %186 = vector.load %arg15[%c1_83, %c0_84, %c0_85] : memref<2x8x1xf32, #tpu.memory_space<vmem>>, vector<1x8x1xf32>
      %187 = vector.shape_cast %186 : vector<1x8x1xf32> to vector<8x1xf32>
      %cst_86 = arith.constant dense<0xFF800000> : vector<8xf32>
      %188 = vector.multi_reduction <maximumf>, %185, %cst_86 [1] : vector<8x8xf32> to vector<8xf32>
      %189 = vector.shape_cast %188 : vector<8xf32> to vector<8x1xf32>
      %190 = arith.maximumf %187, %189 : vector<8x1xf32>
      %191 = arith.subf %187, %190 : vector<8x1xf32>
      %192 = math.exp %191 : vector<8x1xf32>
      %193 = vector.broadcast %190 : vector<8x1xf32> to vector<8x8xf32>
      %194 = arith.subf %185, %193 : vector<8x8xf32>
      %195 = math.exp %194 : vector<8x8xf32>
      %c1_87 = arith.constant 1 : index
      %c0_88 = arith.constant 0 : index
      %c0_89 = arith.constant 0 : index
      %196 = vector.load %arg16[%c1_87, %c0_88, %c0_89] : memref<2x8x1xf32, #tpu.memory_space<vmem>>, vector<1x8x1xf32>
      %197 = vector.shape_cast %196 : vector<1x8x1xf32> to vector<8x1xf32>
      %198 = arith.mulf %192, %197 : vector<8x1xf32>
      %cst_90 = arith.constant dense<0.000000e+00> : vector<8xf32>
      %199 = vector.multi_reduction <add>, %195, %cst_90 [1] : vector<8x8xf32> to vector<8xf32>
      %200 = vector.shape_cast %199 : vector<8xf32> to vector<8x1xf32>
      %201 = arith.addf %198, %200 : vector<8x1xf32>
      %c1_91 = arith.constant 1 : index
      %c0_92 = arith.constant 0 : index
      %c0_93 = arith.constant 0 : index
      %202 = vector.load %arg16[%c1_91, %c0_92, %c0_93] : memref<2x8x1xf32, #tpu.memory_space<vmem>>, vector<1x8x1xf32>
      %203 = vector.shape_cast %202 : vector<1x8x1xf32> to vector<8x1xf32>
      %204 = vector.shape_cast %201 : vector<8x1xf32> to vector<1x8x1xf32>
      tpu.vector_store %arg16[%c1_91, %c0_92, %c0_93], %204 {strides = array<i32>} : memref<2x8x1xf32, #tpu.memory_space<vmem>>, vector<1x8x1xf32>,
      %205 = arith.truncf %195 : vector<8x8xf32> to vector<8x8xbf16>
      %206 = vector.extract_strided_slice %23 {offsets = [0, 8], sizes = [8, 8], strides = [1, 1]} : vector<8x16xf32> to vector<8x8xf32>
      %207 = arith.truncf %206 : vector<8x8xf32> to vector<8x8xbf16>
      %cst_94 = arith.constant dense<0.000000e+00> : vector<8x8xf32>
      %208 = tpu.matmul %205, %207, %cst_94 {dimension_numbers = #tpu.dot_dimension_numbers<[1], [0], [0], [1], [0, 0, 1, 1], [], []>} : vector<8x8xbf16>, vector<8x8xbf16>, vector<8x8xf32> -> vector<8x8xf32>
      %c0_95 = arith.constant 0 : index
      %c8 = arith.constant 8 : index
      %209 = vector.load %arg17[%c0_95, %c8] : memref<8x16xf32, #tpu.memory_space<vmem>>, vector<8x8xf32>
      %210 = vector.broadcast %192 : vector<8x1xf32> to vector<8x8xf32>
      %211 = arith.mulf %210, %209 : vector<8x8xf32>
      %212 = arith.addf %211, %208 : vector<8x8xf32>
      %c0_96 = arith.constant 0 : index
      %c8_97 = arith.constant 8 : index
      %213 = vector.load %arg17[%c0_96, %c8_97] : memref<8x16xf32, #tpu.memory_space<vmem>>, vector<8x8xf32>
      tpu.vector_store %arg17[%c0_96, %c8_97], %212 {strides = array<i32>} : memref<8x16xf32, #tpu.memory_space<vmem>>, vector<8x8xf32>,
      %c1_98 = arith.constant 1 : index
      %c0_99 = arith.constant 0 : index
      %c0_100 = arith.constant 0 : index
      %214 = vector.load %arg15[%c1_98, %c0_99, %c0_100] : memref<2x8x1xf32, #tpu.memory_space<vmem>>, vector<1x8x1xf32>
      %215 = vector.shape_cast %214 : vector<1x8x1xf32> to vector<8x1xf32>
      %216 = vector.shape_cast %190 : vector<8x1xf32> to vector<1x8x1xf32>
      tpu.vector_store %arg15[%c1_98, %c0_99, %c0_100], %216 {strides = array<i32>} : memref<2x8x1xf32, #tpu.memory_space<vmem>>, vector<1x8x1xf32>,
    } else {
    }
    %6 = arith.cmpi eq, %arg2, %arg1 : i32
    %7 = arith.extui %6 : i1 to i32
    %c0_i32_2 = arith.constant 0 : i32
    %8 = arith.cmpi ne, %7, %c0_i32_2 : i32
    scf.if %8 {
      %c0 = arith.constant 0 : index
      %c0_3 = arith.constant 0 : index
      %c0_4 = arith.constant 0 : index
      %9 = vector.load %arg16[%c0, %c0_3, %c0_4] : memref<2x8x1xf32, #tpu.memory_space<vmem>>, vector<1x8x1xf32>
      %10 = vector.shape_cast %9 : vector<1x8x1xf32> to vector<8x1xf32>
      %11 = tpu.reciprocal %10 {approx = true} : vector<8x1xf32> -> vector<8x1xf32>
      %c0_5 = arith.constant 0 : index
      %c0_6 = arith.constant 0 : index
      %12 = vector.load %arg17[%c0_5, %c0_6] : memref<8x16xf32, #tpu.memory_space<vmem>>, vector<8x8xf32>
      %13 = vector.broadcast %11 : vector<8x1xf32> to vector<8x8xf32>
      %14 = arith.mulf %12, %13 : vector<8x8xf32>
      %c1 = arith.constant 1 : index
      %c0_7 = arith.constant 0 : index
      %c0_8 = arith.constant 0 : index
      %15 = vector.load %arg16[%c1, %c0_7, %c0_8] : memref<2x8x1xf32, #tpu.memory_space<vmem>>, vector<1x8x1xf32>
      %16 = vector.shape_cast %15 : vector<1x8x1xf32> to vector<8x1xf32>
      %17 = tpu.reciprocal %16 {approx = true} : vector<8x1xf32> -> vector<8x1xf32>
      %c0_9 = arith.constant 0 : index
      %c8 = arith.constant 8 : index
      %18 = vector.load %arg17[%c0_9, %c8] : memref<8x16xf32, #tpu.memory_space<vmem>>, vector<8x8xf32>
      %19 = vector.broadcast %17 : vector<8x1xf32> to vector<8x8xf32>
      %20 = arith.mulf %18, %19 : vector<8x8xf32>
      %c0_10 = arith.constant 0 : index
      %c0_11 = arith.constant 0 : index
      %c0_12 = arith.constant 0 : index
      %21 = vector.load %arg3[%c0_10, %c0_11, %c0_12] : memref<1x8x16xf32, #tpu.memory_space<vmem>>, vector<1x8x16xf32>
      %22 = vector.shape_cast %21 : vector<1x8x16xf32> to vector<8x16xf32>
      %23 = tpu.concatenate %14, %20 in 1 : vector<8x8xf32>, vector<8x8xf32> -> vector<8x16xf32>
      %24 = arith.addf %22, %23 : vector<8x16xf32>
      %c0_13 = arith.constant 0 : index
      %c0_14 = arith.constant 0 : index
      %c0_15 = arith.constant 0 : index
      %25 = vector.load %arg13[%c0_13, %c0_14, %c0_15] : memref<1x8x16xf32, #tpu.memory_space<vmem>>, vector<1x8x16xf32>
      %26 = vector.shape_cast %25 : vector<1x8x16xf32> to vector<8x16xf32>
      %27 = vector.shape_cast %24 : vector<8x16xf32> to vector<1x8x16xf32>
      tpu.vector_store %arg13[%c0_13, %c0_14, %c0_15], %27 {strides = array<i32>} : memref<1x8x16xf32, #tpu.memory_space<vmem>>, vector<1x8x16xf32>,
    } else {
    }
    return
  }
  func.func @transform_0(%arg0: i32, %arg1: i32, %arg2: i32) -> (i32, i32, i32) {
    %c0_i32 = arith.constant 0 : i32
    %c0_i32_0 = arith.constant 0 : i32
    return %arg0, %arg1, %c0_i32 : i32, i32, i32
  }
  func.func @transform_1(%arg0: i32, %arg1: i32, %arg2: i32) -> (i32, i32) {
    %c0_i32 = arith.constant 0 : i32
    %c0_i32_0 = arith.constant 0 : i32
    return %arg1, %c0_i32 : i32, i32
  }
  func.func @transform_2(%arg0: i32, %arg1: i32, %arg2: i32) -> (i32, i32, i32) {
    %0 = arith.minsi %arg2, %arg1 : i32
    %c0_i32 = arith.constant 0 : i32
    %c0_i32_0 = arith.constant 0 : i32
    return %arg0, %0, %c0_i32 : i32, i32, i32
  }
  func.func @transform_3(%arg0: i32, %arg1: i32, %arg2: i32) -> (i32, i32) {
    %0 = arith.minsi %arg2, %arg1 : i32
    %c0_i32 = arith.constant 0 : i32
    %c0_i32_0 = arith.constant 0 : i32
    return %0, %c0_i32 : i32, i32
  }
  func.func @transform_4(%arg0: i32, %arg1: i32, %arg2: i32) -> (i32, i32, i32, i32) {
    %0 = arith.minsi %arg2, %arg1 : i32
    %c0_i32 = arith.constant 0 : i32
    %c0_i32_0 = arith.constant 0 : i32
    %c0_i32_1 = arith.constant 0 : i32
    return %c0_i32, %arg1, %0, %c0_i32_0 : i32, i32, i32, i32
  }
  func.func @transform_5(%arg0: i32, %arg1: i32, %arg2: i32) -> (i32, i32) {
    %c0_i32 = arith.constant 0 : i32
    %c0_i32_0 = arith.constant 0 : i32
    %c0_i32_1 = arith.constant 0 : i32
    return %c0_i32, %c0_i32_0 : i32, i32
  }
  func.func @transform_6(%arg0: i32, %arg1: i32, %arg2: i32) -> (i32, i32) {
    %c0_i32 = arith.constant 0 : i32
    %c0_i32_0 = arith.constant 0 : i32
    %c0_i32_1 = arith.constant 0 : i32
    return %c0_i32, %c0_i32_0 : i32, i32
  }
  func.func @transform_7(%arg0: i32, %arg1: i32, %arg2: i32) -> (i32, i32) {
    %c0_i32 = arith.constant 0 : i32
    %c0_i32_0 = arith.constant 0 : i32
    %c0_i32_1 = arith.constant 0 : i32
    return %c0_i32, %c0_i32_0 : i32, i32
  }
  func.func @transform_8(%arg0: i32, %arg1: i32, %arg2: i32) -> (i32, i32) {
    %c0_i32 = arith.constant 0 : i32
    %c0_i32_0 = arith.constant 0 : i32
    %c0_i32_1 = arith.constant 0 : i32
    return %c0_i32, %c0_i32_0 : i32, i32
  }
  func.func @transform_9(%arg0: i32, %arg1: i32, %arg2: i32) -> (i32, i32) {
    %c0_i32 = arith.constant 0 : i32
    %c0_i32_0 = arith.constant 0 : i32
    %c0_i32_1 = arith.constant 0 : i32
    return %c0_i32, %c0_i32_0 : i32, i32
  }
  func.func @transform_10(%arg0: i32, %arg1: i32, %arg2: i32) -> (i32, i32, i32) {
    %c0_i32 = arith.constant 0 : i32
    %c0_i32_0 = arith.constant 0 : i32
    return %arg0, %arg1, %c0_i32 : i32, i32, i32
  }
}

</mosaic_0001>

<llo_original>
// kernel: transformer_forward.11
$region0: #{transformer_forward.11}
  #allocation0 [shape = 'u32[]', space=smem, size = 0x4, offset = 0x4, fixed_abs, tag = 'smem constant byte address 0x4 - core index']
  #allocation1 [shape = 'u32[144,128]{1,0:T(1,128)}', space=vmem, size = 0x12000, scoped, tag = 'internal scratch']
  %s0 = inlined_call_operand.vmem [shape: f32[8,16], index: 0, kind: input, shape index: {}]
  %s1 = inlined_call_operand.vmem [shape: f32[16,16], index: 1, kind: input, shape index: {}]
  %s2 = inlined_call_operand.vmem [shape: f32[1,16], index: 2, kind: input, shape index: {}]
  %s3 = inlined_call_operand.vmem [shape: f32[16,16], index: 3, kind: input, shape index: {}]
  %s4 = inlined_call_operand.vmem [shape: f32[1,16], index: 4, kind: input, shape index: {}]
  %s5 = inlined_call_operand.vmem [shape: f32[8,16], index: 5, kind: output, shape index: {}]
  %s6 = sld [smem:[#allocation0]]
  $region30: #{transformer_forward.11} parent=0
    _
  %s8 = ssub.s32 1, %s6
  %s9 = scalar_select 0, %s8, %s6
  // Predicated region
  $region2: #{transformer_forward.11} parent=0 // pred_check
    _
  $region3: #{transformer_forward.11} parent=0 // pred_check_branch
    %11 = sbr.rel (0) target = $region5
  $region4: #{transformer_forward.11} parent=0 // pred_region
    _
  $region5: #{transformer_forward.11} parent=0 // pred_fallthru
    _
  // Predicated region
  $region6: #{transformer_forward.11} parent=0 // pred_check
    _
  $region7: #{transformer_forward.11} parent=0 // pred_check_branch
    %13 = sbr.rel (0) target = $region9
  $region8: #{transformer_forward.11} parent=0 // pred_region
    _
  $region9: #{transformer_forward.11} parent=0 // pred_fallthru
    _
  // Predicated region
  $region10: #{transformer_forward.11} parent=0 // pred_check
    _
  $region11: #{transformer_forward.11} parent=0 // pred_check_branch
    %15 = sbr.rel (0) target = $region13
  $region12: #{transformer_forward.11} parent=0 // pred_region
    _
  $region13: #{transformer_forward.11} parent=0 // pred_fallthru
    _
  // Predicated region
  $region14: #{transformer_forward.11} parent=0 // pred_check
    _
  $region15: #{transformer_forward.11} parent=0 // pred_check_branch
    %17 = sbr.rel (0) target = $region17
  $region16: #{transformer_forward.11} parent=0 // pred_region
    _
  $region17: #{transformer_forward.11} parent=0 // pred_fallthru
    _
  // Predicated region
  $region18: #{transformer_forward.11} parent=0 // pred_check
    _
  $region19: #{transformer_forward.11} parent=0 // pred_check_branch
    %19 = sbr.rel (0) target = $region21
  $region20: #{transformer_forward.11} parent=0 // pred_region
    _
  $region21: #{transformer_forward.11} parent=0 // pred_fallthru
    _
  %v21 = vld [vmem:[%s0] sm:$0xff]
  %v22 = vpack.c.bf16 %v21, %v21
  %v23 = vld [vmem:[%s1] sm:$0xff]
  %v24 = vld [vmem:[%s1 + $0x8] sm:$0xff]
  %v25 = vpack.c.bf16 %v24, %v23
  %v26 = vld [vmem:[%s2] sm:$0x1]
  %v28 = vlaneseq
  %v29 = vshrl.u32 %v28, 7
  %v30 = vsub.s32 0, %v29
  %v31 = vrot.slane %v26, %v30
  %vm33 = vcmask 130048
  %v35 = vsel %vm33, %v22, 0
  %37 = vmatprep.subr.bf16.mxu0 0
  %38 = vmatpush1.bf16.msra.mxu0 %v25
  %39 = vmatprep.subr.bf16.mxu0 0
  %40 = vmatpush1.bf16.msra.mxu0 0
  %41 = vmatprep.subr.bf16.mxu0 0
  %42 = vmatpush1.bf16.msra.mxu0 0
  %43 = vmatprep.subr.bf16.mxu0 0
  %44 = vmatpush1.bf16.msra.mxu0 0
  %45 = vmatprep.subr.bf16.mxu0 0
  %46 = vmatpush1.bf16.msra.mxu0 0
  %47 = vmatprep.subr.bf16.mxu0 0
  %48 = vmatpush1.bf16.msra.mxu0 0
  %49 = vmatprep.subr.bf16.mxu0 0
  %50 = vmatpush1.bf16.msra.mxu0 0
  %51 = vmatprep.subr.bf16.mxu0 0
  %52 = vmatpush1.bf16.msra.mxu0 0
  %53 = vmatprep.subr.bf16.mxu0 0
  %54 = vmatpush1.bf16.msra.mxu0 0
  %55 = vmatprep.subr.bf16.mxu0 0
  %56 = vmatpush1.bf16.msra.mxu0 0
  %57 = vmatprep.subr.bf16.mxu0 0
  %58 = vmatpush1.bf16.msra.mxu0 0
  %59 = vmatprep.subr.bf16.mxu0 0
  %60 = vmatpush1.bf16.msra.mxu0 0
  %61 = vmatprep.subr.bf16.mxu0 0
  %62 = vmatpush1.bf16.msra.mxu0 0
  %63 = vmatprep.subr.bf16.mxu0 0
  %64 = vmatpush1.bf16.msra.mxu0 0
  %65 = vmatprep.subr.bf16.mxu0 0
  %66 = vmatpush1.bf16.msra.mxu0 0
  %67 = vmatprep.subr.bf16.mxu0 0
  %68 = vmatpush1.bf16.msra.mxu0 0
  %69 = vmatprep.mubr.bf16.mxu0 0
  %70 = vmatmul.mubr.bf16.gmra.mrb[0].mxu0 %v35
  %v71 = vpop.f32.mrb[0].mxu0
  %v72 = vadd.f32 %v31, %v71
  %v73 = vpop.f32.mrb[0].mxu0
  %v74 = vpop.f32.mrb[0].mxu0
  %v75 = vpop.f32.mrb[0].mxu0
  %76 = vdwg.mxu0
  %v77 = vmul.f32 %v72, 0.5
  %v78 = vmul.f32 %v72, 0.70710677
  %vm79 = vcmp.ge.f32.partialorder %v78, 0.0
  %v80 = vsel %vm79, 1.0, -1.0
  %v81 = vand.u32 2147483647, %v78
  %v82 = vmul.f32 %v81, 0.3275911
  %v83 = vadd.f32 %v82, 1.0
  %v84 = vrcp.pop %v83
  %v85 = vmul.f32 1.0, %v84
  %v86 = vmul.f32 %v85, 1.0614054
  %v87 = vadd.f32 %v86, -1.4531521
  %v88 = vmul.f32 %v87, %v85
  %v89 = vadd.f32 %v88, 1.4214138
  %v90 = vmul.f32 %v89, %v85
  %v91 = vadd.f32 %v90, -0.28449672
  %v92 = vmul.f32 %v91, %v85
  %v93 = vadd.f32 %v92, 0.2548296
  %v94 = vmul.f32 %v93, %v85
  %v95 = vsub.f32 0.0, %v81
  %v96 = vmul.f32 %v95, %v81
  %v97 = vmul.f32 %v96, 1.442695
  %v98 = vpow.pop %v97
  %v99 = vmul.f32 %v94, %v98
  %v100 = vsub.f32 1.0, %v99
  %v101 = vmul.f32 %v80, %v100
  %v102 = vadd.f32 %v101, 1.0
  %v103 = vmul.f32 %v77, %v102
  %v104 = vpack.c.bf16 %v103, %v103
  %v105 = vld [vmem:[%s3] sm:$0xff]
  %v106 = vld [vmem:[%s3 + $0x8] sm:$0xff]
  %v107 = vpack.c.bf16 %v106, %v105
  %v108 = vld [vmem:[%s4] sm:$0x1]
  %v110 = vlaneseq
  %v111 = vshrl.u32 %v110, 7
  %v112 = vsub.s32 0, %v111
  %v113 = vrot.slane %v108, %v112
  %v116 = vsel %vm33, %v104, 0
  %118 = vmatprep.subr.bf16.mxu0 0
  %119 = vmatpush1.bf16.msra.mxu0 %v107
  %120 = vmatprep.subr.bf16.mxu0 0
  %121 = vmatpush1.bf16.msra.mxu0 0
  %122 = vmatprep.subr.bf16.mxu0 0
  %123 = vmatpush1.bf16.msra.mxu0 0
  %124 = vmatprep.subr.bf16.mxu0 0
  %125 = vmatpush1.bf16.msra.mxu0 0
  %126 = vmatprep.subr.bf16.mxu0 0
  %127 = vmatpush1.bf16.msra.mxu0 0
  %128 = vmatprep.subr.bf16.mxu0 0
  %129 = vmatpush1.bf16.msra.mxu0 0
  %130 = vmatprep.subr.bf16.mxu0 0
  %131 = vmatpush1.bf16.msra.mxu0 0
  %132 = vmatprep.subr.bf16.mxu0 0
  %133 = vmatpush1.bf16.msra.mxu0 0
  %134 = vmatprep.subr.bf16.mxu0 0
  %135 = vmatpush1.bf16.msra.mxu0 0
  %136 = vmatprep.subr.bf16.mxu0 0
  %137 = vmatpush1.bf16.msra.mxu0 0
  %138 = vmatprep.subr.bf16.mxu0 0
  %139 = vmatpush1.bf16.msra.mxu0 0
  %140 = vmatprep.subr.bf16.mxu0 0
  %141 = vmatpush1.bf16.msra.mxu0 0
  %142 = vmatprep.subr.bf16.mxu0 0
  %143 = vmatpush1.bf16.msra.mxu0 0
  %144 = vmatprep.subr.bf16.mxu0 0
  %145 = vmatpush1.bf16.msra.mxu0 0
  %146 = vmatprep.subr.bf16.mxu0 0
  %147 = vmatpush1.bf16.msra.mxu0 0
  %148 = vmatprep.subr.bf16.mxu0 0
  %149 = vmatpush1.bf16.msra.mxu0 0
  %150 = vmatprep.mubr.bf16.mxu0 0
  %151 = vmatmul.mubr.bf16.gmra.mrb[0].mxu0 %v116
  %v152 = vpop.f32.mrb[0].mxu0
  %v153 = vadd.f32 %v113, %v152
  %v154 = vpop.f32.mrb[0].mxu0
  %v155 = vpop.f32.mrb[0].mxu0
  %v156 = vpop.f32.mrb[0].mxu0
  %157 = vdwg.mxu0
  %158 = vst.msk [vmem:[%s5] sm:$0xff] %vm33, %v153
  // Predicated region
  $region22: #{transformer_forward.11} parent=0 // pred_check
    _
  $region23: #{transformer_forward.11} parent=0 // pred_check_branch
    %160 = sbr.rel (0) target = $region25
  $region24: #{transformer_forward.11} parent=0 // pred_region
    _
  $region25: #{transformer_forward.11} parent=0 // pred_fallthru
    _
  // Predicated region
  $region26: #{transformer_forward.11} parent=0 // pred_check
    _
  $region27: #{transformer_forward.11} parent=0 // pred_check_branch
    %162 = sbr.rel (0) target = $region29
  $region28: #{transformer_forward.11} parent=0 // pred_region
    _
  $region29: #{transformer_forward.11} parent=0 // pred_fallthru
    _

// kernel: transformer_forward.10
$region0: #{transformer_forward.10}
  #allocation0 [shape = 'u32[]', space=smem, size = 0x4, offset = 0x4, fixed_abs, tag = 'smem constant byte address 0x4 - core index']
  #allocation1 [shape = 'u32[144,128]{1,0:T(1,128)}', space=vmem, size = 0x12000, scoped, tag = 'internal scratch']
  %s0 = inlined_call_operand.vmem [shape: f32[16,4], index: 0, kind: input, shape index: {}]
  %s1 = inlined_call_operand.vmem [shape: f32[4,64], index: 1, kind: input, shape index: {}]
  %s2 = inlined_call_operand.vmem [shape: f32[1,64], index: 2, kind: input, shape index: {}]
  %s3 = inlined_call_operand.vmem [shape: f32[64,16], index: 3, kind: input, shape index: {}]
  %s4 = inlined_call_operand.vmem [shape: f32[1,16], index: 4, kind: input, shape index: {}]
  %s5 = inlined_call_operand.vmem [shape: f32[16,16], index: 5, kind: output, shape index: {}]
  %s6 = sld [smem:[#allocation0]]
  $region30: #{transformer_forward.10} parent=0
    _
  %s8 = ssub.s32 1, %s6
  %s9 = scalar_select 0, %s8, %s6
  // Predicated region
  $region2: #{transformer_forward.10} parent=0 // pred_check
    _
  $region3: #{transformer_forward.10} parent=0 // pred_check_branch
    %11 = sbr.rel (0) target = $region5
  $region4: #{transformer_forward.10} parent=0 // pred_region
    _
  $region5: #{transformer_forward.10} parent=0 // pred_fallthru
    _
  // Predicated region
  $region6: #{transformer_forward.10} parent=0 // pred_check
    _
  $region7: #{transformer_forward.10} parent=0 // pred_check_branch
    %13 = sbr.rel (0) target = $region9
  $region8: #{transformer_forward.10} parent=0 // pred_region
    _
  $region9: #{transformer_forward.10} parent=0 // pred_fallthru
    _
  // Predicated region
  $region10: #{transformer_forward.10} parent=0 // pred_check
    _
  $region11: #{transformer_forward.10} parent=0 // pred_check_branch
    %15 = sbr.rel (0) target = $region13
  $region12: #{transformer_forward.10} parent=0 // pred_region
    _
  $region13: #{transformer_forward.10} parent=0 // pred_fallthru
    _
  // Predicated region
  $region14: #{transformer_forward.10} parent=0 // pred_check
    _
  $region15: #{transformer_forward.10} parent=0 // pred_check_branch
    %17 = sbr.rel (0) target = $region17
  $region16: #{transformer_forward.10} parent=0 // pred_region
    _
  $region17: #{transformer_forward.10} parent=0 // pred_fallthru
    _
  // Predicated region
  $region18: #{transformer_forward.10} parent=0 // pred_check
    _
  $region19: #{transformer_forward.10} parent=0 // pred_check_branch
    %19 = sbr.rel (0) target = $region21
  $region20: #{transformer_forward.10} parent=0 // pred_region
    _
  $region21: #{transformer_forward.10} parent=0 // pred_fallthru
    _
  %v21 = vld [vmem:[%s0] sm:$0xff]
  %v22 = vld [vmem:[%s0 + $0x8] sm:$0xff]
  %v23 = vpack.c.bf16 %v22, %v21
  %v24 = vld [vmem:[%s1] sm:$0xf]
  %v25 = vpack.c.bf16 %v24, %v24
  %v26 = vld [vmem:[%s2] sm:$0x1]
  %v28 = vlaneseq
  %v29 = vshrl.u32 %v28, 7
  %v30 = vsub.s32 0, %v29
  %v31 = vrot.slane %v26, %v30
  %vm33 = vcmask 31744
  %v35 = vsel %vm33, %v23, 0
  %vm37 = vcmask 1041408
  %v39 = vsel %vm37, %v25, 0
  %41 = vmatprep.subr.bf16.mxu0 0
  %42 = vmatpush1.bf16.msra.mxu0 %v39
  %43 = vmatprep.subr.bf16.mxu0 0
  %44 = vmatpush1.bf16.msra.mxu0 0
  %45 = vmatprep.subr.bf16.mxu0 0
  %46 = vmatpush1.bf16.msra.mxu0 0
  %47 = vmatprep.subr.bf16.mxu0 0
  %48 = vmatpush1.bf16.msra.mxu0 0
  %49 = vmatprep.subr.bf16.mxu0 0
  %50 = vmatpush1.bf16.msra.mxu0 0
  %51 = vmatprep.subr.bf16.mxu0 0
  %52 = vmatpush1.bf16.msra.mxu0 0
  %53 = vmatprep.subr.bf16.mxu0 0
  %54 = vmatpush1.bf16.msra.mxu0 0
  %55 = vmatprep.subr.bf16.mxu0 0
  %56 = vmatpush1.bf16.msra.mxu0 0
  %57 = vmatprep.subr.bf16.mxu0 0
  %58 = vmatpush1.bf16.msra.mxu0 0
  %59 = vmatprep.subr.bf16.mxu0 0
  %60 = vmatpush1.bf16.msra.mxu0 0
  %61 = vmatprep.subr.bf16.mxu0 0
  %62 = vmatpush1.bf16.msra.mxu0 0
  %63 = vmatprep.subr.bf16.mxu0 0
  %64 = vmatpush1.bf16.msra.mxu0 0
  %65 = vmatprep.subr.bf16.mxu0 0
  %66 = vmatpush1.bf16.msra.mxu0 0
  %67 = vmatprep.subr.bf16.mxu0 0
  %68 = vmatpush1.bf16.msra.mxu0 0
  %69 = vmatprep.subr.bf16.mxu0 0
  %70 = vmatpush1.bf16.msra.mxu0 0
  %71 = vmatprep.subr.bf16.mxu0 0
  %72 = vmatpush1.bf16.msra.mxu0 0
  %73 = vmatprep.mubr.bf16.mxu0 0
  %74 = vmatmul.mubr.bf16.gmra.mrb[0].mxu0 %v35
  %v75 = vpop.f32.mrb[0].mxu0
  %v76 = vadd.f32 %v31, %v75
  %v77 = vpop.f32.mrb[0].mxu0
  %v78 = vpop.f32.mrb[0].mxu0
  %v79 = vadd.f32 %v31, %v78
  %v80 = vpop.f32.mrb[0].mxu0
  %81 = vdwg.mxu0
  %v82 = vmul.f32 %v76, 0.5
  %v83 = vmul.f32 %v79, 0.5
  %v84 = vmul.f32 %v76, 0.70710677
  %v85 = vmul.f32 %v79, 0.70710677
  %vm86 = vcmp.ge.f32.partialorder %v84, 0.0
  %vm87 = vcmp.ge.f32.partialorder %v85, 0.0
  %v88 = vsel %vm86, 1.0, -1.0
  %v89 = vsel %vm87, 1.0, -1.0
  %v90 = vand.u32 2147483647, %v84
  %v91 = vand.u32 2147483647, %v85
  %v92 = vmul.f32 %v90, 0.3275911
  %v93 = vmul.f32 %v91, 0.3275911
  %v94 = vadd.f32 %v92, 1.0
  %v95 = vadd.f32 %v93, 1.0
  %v96 = vrcp.pop %v94
  %v97 = vmul.f32 1.0, %v96
  %v98 = vrcp.pop %v95
  %v99 = vmul.f32 1.0, %v98
  %v100 = vmul.f32 %v97, 1.0614054
  %v101 = vmul.f32 %v99, 1.0614054
  %v102 = vadd.f32 %v100, -1.4531521
  %v103 = vadd.f32 %v101, -1.4531521
  %v104 = vmul.f32 %v102, %v97
  %v105 = vmul.f32 %v103, %v99
  %v106 = vadd.f32 %v104, 1.4214138
  %v107 = vadd.f32 %v105, 1.4214138
  %v108 = vmul.f32 %v106, %v97
  %v109 = vmul.f32 %v107, %v99
  %v110 = vadd.f32 %v108, -0.28449672
  %v111 = vadd.f32 %v109, -0.28449672
  %v112 = vmul.f32 %v110, %v97
  %v113 = vmul.f32 %v111, %v99
  %v114 = vadd.f32 %v112, 0.2548296
  %v115 = vadd.f32 %v113, 0.2548296
  %v116 = vmul.f32 %v114, %v97
  %v117 = vmul.f32 %v115, %v99
  %v118 = vsub.f32 0.0, %v90
  %v119 = vsub.f32 0.0, %v91
  %v120 = vmul.f32 %v118, %v90
  %v121 = vmul.f32 %v119, %v91
  %v122 = vmul.f32 %v120, 1.442695
  %v123 = vpow.pop %v122
  %v124 = vmul.f32 %v121, 1.442695
  %v125 = vpow.pop %v124
  %v126 = vmul.f32 %v116, %v123
  %v127 = vmul.f32 %v117, %v125
  %v128 = vsub.f32 1.0, %v126
  %v129 = vsub.f32 1.0, %v127
  %v130 = vmul.f32 %v88, %v128
  %v131 = vmul.f32 %v89, %v129
  %v132 = vadd.f32 %v130, 1.0
  %v133 = vadd.f32 %v131, 1.0
  %v134 = vmul.f32 %v82, %v132
  %v135 = vmul.f32 %v83, %v133
  %v136 = vpack.c.bf16 %v135, %v134
  %v137 = vld [vmem:[%s3] sm:$0xff]
  %v138 = vld [vmem:[%s3 + $0x8] sm:$0xff]
  %v139 = vld [vmem:[%s3 + $0x10] sm:$0xff]
  %v140 = vld [vmem:[%s3 + $0x18] sm:$0xff]
  %v141 = vld [vmem:[%s3 + $0x20] sm:$0xff]
  %v142 = vld [vmem:[%s3 + $0x28] sm:$0xff]
  %v143 = vld [vmem:[%s3 + $0x30] sm:$0xff]
  %v144 = vld [vmem:[%s3 + $0x38] sm:$0xff]
  %v145 = vpack.c.bf16 %v138, %v137
  %v146 = vpack.c.bf16 %v140, %v139
  %v147 = vpack.c.bf16 %v142, %v141
  %v148 = vpack.c.bf16 %v144, %v143
  %v149 = vld [vmem:[%s4] sm:$0x1]
  %v151 = vlaneseq
  %v152 = vshrl.u32 %v151, 7
  %v153 = vsub.s32 0, %v152
  %v154 = vrot.slane %v149, %v153
  %vm156 = vcmask 523264
  %v158 = vsel %vm156, %v136, 0
  %160 = vmatprep.subr.bf16.mxu0 0
  %161 = vmatpush1.bf16.msra.mxu0 %v145
  %162 = vmatprep.subr.bf16.mxu0 0
  %163 = vmatpush1.bf16.msra.mxu0 %v146
  %164 = vmatprep.subr.bf16.mxu0 0
  %165 = vmatpush1.bf16.msra.mxu0 %v147
  %166 = vmatprep.subr.bf16.mxu0 0
  %167 = vmatpush1.bf16.msra.mxu0 %v148
  %168 = vmatprep.subr.bf16.mxu0 0
  %169 = vmatpush1.bf16.msra.mxu0 0
  %170 = vmatprep.subr.bf16.mxu0 0
  %171 = vmatpush1.bf16.msra.mxu0 0
  %172 = vmatprep.subr.bf16.mxu0 0
  %173 = vmatpush1.bf16.msra.mxu0 0
  %174 = vmatprep.subr.bf16.mxu0 0
  %175 = vmatpush1.bf16.msra.mxu0 0
  %176 = vmatprep.subr.bf16.mxu0 0
  %177 = vmatpush1.bf16.msra.mxu0 0
  %178 = vmatprep.subr.bf16.mxu0 0
  %179 = vmatpush1.bf16.msra.mxu0 0
  %180 = vmatprep.subr.bf16.mxu0 0
  %181 = vmatpush1.bf16.msra.mxu0 0
  %182 = vmatprep.subr.bf16.mxu0 0
  %183 = vmatpush1.bf16.msra.mxu0 0
  %184 = vmatprep.subr.bf16.mxu0 0
  %185 = vmatpush1.bf16.msra.mxu0 0
  %186 = vmatprep.subr.bf16.mxu0 0
  %187 = vmatpush1.bf16.msra.mxu0 0
  %188 = vmatprep.subr.bf16.mxu0 0
  %189 = vmatpush1.bf16.msra.mxu0 0
  %190 = vmatprep.subr.bf16.mxu0 0
  %191 = vmatpush1.bf16.msra.mxu0 0
  %192 = vmatprep.mubr.bf16.mxu0 0
  %193 = vmatmul.mubr.bf16.gmra.mrb[0].mxu0 %v158
  %v194 = vpop.f32.mrb[0].mxu0
  %v195 = vadd.f32 %v154, %v194
  %v196 = vpop.f32.mrb[0].mxu0
  %v197 = vpop.f32.mrb[0].mxu0
  %v198 = vadd.f32 %v154, %v197
  %v199 = vpop.f32.mrb[0].mxu0
  %200 = vdwg.mxu0
  %vm201 = vcmask 130048
  %202 = vst.msk [vmem:[%s5] sm:$0xff] %vm201, %v195
  %203 = vst.msk [vmem:[%s5 + $0x8] sm:$0xff] %vm201, %v198
  // Predicated region
  $region22: #{transformer_forward.10} parent=0 // pred_check
    _
  $region23: #{transformer_forward.10} parent=0 // pred_check_branch
    %205 = sbr.rel (0) target = $region25
  $region24: #{transformer_forward.10} parent=0 // pred_region
    _
  $region25: #{transformer_forward.10} parent=0 // pred_fallthru
    _
  // Predicated region
  $region26: #{transformer_forward.10} parent=0 // pred_check
    _
  $region27: #{transformer_forward.10} parent=0 // pred_check_branch
    %207 = sbr.rel (0) target = $region29
  $region28: #{transformer_forward.10} parent=0 // pred_region
    _
  $region29: #{transformer_forward.10} parent=0 // pred_fallthru
    _

// kernel: transformer_forward.12
$region0: #{transformer_forward.12}
  #allocation0 [shape = 'u32[]', space=smem, size = 0x4, offset = 0x4, fixed_abs, tag = 'smem constant byte address 0x4 - core index']
  #allocation1 [shape = 'u32[144,128]{1,0:T(1,128)}', space=vmem, size = 0x12000, scoped, tag = 'internal scratch']
  %s0 = inlined_call_operand.vmem [shape: f32[64,16], index: 0, kind: input, shape index: {}]
  %s1 = inlined_call_operand.vmem [shape: f32[16,16], index: 1, kind: input, shape index: {}]
  %s2 = inlined_call_operand.vmem [shape: f32[1,16], index: 2, kind: input, shape index: {}]
  %s3 = inlined_call_operand.vmem [shape: f32[16,32], index: 3, kind: input, shape index: {}]
  %s4 = inlined_call_operand.vmem [shape: f32[1,32], index: 4, kind: input, shape index: {}]
  %s5 = inlined_call_operand.vmem [shape: f32[64,32], index: 5, kind: output, shape index: {}]
  %s6 = sld [smem:[#allocation0]]
  $region30: #{transformer_forward.12} parent=0
    _
  %s8 = ssub.s32 1, %s6
  %s9 = scalar_select 0, %s8, %s6
  // Predicated region
  $region2: #{transformer_forward.12} parent=0 // pred_check
    _
  $region3: #{transformer_forward.12} parent=0 // pred_check_branch
    %11 = sbr.rel (0) target = $region5
  $region4: #{transformer_forward.12} parent=0 // pred_region
    _
  $region5: #{transformer_forward.12} parent=0 // pred_fallthru
    _
  // Predicated region
  $region6: #{transformer_forward.12} parent=0 // pred_check
    _
  $region7: #{transformer_forward.12} parent=0 // pred_check_branch
    %13 = sbr.rel (0) target = $region9
  $region8: #{transformer_forward.12} parent=0 // pred_region
    _
  $region9: #{transformer_forward.12} parent=0 // pred_fallthru
    _
  // Predicated region
  $region10: #{transformer_forward.12} parent=0 // pred_check
    _
  $region11: #{transformer_forward.12} parent=0 // pred_check_branch
    %15 = sbr.rel (0) target = $region13
  $region12: #{transformer_forward.12} parent=0 // pred_region
    _
  $region13: #{transformer_forward.12} parent=0 // pred_fallthru
    _
  // Predicated region
  $region14: #{transformer_forward.12} parent=0 // pred_check
    _
  $region15: #{transformer_forward.12} parent=0 // pred_check_branch
    %17 = sbr.rel (0) target = $region17
  $region16: #{transformer_forward.12} parent=0 // pred_region
    _
  $region17: #{transformer_forward.12} parent=0 // pred_fallthru
    _
  // Predicated region
  $region18: #{transformer_forward.12} parent=0 // pred_check
    _
  $region19: #{transformer_forward.12} parent=0 // pred_check_branch
    %19 = sbr.rel (0) target = $region21
  $region20: #{transformer_forward.12} parent=0 // pred_region
    _
  $region21: #{transformer_forward.12} parent=0 // pred_fallthru
    _
  %v21 = vld [vmem:[%s0] sm:$0xff]
  %v22 = vld [vmem:[%s0 + $0x8] sm:$0xff]
  %v23 = vld [vmem:[%s0 + $0x10] sm:$0xff]
  %v24 = vld [vmem:[%s0 + $0x18] sm:$0xff]
  %v25 = vld [vmem:[%s0 + $0x20] sm:$0xff]
  %v26 = vld [vmem:[%s0 + $0x28] sm:$0xff]
  %v27 = vld [vmem:[%s0 + $0x30] sm:$0xff]
  %v28 = vld [vmem:[%s0 + $0x38] sm:$0xff]
  %v29 = vpack.c.bf16 %v22, %v21
  %v30 = vpack.c.bf16 %v24, %v23
  %v31 = vpack.c.bf16 %v26, %v25
  %v32 = vpack.c.bf16 %v28, %v27
  %v33 = vld [vmem:[%s1] sm:$0xff]
  %v34 = vld [vmem:[%s1 + $0x8] sm:$0xff]
  %v35 = vpack.c.bf16 %v34, %v33
  %v36 = vld [vmem:[%s2] sm:$0x1]
  %v38 = vlaneseq
  %v39 = vshrl.u32 %v38, 7
  %v40 = vsub.s32 0, %v39
  %v41 = vrot.slane %v36, %v40
  %vm43 = vcmask 130048
  %v45 = vsel %vm43, %v29, 0
  %v48 = vsel %vm43, %v30, 0
  %v51 = vsel %vm43, %v31, 0
  %v54 = vsel %vm43, %v32, 0
  %56 = vmatprep.subr.bf16.mxu0 0
  %57 = vmatpush1.bf16.msra.mxu0 %v35
  %58 = vmatprep.subr.bf16.mxu0 0
  %59 = vmatpush1.bf16.msra.mxu0 0
  %60 = vmatprep.subr.bf16.mxu0 0
  %61 = vmatpush1.bf16.msra.mxu0 0
  %62 = vmatprep.subr.bf16.mxu0 0
  %63 = vmatpush1.bf16.msra.mxu0 0
  %64 = vmatprep.subr.bf16.mxu0 0
  %65 = vmatpush1.bf16.msra.mxu0 0
  %66 = vmatprep.subr.bf16.mxu0 0
  %67 = vmatpush1.bf16.msra.mxu0 0
  %68 = vmatprep.subr.bf16.mxu0 0
  %69 = vmatpush1.bf16.msra.mxu0 0
  %70 = vmatprep.subr.bf16.mxu0 0
  %71 = vmatpush1.bf16.msra.mxu0 0
  %72 = vmatprep.subr.bf16.mxu0 0
  %73 = vmatpush1.bf16.msra.mxu0 0
  %74 = vmatprep.subr.bf16.mxu0 0
  %75 = vmatpush1.bf16.msra.mxu0 0
  %76 = vmatprep.subr.bf16.mxu0 0
  %77 = vmatpush1.bf16.msra.mxu0 0
  %78 = vmatprep.subr.bf16.mxu0 0
  %79 = vmatpush1.bf16.msra.mxu0 0
  %80 = vmatprep.subr.bf16.mxu0 0
  %81 = vmatpush1.bf16.msra.mxu0 0
  %82 = vmatprep.subr.bf16.mxu0 0
  %83 = vmatpush1.bf16.msra.mxu0 0
  %84 = vmatprep.subr.bf16.mxu0 0
  %85 = vmatpush1.bf16.msra.mxu0 0
  %86 = vmatprep.subr.bf16.mxu0 0
  %87 = vmatpush1.bf16.msra.mxu0 0
  %88 = vmatprep.mubr.bf16.mxu0 0
  %89 = vmatmul.mubr.bf16.gmra.mrb[0].mxu0 %v45
  %v90 = vpop.f32.mrb[0].mxu0
  %v91 = vadd.f32 %v41, %v90
  %v92 = vpop.f32.mrb[0].mxu0
  %v93 = vpop.f32.mrb[0].mxu0
  %v94 = vadd.f32 %v41, %v93
  %v95 = vpop.f32.mrb[0].mxu0
  %96 = vmatprep.mubr.bf16.mxu0 0
  %97 = vmatmul.mubr.bf16.gmra.mrb[0].mxu0 %v48
  %v98 = vpop.f32.mrb[0].mxu0
  %v99 = vadd.f32 %v41, %v98
  %v100 = vpop.f32.mrb[0].mxu0
  %v101 = vpop.f32.mrb[0].mxu0
  %v102 = vadd.f32 %v41, %v101
  %v103 = vpop.f32.mrb[0].mxu0
  %104 = vmatprep.mubr.bf16.mxu0 0
  %105 = vmatmul.mubr.bf16.gmra.mrb[0].mxu0 %v51
  %v106 = vpop.f32.mrb[0].mxu0
  %v107 = vadd.f32 %v41, %v106
  %v108 = vpop.f32.mrb[0].mxu0
  %v109 = vpop.f32.mrb[0].mxu0
  %v110 = vadd.f32 %v41, %v109
  %v111 = vpop.f32.mrb[0].mxu0
  %112 = vmatprep.mubr.bf16.mxu0 0
  %113 = vmatmul.mubr.bf16.gmra.mrb[0].mxu0 %v54
  %v114 = vpop.f32.mrb[0].mxu0
  %v115 = vadd.f32 %v41, %v114
  %v116 = vpop.f32.mrb[0].mxu0
  %v117 = vpop.f32.mrb[0].mxu0
  %v118 = vadd.f32 %v41, %v117
  %v119 = vpop.f32.mrb[0].mxu0
  %120 = vdwg.mxu0
  %v121 = vmul.f32 %v91, 0.5
  %v122 = vmul.f32 %v94, 0.5
  %v123 = vmul.f32 %v99, 0.5
  %v124 = vmul.f32 %v102, 0.5
  %v125 = vmul.f32 %v107, 0.5
  %v126 = vmul.f32 %v110, 0.5
  %v127 = vmul.f32 %v115, 0.5
  %v128 = vmul.f32 %v118, 0.5
  %v129 = vmul.f32 %v91, 0.70710677
  %v130 = vmul.f32 %v94, 0.70710677
  %v131 = vmul.f32 %v99, 0.70710677
  %v132 = vmul.f32 %v102, 0.70710677
  %v133 = vmul.f32 %v107, 0.70710677
  %v134 = vmul.f32 %v110, 0.70710677
  %v135 = vmul.f32 %v115, 0.70710677
  %v136 = vmul.f32 %v118, 0.70710677
  %vm137 = vcmp.ge.f32.partialorder %v129, 0.0
  %vm138 = vcmp.ge.f32.partialorder %v130, 0.0
  %vm139 = vcmp.ge.f32.partialorder %v131, 0.0
  %vm140 = vcmp.ge.f32.partialorder %v132, 0.0
  %vm141 = vcmp.ge.f32.partialorder %v133, 0.0
  %vm142 = vcmp.ge.f32.partialorder %v134, 0.0
  %vm143 = vcmp.ge.f32.partialorder %v135, 0.0
  %vm144 = vcmp.ge.f32.partialorder %v136, 0.0
  %v145 = vsel %vm137, 1.0, -1.0
  %v146 = vsel %vm138, 1.0, -1.0
  %v147 = vsel %vm139, 1.0, -1.0
  %v148 = vsel %vm140, 1.0, -1.0
  %v149 = vsel %vm141, 1.0, -1.0
  %v150 = vsel %vm142, 1.0, -1.0
  %v151 = vsel %vm143, 1.0, -1.0
  %v152 = vsel %vm144, 1.0, -1.0
  %v153 = vand.u32 2147483647, %v129
  %v154 = vand.u32 2147483647, %v130
  %v155 = vand.u32 2147483647, %v131
  %v156 = vand.u32 2147483647, %v132
  %v157 = vand.u32 2147483647, %v133
  %v158 = vand.u32 2147483647, %v134
  %v159 = vand.u32 2147483647, %v135
  %v160 = vand.u32 2147483647, %v136
  %v161 = vmul.f32 %v153, 0.3275911
  %v162 = vmul.f32 %v154, 0.3275911
  %v163 = vmul.f32 %v155, 0.3275911
  %v164 = vmul.f32 %v156, 0.3275911
  %v165 = vmul.f32 %v157, 0.3275911
  %v166 = vmul.f32 %v158, 0.3275911
  %v167 = vmul.f32 %v159, 0.3275911
  %v168 = vmul.f32 %v160, 0.3275911
  %v169 = vadd.f32 %v161, 1.0
  %v170 = vadd.f32 %v162, 1.0
  %v171 = vadd.f32 %v163, 1.0
  %v172 = vadd.f32 %v164, 1.0
  %v173 = vadd.f32 %v165, 1.0
  %v174 = vadd.f32 %v166, 1.0
  %v175 = vadd.f32 %v167, 1.0
  %v176 = vadd.f32 %v168, 1.0
  %v177 = vrcp.pop %v169
  %v178 = vmul.f32 1.0, %v177
  %v179 = vrcp.pop %v170
  %v180 = vmul.f32 1.0, %v179
  %v181 = vrcp.pop %v171
  %v182 = vmul.f32 1.0, %v181
  %v183 = vrcp.pop %v172
  %v184 = vmul.f32 1.0, %v183
  %v185 = vrcp.pop %v173
  %v186 = vmul.f32 1.0, %v185
  %v187 = vrcp.pop %v174
  %v188 = vmul.f32 1.0, %v187
  %v189 = vrcp.pop %v175
  %v190 = vmul.f32 1.0, %v189
  %v191 = vrcp.pop %v176
  %v192 = vmul.f32 1.0, %v191
  %v193 = vmul.f32 %v178, 1.0614054
  %v194 = vmul.f32 %v180, 1.0614054
  %v195 = vmul.f32 %v182, 1.0614054
  %v196 = vmul.f32 %v184, 1.0614054
  %v197 = vmul.f32 %v186, 1.0614054
  %v198 = vmul.f32 %v188, 1.0614054
  %v199 = vmul.f32 %v190, 1.0614054
  %v200 = vmul.f32 %v192, 1.0614054
  %v201 = vadd.f32 %v193, -1.4531521
  %v202 = vadd.f32 %v194, -1.4531521
  %v203 = vadd.f32 %v195, -1.4531521
  %v204 = vadd.f32 %v196, -1.4531521
  %v205 = vadd.f32 %v197, -1.4531521
  %v206 = vadd.f32 %v198, -1.4531521
  %v207 = vadd.f32 %v199, -1.4531521
  %v208 = vadd.f32 %v200, -1.4531521
  %v209 = vmul.f32 %v201, %v178
  %v210 = vmul.f32 %v202, %v180
  %v211 = vmul.f32 %v203, %v182
  %v212 = vmul.f32 %v204, %v184
  %v213 = vmul.f32 %v205, %v186
  %v214 = vmul.f32 %v206, %v188
  %v215 = vmul.f32 %v207, %v190
  %v216 = vmul.f32 %v208, %v192
  %v217 = vadd.f32 %v209, 1.4214138
  %v218 = vadd.f32 %v210, 1.4214138
  %v219 = vadd.f32 %v211, 1.4214138
  %v220 = vadd.f32 %v212, 1.4214138
  %v221 = vadd.f32 %v213, 1.4214138
  %v222 = vadd.f32 %v214, 1.4214138
  %v223 = vadd.f32 %v215, 1.4214138
  %v224 = vadd.f32 %v216, 1.4214138
  %v225 = vmul.f32 %v217, %v178
  %v226 = vmul.f32 %v218, %v180
  %v227 = vmul.f32 %v219, %v182
  %v228 = vmul.f32 %v220, %v184
  %v229 = vmul.f32 %v221, %v186
  %v230 = vmul.f32 %v222, %v188
  %v231 = vmul.f32 %v223, %v190
  %v232 = vmul.f32 %v224, %v192
  %v233 = vadd.f32 %v225, -0.28449672
  %v234 = vadd.f32 %v226, -0.28449672
  %v235 = vadd.f32 %v227, -0.28449672
  %v236 = vadd.f32 %v228, -0.28449672
  %v237 = vadd.f32 %v229, -0.28449672
  %v238 = vadd.f32 %v230, -0.28449672
  %v239 = vadd.f32 %v231, -0.28449672
  %v240 = vadd.f32 %v232, -0.28449672
  %v241 = vmul.f32 %v233, %v178
  %v242 = vmul.f32 %v234, %v180
  %v243 = vmul.f32 %v235, %v182
  %v244 = vmul.f32 %v236, %v184
  %v245 = vmul.f32 %v237, %v186
  %v246 = vmul.f32 %v238, %v188
  %v247 = vmul.f32 %v239, %v190
  %v248 = vmul.f32 %v240, %v192
  %v249 = vadd.f32 %v241, 0.2548296
  %v250 = vadd.f32 %v242, 0.2548296
  %v251 = vadd.f32 %v243, 0.2548296
  %v252 = vadd.f32 %v244, 0.2548296
  %v253 = vadd.f32 %v245, 0.2548296
  %v254 = vadd.f32 %v246, 0.2548296
  %v255 = vadd.f32 %v247, 0.2548296
  %v256 = vadd.f32 %v248, 0.2548296
  %v257 = vmul.f32 %v249, %v178
  %v258 = vmul.f32 %v250, %v180
  %v259 = vmul.f32 %v251, %v182
  %v260 = vmul.f32 %v252, %v184
  %v261 = vmul.f32 %v253, %v186
  %v262 = vmul.f32 %v254, %v188
  %v263 = vmul.f32 %v255, %v190
  %v264 = vmul.f32 %v256, %v192
  %v265 = vsub.f32 0.0, %v153
  %v266 = vsub.f32 0.0, %v154
  %v267 = vsub.f32 0.0, %v155
  %v268 = vsub.f32 0.0, %v156
  %v269 = vsub.f32 0.0, %v157
  %v270 = vsub.f32 0.0, %v158
  %v271 = vsub.f32 0.0, %v159
  %v272 = vsub.f32 0.0, %v160
  %v273 = vmul.f32 %v265, %v153
  %v274 = vmul.f32 %v266, %v154
  %v275 = vmul.f32 %v267, %v155
  %v276 = vmul.f32 %v268, %v156
  %v277 = vmul.f32 %v269, %v157
  %v278 = vmul.f32 %v270, %v158
  %v279 = vmul.f32 %v271, %v159
  %v280 = vmul.f32 %v272, %v160
  %v281 = vmul.f32 %v273, 1.442695
  %v282 = vpow.pop %v281
  %v283 = vmul.f32 %v274, 1.442695
  %v284 = vpow.pop %v283
  %v285 = vmul.f32 %v275, 1.442695
  %v286 = vpow.pop %v285
  %v287 = vmul.f32 %v276, 1.442695
  %v288 = vpow.pop %v287
  %v289 = vmul.f32 %v277, 1.442695
  %v290 = vpow.pop %v289
  %v291 = vmul.f32 %v278, 1.442695
  %v292 = vpow.pop %v291
  %v293 = vmul.f32 %v279, 1.442695
  %v294 = vpow.pop %v293
  %v295 = vmul.f32 %v280, 1.442695
  %v296 = vpow.pop %v295
  %v297 = vmul.f32 %v257, %v282
  %v298 = vmul.f32 %v258, %v284
  %v299 = vmul.f32 %v259, %v286
  %v300 = vmul.f32 %v260, %v288
  %v301 = vmul.f32 %v261, %v290
  %v302 = vmul.f32 %v262, %v292
  %v303 = vmul.f32 %v263, %v294
  %v304 = vmul.f32 %v264, %v296
  %v305 = vsub.f32 1.0, %v297
  %v306 = vsub.f32 1.0, %v298
  %v307 = vsub.f32 1.0, %v299
  %v308 = vsub.f32 1.0, %v300
  %v309 = vsub.f32 1.0, %v301
  %v310 = vsub.f32 1.0, %v302
  %v311 = vsub.f32 1.0, %v303
  %v312 = vsub.f32 1.0, %v304
  %v313 = vmul.f32 %v145, %v305
  %v314 = vmul.f32 %v146, %v306
  %v315 = vmul.f32 %v147, %v307
  %v316 = vmul.f32 %v148, %v308
  %v317 = vmul.f32 %v149, %v309
  %v318 = vmul.f32 %v150, %v310
  %v319 = vmul.f32 %v151, %v311
  %v320 = vmul.f32 %v152, %v312
  %v321 = vadd.f32 %v313, 1.0
  %v322 = vadd.f32 %v314, 1.0
  %v323 = vadd.f32 %v315, 1.0
  %v324 = vadd.f32 %v316, 1.0
  %v325 = vadd.f32 %v317, 1.0
  %v326 = vadd.f32 %v318, 1.0
  %v327 = vadd.f32 %v319, 1.0
  %v328 = vadd.f32 %v320, 1.0
  %v329 = vmul.f32 %v121, %v321
  %v330 = vmul.f32 %v122, %v322
  %v331 = vmul.f32 %v123, %v323
  %v332 = vmul.f32 %v124, %v324
  %v333 = vmul.f32 %v125, %v325
  %v334 = vmul.f32 %v126, %v326
  %v335 = vmul.f32 %v127, %v327
  %v336 = vmul.f32 %v128, %v328
  %v337 = vpack.c.bf16 %v330, %v329
  %v338 = vpack.c.bf16 %v332, %v331
  %v339 = vpack.c.bf16 %v334, %v333
  %v340 = vpack.c.bf16 %v336, %v335
  %v341 = vld [vmem:[%s3] sm:$0xff]
  %v342 = vld [vmem:[%s3 + $0x8] sm:$0xff]
  %v343 = vpack.c.bf16 %v342, %v341
  %v344 = vld [vmem:[%s4] sm:$0x1]
  %v346 = vlaneseq
  %v347 = vshrl.u32 %v346, 7
  %v348 = vsub.s32 0, %v347
  %v349 = vrot.slane %v344, %v348
  %v352 = vsel %vm43, %v337, 0
  %v355 = vsel %vm43, %v338, 0
  %v358 = vsel %vm43, %v339, 0
  %v361 = vsel %vm43, %v340, 0
  %363 = vmatprep.subr.bf16.mxu0 0
  %364 = vmatpush1.bf16.msra.mxu0 %v343
  %365 = vmatprep.subr.bf16.mxu0 0
  %366 = vmatpush1.bf16.msra.mxu0 0
  %367 = vmatprep.subr.bf16.mxu0 0
  %368 = vmatpush1.bf16.msra.mxu0 0
  %369 = vmatprep.subr.bf16.mxu0 0
  %370 = vmatpush1.bf16.msra.mxu0 0
  %371 = vmatprep.subr.bf16.mxu0 0
  %372 = vmatpush1.bf16.msra.mxu0 0
  %373 = vmatprep.subr.bf16.mxu0 0
  %374 = vmatpush1.bf16.msra.mxu0 0
  %375 = vmatprep.subr.bf16.mxu0 0
  %376 = vmatpush1.bf16.msra.mxu0 0
  %377 = vmatprep.subr.bf16.mxu0 0
  %378 = vmatpush1.bf16.msra.mxu0 0
  %379 = vmatprep.subr.bf16.mxu0 0
  %380 = vmatpush1.bf16.msra.mxu0 0
  %381 = vmatprep.subr.bf16.mxu0 0
  %382 = vmatpush1.bf16.msra.mxu0 0
  %383 = vmatprep.subr.bf16.mxu0 0
  %384 = vmatpush1.bf16.msra.mxu0 0
  %385 = vmatprep.subr.bf16.mxu0 0
  %386 = vmatpush1.bf16.msra.mxu0 0
  %387 = vmatprep.subr.bf16.mxu0 0
  %388 = vmatpush1.bf16.msra.mxu0 0
  %389 = vmatprep.subr.bf16.mxu0 0
  %390 = vmatpush1.bf16.msra.mxu0 0
  %391 = vmatprep.subr.bf16.mxu0 0
  %392 = vmatpush1.bf16.msra.mxu0 0
  %393 = vmatprep.subr.bf16.mxu0 0
  %394 = vmatpush1.bf16.msra.mxu0 0
  %395 = vmatprep.mubr.bf16.mxu0 0
  %396 = vmatmul.mubr.bf16.gmra.mrb[0].mxu0 %v352
  %v397 = vpop.f32.mrb[0].mxu0
  %v398 = vadd.f32 %v349, %v397
  %v399 = vpop.f32.mrb[0].mxu0
  %v400 = vpop.f32.mrb[0].mxu0
  %v401 = vadd.f32 %v349, %v400
  %v402 = vpop.f32.mrb[0].mxu0
  %403 = vmatprep.mubr.bf16.mxu0 0
  %404 = vmatmul.mubr.bf16.gmra.mrb[0].mxu0 %v355
  %v405 = vpop.f32.mrb[0].mxu0
  %v406 = vadd.f32 %v349, %v405
  %v407 = vpop.f32.mrb[0].mxu0
  %v408 = vpop.f32.mrb[0].mxu0
  %v409 = vadd.f32 %v349, %v408
  %v410 = vpop.f32.mrb[0].mxu0
  %411 = vmatprep.mubr.bf16.mxu0 0
  %412 = vmatmul.mubr.bf16.gmra.mrb[0].mxu0 %v358
  %v413 = vpop.f32.mrb[0].mxu0
  %v414 = vadd.f32 %v349, %v413
  %v415 = vpop.f32.mrb[0].mxu0
  %v416 = vpop.f32.mrb[0].mxu0
  %v417 = vadd.f32 %v349, %v416
  %v418 = vpop.f32.mrb[0].mxu0
  %419 = vmatprep.mubr.bf16.mxu0 0
  %420 = vmatmul.mubr.bf16.gmra.mrb[0].mxu0 %v361
  %v421 = vpop.f32.mrb[0].mxu0
  %v422 = vadd.f32 %v349, %v421
  %v423 = vpop.f32.mrb[0].mxu0
  %v424 = vpop.f32.mrb[0].mxu0
  %v425 = vadd.f32 %v349, %v424
  %v426 = vpop.f32.mrb[0].mxu0
  %427 = vdwg.mxu0
  %vm428 = vcmask 261120
  %429 = vst.msk [vmem:[%s5] sm:$0xff] %vm428, %v398
  %430 = vst.msk [vmem:[%s5 + $0x8] sm:$0xff] %vm428, %v401
  %431 = vst.msk [vmem:[%s5 + $0x10] sm:$0xff] %vm428, %v406
  %432 = vst.msk [vmem:[%s5 + $0x18] sm:$0xff] %vm428, %v409
  %433 = vst.msk [vmem:[%s5 + $0x20] sm:$0xff] %vm428, %v414
  %434 = vst.msk [vmem:[%s5 + $0x28] sm:$0xff] %vm428, %v417
  %435 = vst.msk [vmem:[%s5 + $0x30] sm:$0xff] %vm428, %v422
  %436 = vst.msk [vmem:[%s5 + $0x38] sm:$0xff] %vm428, %v425
  // Predicated region
  $region22: #{transformer_forward.12} parent=0 // pred_check
    _
  $region23: #{transformer_forward.12} parent=0 // pred_check_branch
    %438 = sbr.rel (0) target = $region25
  $region24: #{transformer_forward.12} parent=0 // pred_region
    _
  $region25: #{transformer_forward.12} parent=0 // pred_fallthru
    _
  // Predicated region
  $region26: #{transformer_forward.12} parent=0 // pred_check
    _
  $region27: #{transformer_forward.12} parent=0 // pred_check_branch
    %440 = sbr.rel (0) target = $region29
  $region28: #{transformer_forward.12} parent=0 // pred_region
    _
  $region29: #{transformer_forward.12} parent=0 // pred_fallthru
    _

// kernel: transformer_forward.13
$region0: #{transformer_forward.13}
  #allocation0 [shape = 'u32[]', space=smem, size = 0x4, offset = 0x4, fixed_abs, tag = 'smem constant byte address 0x4 - core index']
  #allocation1 [shape = 'u32[144,128]{1,0:T(1,128)}', space=vmem, size = 0x12000, scoped, tag = 'internal scratch']
  %s0 = inlined_call_operand.vmem [shape: f32[64,32], index: 0, kind: input, shape index: {}]
  %s1 = inlined_call_operand.vmem [shape: f32[2,32,16], index: 1, kind: input, shape index: {}]
  %s2 = inlined_call_operand.vmem [shape: f32[2,1,16], index: 2, kind: input, shape index: {}]
  %s3 = inlined_call_operand.vmem [shape: bf16[2,64,16], index: 3, kind: output, shape index: {}]
  %s4 = sld [smem:[#allocation0]]
  $region45: #{transformer_forward.13} parent=0
    _
  %s6 = ssub.s32 1, %s4
  %s7 = scalar_select 0, %s6, %s4
  loop: start=0, step=1, limit=4
  $region2: #{transformer_forward.13} parent=0 // loop_pre_header
    _
  $region3: #{transformer_forward.13} parent=0 // loop_header
    %s9 = sphi 0, %s13
    %p10 = scmp.ge.s32.totalorder %s9, 4
    %s16 = sphi 0, %s28
    %s17 = sphi 0, %s24
    %s18 = sphi 0, %s16
    %s19 = sphi 0, %s17
    %s20 = sphi 0, %s18
    %s21 = sphi 0, %s19
    %s31 = sphi 0, %s33
    %s34 = sphi 0, %s31
    %s35 = sphi 0, %s34
    %s51 = sphi 0, %s35
    %s57 = sphi 0, %s59
    %s60 = sphi 0, %s57
    %s61 = sphi 0, %s60
    %s77 = sphi 0, %s61
    %s83 = sphi 0, %s85
    %s86 = sphi 0, %s83
    %s87 = sphi 0, %s86
    %s103 = sphi 0, %s87
    %s111 = sphi 0, %s113
    %s114 = sphi 0, %s111
    %s115 = sphi 0, %s114
    %s131 = sphi 0, %s115
  $region4: #{transformer_forward.13} parent=0 // loop_header_branch
    %12 = sbr.rel (%p10) target = $region8
  $region5: #{transformer_forward.13} parent=0 // loop_body
    %s14 = ssub.s32 %s9, 1
    %s15 = ssub.s32 %s9, 2
    %s22 = sadd.s32 1, %s17
    %p23 = scmp.ge.s32.totalorder %s22, 2
    %s24 = scalar_select %p23, 0, %s22
    %s25 = sadd.s32 1, %s16
    %s26 = scalar_select %p23, %s25, %s16
    %p27 = scmp.ge.s32.totalorder %s26, 1
    %s28 = scalar_select %p27, 0, %s26
    %s29 = ssub.s32 %s16, %s28
    %p30 = scmp.eq.s32.totalorder %s29, 0
    %s32 = sadd.s32 %s31, 1
    %s33 = scalar_select %p30, %s31, %s32
    %p36 = pneg %p30
    %p37 = scmp.eq.s32.totalorder %s9, 1
    %p38 = por %p36, %p37
    %p39 = scmp.ne.s32.totalorder %s31, %s34
    %p40 = scmp.eq.s32.totalorder %s9, 0
    %p41 = por %p39, %p40
    %p42 = scmp.ne.s32.totalorder %s31, %s34
    %p43 = scmp.eq.s32.totalorder %s14, 1
    %p44 = por %p42, %p43
    %p45 = scmp.ne.s32.totalorder %s34, %s35
    %p46 = scmp.eq.s32.totalorder %s14, 0
    %p47 = por %p45, %p46
    %p48 = scmp.ne.s32.totalorder %s34, %s35
    %p49 = scmp.eq.s32.totalorder %s15, 1
    %p50 = por %p48, %p49
    %p52 = scmp.ne.s32.totalorder %s35, %s51
    %p53 = scmp.eq.s32.totalorder %s15, 0
    %p54 = por %p52, %p53
    %s55 = ssub.s32 %s17, %s24
    %p56 = scmp.eq.s32.totalorder %s55, 0
    %s58 = sadd.s32 %s57, 1
    %s59 = scalar_select %p56, %s57, %s58
    %p62 = pneg %p56
    %p63 = scmp.eq.s32.totalorder %s9, 1
    %p64 = por %p62, %p63
    %p65 = scmp.ne.s32.totalorder %s57, %s60
    %p66 = scmp.eq.s32.totalorder %s9, 0
    %p67 = por %p65, %p66
    %p68 = scmp.ne.s32.totalorder %s57, %s60
    %p69 = scmp.eq.s32.totalorder %s14, 1
    %p70 = por %p68, %p69
    %p71 = scmp.ne.s32.totalorder %s60, %s61
    %p72 = scmp.eq.s32.totalorder %s14, 0
    %p73 = por %p71, %p72
    %p74 = scmp.ne.s32.totalorder %s60, %s61
    %p75 = scmp.eq.s32.totalorder %s15, 1
    %p76 = por %p74, %p75
    %p78 = scmp.ne.s32.totalorder %s61, %s77
    %p79 = scmp.eq.s32.totalorder %s15, 0
    %p80 = por %p78, %p79
    %s81 = ssub.s32 %s17, %s24
    %p82 = scmp.eq.s32.totalorder %s81, 0
    %s84 = sadd.s32 %s83, 1
    %s85 = scalar_select %p82, %s83, %s84
    %p88 = pneg %p82
    %p89 = scmp.eq.s32.totalorder %s9, 1
    %p90 = por %p88, %p89
    %p91 = scmp.ne.s32.totalorder %s83, %s86
    %p92 = scmp.eq.s32.totalorder %s9, 0
    %p93 = por %p91, %p92
    %p94 = scmp.ne.s32.totalorder %s83, %s86
    %p95 = scmp.eq.s32.totalorder %s14, 1
    %p96 = por %p94, %p95
    %p97 = scmp.ne.s32.totalorder %s86, %s87
    %p98 = scmp.eq.s32.totalorder %s14, 0
    %p99 = por %p97, %p98
    %p100 = scmp.ne.s32.totalorder %s86, %s87
    %p101 = scmp.eq.s32.totalorder %s15, 1
    %p102 = por %p100, %p101
    %p104 = scmp.ne.s32.totalorder %s87, %s103
    %p105 = scmp.eq.s32.totalorder %s15, 0
    %p106 = por %p104, %p105
    %s107 = ssub.s32 %s17, %s24
    %s108 = ssub.s32 %s16, %s28
    %s109 = sor.u32 %s107, %s108
    %p110 = scmp.eq.s32.totalorder %s109, 0
    %s112 = sadd.s32 %s111, 1
    %s113 = scalar_select %p110, %s111, %s112
    %p116 = pneg %p110
    %p117 = scmp.eq.s32.totalorder %s9, 1
    %p118 = por %p116, %p117
    %p119 = scmp.ne.s32.totalorder %s111, %s114
    %p120 = scmp.eq.s32.totalorder %s9, 0
    %p121 = por %p119, %p120
    %p122 = scmp.ne.s32.totalorder %s111, %s114
    %p123 = scmp.eq.s32.totalorder %s14, 1
    %p124 = por %p122, %p123
    %p125 = scmp.ne.s32.totalorder %s114, %s115
    %p126 = scmp.eq.s32.totalorder %s14, 0
    %p127 = por %p125, %p126
    %p128 = scmp.ne.s32.totalorder %s114, %s115
    %p129 = scmp.eq.s32.totalorder %s15, 1
    %p130 = por %p128, %p129
    %p132 = scmp.ne.s32.totalorder %s115, %s131
    %p133 = scmp.eq.s32.totalorder %s15, 0
    %p134 = por %p132, %p133
    %p135 = scmp.le.s32.totalorder 1, %s9
    %p136 = scmp.lt.s32.totalorder %s9, 3
    %p137 = pnand %p135, %p136
    %p138 = pneg %p137
    // Predicated region
    $region9: #{transformer_forward.13} parent=5 // pred_check
      _
    $region10: #{transformer_forward.13} parent=5 // pred_check_branch
      %140 = sbr.rel (%p137) target = $region12
    $region11: #{transformer_forward.13} parent=5 // pred_region
      %s141 = ssub.s32 %s9, 1
      // Predicated region
      $region13: #{transformer_forward.13} parent=11 // pred_check
        %p142 = pneg %p47
      $region14: #{transformer_forward.13} parent=11 // pred_check_branch
        %144 = sbr.rel (%p142) target = $region16
      $region15: #{transformer_forward.13} parent=11 // pred_region
        %s145 = smul.u32 8, %s18
        %p146 = scmp.lt.s32.totalorder %s145, 7
        %s147 = scalar_select %p146, %s145, 7
        %s148 = smul.addr %s147, 8
        %s149 = scalar_lea.vmem %s0, %s148
        %s150 = smul.u32 8, %s18
      $region16: #{transformer_forward.13} parent=11 // pred_fallthru
        _
    $region12: #{transformer_forward.13} parent=5 // pred_fallthru
      _
    %p151 = scmp.lt.s32.totalorder %s9, 2
    // Predicated region
    $region17: #{transformer_forward.13} parent=5 // pred_check
      %p152 = pneg %p151
    $region18: #{transformer_forward.13} parent=5 // pred_check_branch
      %154 = sbr.rel (%p152) target = $region20
    $region19: #{transformer_forward.13} parent=5 // pred_region
      // Predicated region
      $region21: #{transformer_forward.13} parent=19 // pred_check
        %p155 = pneg %p67
      $region22: #{transformer_forward.13} parent=19 // pred_check_branch
        %157 = sbr.rel (%p155) target = $region24
      $region23: #{transformer_forward.13} parent=19 // pred_region
        %p158 = scmp.lt.s32.totalorder %s17, 1
        %s159 = scalar_select %p158, %s17, 1
        %s160 = smul.addr %s159, 4
        %s161 = smul.addr %s160, 8
        %s162 = scalar_lea.vmem %s1, %s161
      $region24: #{transformer_forward.13} parent=19 // pred_fallthru
        _
      // Predicated region
      $region25: #{transformer_forward.13} parent=19 // pred_check
        %p163 = pneg %p93
      $region26: #{transformer_forward.13} parent=19 // pred_check_branch
        %165 = sbr.rel (%p163) target = $region28
      $region27: #{transformer_forward.13} parent=19 // pred_region
        %p166 = scmp.lt.s32.totalorder %s17, 1
        %s167 = scalar_select %p166, %s17, 1
        %s168 = scalar_lea.vmem %s2, %s167
      $region28: #{transformer_forward.13} parent=19 // pred_fallthru
        _
    $region20: #{transformer_forward.13} parent=5 // pred_fallthru
      _
    %p169 = scmp.le.s32.totalorder 1, %s9
    %p170 = scmp.lt.s32.totalorder %s9, 3
    %p171 = pnand %p169, %p170
    %p172 = pneg %p171
    // Predicated region
    $region29: #{transformer_forward.13} parent=5 // pred_check
      _
    $region30: #{transformer_forward.13} parent=5 // pred_check_branch
      %174 = sbr.rel (%p171) target = $region32
    $region31: #{transformer_forward.13} parent=5 // pred_region
      %s175 = ssub.s32 %s9, 1
      %s176 = smul.u32 8, %s18
      %p177 = scmp.lt.s32.totalorder %s176, 7
      %s178 = scalar_select %p177, %s176, 7
      %s179 = smul.addr %s178, 8
      %s180 = scalar_lea.vmem %s0, %s179
      %p181 = pneg %p47
      %p182 = pneg %p44
      %p183 = scmp.lt.s32.totalorder %s19, 1
      %s184 = scalar_select %p183, %s19, 1
      %s185 = smul.addr %s184, 4
      %s186 = smul.addr %s185, 8
      %s187 = scalar_lea.vmem %s1, %s186
      %p188 = pneg %p73
      %p189 = pneg %p70
      %p190 = scmp.lt.s32.totalorder %s19, 1
      %s191 = scalar_select %p190, %s19, 1
      %s192 = scalar_lea.vmem %s2, %s191
      %p193 = pneg %p99
      %p194 = pneg %p96
      %p195 = pneg %p127
      %p196 = pneg %p124
      %s197 = smul.u32 8, %s18
      %p198 = scmp.lt.s32.totalorder %s19, 1
      %s199 = scalar_select %p198, %s19, 1
      %p200 = scmp.lt.s32.totalorder %s197, 7
      %s201 = scalar_select %p200, %s197, 7
      %s202 = smul.addr %s199, 8
      %s203 = sadd.s32 %s201, %s202
      %s204 = smul.addr %s203, 4
      %s205 = scalar_lea.vmem %s3, %s204
      %s206 = smul.u32 8, %s18
      %p207 = scmp.lt.s32.totalorder %s206, 7
      %s208 = scalar_select %p207, %s206, 7
      %s209 = smul.addr %s208, 8
      %s210 = scalar_lea.vmem %s0, %s209
      %s211 = smul.u32 8, %s18
      %p212 = scmp.lt.s32.totalorder %s19, 1
      %s213 = scalar_select %p212, %s19, 1
      %s214 = smul.addr %s213, 4
      %s215 = smul.addr %s214, 8
      %s216 = scalar_lea.vmem %s1, %s215
      %p217 = scmp.lt.s32.totalorder %s19, 1
      %s218 = scalar_select %p217, %s19, 1
      %s219 = scalar_lea.vmem %s2, %s218
      %s220 = smul.u32 8, %s18
      %p221 = scmp.lt.s32.totalorder %s19, 1
      %s222 = scalar_select %p221, %s19, 1
      %p223 = scmp.lt.s32.totalorder %s220, 7
      %s224 = scalar_select %p223, %s220, 7
      %s225 = smul.addr %s222, 8
      %s226 = sadd.s32 %s224, %s225
      %s227 = smul.addr %s226, 4
      %s228 = scalar_lea.vmem %s3, %s227
      %s229 = smul.u32 8, %s18
      %v231 = vld [vmem:[%s210] sm:$0xff]
      %v232 = vld [vmem:[%s210 + $0x8] sm:$0xff]
      %v233 = vld [vmem:[%s210 + $0x10] sm:$0xff]
      %v234 = vld [vmem:[%s210 + $0x18] sm:$0xff]
      %v235 = vld [vmem:[%s210 + $0x20] sm:$0xff]
      %v236 = vld [vmem:[%s210 + $0x28] sm:$0xff]
      %v237 = vld [vmem:[%s210 + $0x30] sm:$0xff]
      %v238 = vld [vmem:[%s210 + $0x38] sm:$0xff]
      %v239 = vpack.c.bf16 %v232, %v231
      %v240 = vpack.c.bf16 %v234, %v233
      %v241 = vpack.c.bf16 %v236, %v235
      %v242 = vpack.c.bf16 %v238, %v237
      %v243 = vld [vmem:[%s216] sm:$0xff]
      %v244 = vld [vmem:[%s216 + $0x8] sm:$0xff]
      %v245 = vld [vmem:[%s216 + $0x10] sm:$0xff]
      %v246 = vld [vmem:[%s216 + $0x18] sm:$0xff]
      %v247 = vpack.c.bf16 %v244, %v243
      %v248 = vpack.c.bf16 %v246, %v245
      %v249 = vld [vmem:[%s219] sm:$0x1]
      %v251 = vlaneseq
      %v252 = vshrl.u32 %v251, 7
      %v253 = vsub.s32 0, %v252
      %v254 = vrot.slane %v249, %v253
      %vm256 = vcmask 261120
      %v258 = vsel %vm256, %v239, 0
      %v261 = vsel %vm256, %v240, 0
      %v264 = vsel %vm256, %v241, 0
      %v267 = vsel %vm256, %v242, 0
      %269 = vmatprep.subr.bf16.mxu0 0
      %270 = vmatpush1.bf16.msra.mxu0 %v247
      %271 = vmatprep.subr.bf16.mxu0 0
      %272 = vmatpush1.bf16.msra.mxu0 %v248
      %273 = vmatprep.subr.bf16.mxu0 0
      %274 = vmatpush1.bf16.msra.mxu0 0
      %275 = vmatprep.subr.bf16.mxu0 0
      %276 = vmatpush1.bf16.msra.mxu0 0
      %277 = vmatprep.subr.bf16.mxu0 0
      %278 = vmatpush1.bf16.msra.mxu0 0
      %279 = vmatprep.subr.bf16.mxu0 0
      %280 = vmatpush1.bf16.msra.mxu0 0
      %281 = vmatprep.subr.bf16.mxu0 0
      %282 = vmatpush1.bf16.msra.mxu0 0
      %283 = vmatprep.subr.bf16.mxu0 0
      %284 = vmatpush1.bf16.msra.mxu0 0
      %285 = vmatprep.subr.bf16.mxu0 0
      %286 = vmatpush1.bf16.msra.mxu0 0
      %287 = vmatprep.subr.bf16.mxu0 0
      %288 = vmatpush1.bf16.msra.mxu0 0
      %289 = vmatprep.subr.bf16.mxu0 0
      %290 = vmatpush1.bf16.msra.mxu0 0
      %291 = vmatprep.subr.bf16.mxu0 0
      %292 = vmatpush1.bf16.msra.mxu0 0
      %293 = vmatprep.subr.bf16.mxu0 0
      %294 = vmatpush1.bf16.msra.mxu0 0
      %295 = vmatprep.subr.bf16.mxu0 0
      %296 = vmatpush1.bf16.msra.mxu0 0
      %297 = vmatprep.subr.bf16.mxu0 0
      %298 = vmatpush1.bf16.msra.mxu0 0
      %299 = vmatprep.subr.bf16.mxu0 0
      %300 = vmatpush1.bf16.msra.mxu0 0
      %301 = vmatprep.mubr.bf16.mxu0 0
      %302 = vmatmul.mubr.bf16.gmra.mrb[0].mxu0 %v258
      %v303 = vpop.f32.mrb[0].mxu0
      %v304 = vadd.f32 %v254, %v303
      %v305 = vpop.f32.mrb[0].mxu0
      %v306 = vpop.f32.mrb[0].mxu0
      %v307 = vadd.f32 %v254, %v306
      %v308 = vpop.f32.mrb[0].mxu0
      %309 = vmatprep.mubr.bf16.mxu0 0
      %310 = vmatmul.mubr.bf16.gmra.mrb[0].mxu0 %v261
      %v311 = vpop.f32.mrb[0].mxu0
      %v312 = vadd.f32 %v254, %v311
      %v313 = vpop.f32.mrb[0].mxu0
      %v314 = vpop.f32.mrb[0].mxu0
      %v315 = vadd.f32 %v254, %v314
      %v316 = vpop.f32.mrb[0].mxu0
      %317 = vmatprep.mubr.bf16.mxu0 0
      %318 = vmatmul.mubr.bf16.gmra.mrb[0].mxu0 %v264
      %v319 = vpop.f32.mrb[0].mxu0
      %v320 = vadd.f32 %v254, %v319
      %v321 = vpop.f32.mrb[0].mxu0
      %v322 = vpop.f32.mrb[0].mxu0
      %v323 = vadd.f32 %v254, %v322
      %v324 = vpop.f32.mrb[0].mxu0
      %325 = vmatprep.mubr.bf16.mxu0 0
      %326 = vmatmul.mubr.bf16.gmra.mrb[0].mxu0 %v267
      %v327 = vpop.f32.mrb[0].mxu0
      %v328 = vadd.f32 %v254, %v327
      %v329 = vpop.f32.mrb[0].mxu0
      %v330 = vpop.f32.mrb[0].mxu0
      %v331 = vadd.f32 %v254, %v330
      %v332 = vpop.f32.mrb[0].mxu0
      %333 = vdwg.mxu0
      %v334 = vpack.c.bf16 %v307, %v304
      %v335 = vpack.c.bf16 %v315, %v312
      %v336 = vpack.c.bf16 %v323, %v320
      %v337 = vpack.c.bf16 %v331, %v328
      %v342 = vunpack.c.l.b16 %v334
      %v343 = vunpack.c.h.b16 %v334
      %v344 = vunpack.c.l.b16 %v335
      %v345 = vunpack.c.h.b16 %v335
      %v346 = vunpack.c.l.b16 %v336
      %v347 = vunpack.c.h.b16 %v336
      %v348 = vunpack.c.l.b16 %v337
      %v349 = vunpack.c.h.b16 %v337
      %v350 = vpack.c.b16 %v342, %v342
      %v351 = vpack.c.b16 %v343, %v343
      %v352 = vpack.c.b16 %v344, %v344
      %v353 = vpack.c.b16 %v345, %v345
      %v354 = vpack.c.b16 %v346, %v346
      %v355 = vpack.c.b16 %v347, %v347
      %v356 = vpack.c.b16 %v348, %v348
      %v357 = vpack.c.b16 %v349, %v349
      %vm366 = vcmask 125952
      %367 = vst.msk [vmem:[%s228] sm:$0xf] %vm366, %v350
      %368 = vst.msk [vmem:[%s228 + $0x4] sm:$0xf] %vm366, %v351
      %369 = vst.msk [vmem:[%s228 + $0x8] sm:$0xf] %vm366, %v352
      %370 = vst.msk [vmem:[%s228 + $0xc] sm:$0xf] %vm366, %v353
      %371 = vst.msk [vmem:[%s228 + $0x10] sm:$0xf] %vm366, %v354
      %372 = vst.msk [vmem:[%s228 + $0x14] sm:$0xf] %vm366, %v355
      %373 = vst.msk [vmem:[%s228 + $0x18] sm:$0xf] %vm366, %v356
      %374 = vst.msk [vmem:[%s228 + $0x1c] sm:$0xf] %vm366, %v357
      %s375 = smul.u32 8, %s18
      %p376 = scmp.lt.s32.totalorder %s19, 1
      %s377 = scalar_select %p376, %s19, 1
      %p378 = scmp.lt.s32.totalorder %s375, 7
      %s379 = scalar_select %p378, %s375, 7
      %s380 = smul.addr %s377, 8
      %s381 = sadd.s32 %s379, %s380
      %s382 = smul.addr %s381, 4
      %s383 = scalar_lea.vmem %s3, %s382
      // Predicated region
      $region33: #{transformer_forward.13} parent=31 // pred_check
        %p384 = pneg %p124
      $region34: #{transformer_forward.13} parent=31 // pred_check_branch
        %386 = sbr.rel (%p384) target = $region36
      $region35: #{transformer_forward.13} parent=31 // pred_region
        %s387 = smul.u32 8, %s18
      $region36: #{transformer_forward.13} parent=31 // pred_fallthru
        _
    $region32: #{transformer_forward.13} parent=5 // pred_fallthru
      _
    %p388 = scmp.le.s32.totalorder 2, %s9
    // Predicated region
    $region37: #{transformer_forward.13} parent=5 // pred_check
      %p389 = pneg %p388
    $region38: #{transformer_forward.13} parent=5 // pred_check_branch
      %391 = sbr.rel (%p389) target = $region40
    $region39: #{transformer_forward.13} parent=5 // pred_region
      %s392 = ssub.s32 %s9, 2
      // Predicated region
      $region41: #{transformer_forward.13} parent=39 // pred_check
        %p393 = pneg %p130
      $region42: #{transformer_forward.13} parent=39 // pred_check_branch
        %395 = sbr.rel (%p393) target = $region44
      $region43: #{transformer_forward.13} parent=39 // pred_region
        %s396 = smul.u32 8, %s20
        %p397 = scmp.lt.s32.totalorder %s21, 1
        %s398 = scalar_select %p397, %s21, 1
        %p399 = scmp.lt.s32.totalorder %s396, 7
        %s400 = scalar_select %p399, %s396, 7
        %s401 = smul.addr %s398, 8
        %s402 = sadd.s32 %s400, %s401
        %s403 = smul.addr %s402, 4
        %s404 = scalar_lea.vmem %s3, %s403
      $region44: #{transformer_forward.13} parent=39 // pred_fallthru
        _
    $region40: #{transformer_forward.13} parent=5 // pred_fallthru
      _
  $region6: #{transformer_forward.13} parent=0 // loop_footer
    %s13 = sadd.s32 1, %s9
  $region7: #{transformer_forward.13} parent=0 // loop_footer_branch
    %8 = sbr.rel target = $region3
  $region8: #{transformer_forward.13} parent=0 // loop_exit
    _

// kernel: transformer_forward.15
$region0: #{transformer_forward.15}
  #allocation0 [shape = 'u32[]', space=smem, size = 0x4, offset = 0x4, fixed_abs, tag = 'smem constant byte address 0x4 - core index']
  #allocation1 [shape = 'u32[144,128]{1,0:T(1,128)}', space=vmem, size = 0x12000, scoped, tag = 'internal scratch']
  %s0 = inlined_call_operand.vmem [shape: f32[16,16], index: 0, kind: input, shape index: {}]
  %s1 = inlined_call_operand.vmem [shape: f32[1,16], index: 1, kind: input, shape index: {}]
  %s2 = inlined_call_operand.vmem [shape: f32[1,16], index: 2, kind: input, shape index: {}]
  %s3 = inlined_call_operand.vmem [shape: f32[16,64], index: 3, kind: input, shape index: {}]
  %s4 = inlined_call_operand.vmem [shape: f32[64,16], index: 4, kind: input, shape index: {}]
  %s5 = inlined_call_operand.vmem [shape: f32[16,16], index: 5, kind: output, shape index: {}]
  %s6 = sld [smem:[#allocation0]]
  $region30: #{transformer_forward.15} parent=0
    _
  %s8 = ssub.s32 1, %s6
  %s9 = scalar_select 0, %s8, %s6
  // Predicated region
  $region2: #{transformer_forward.15} parent=0 // pred_check
    _
  $region3: #{transformer_forward.15} parent=0 // pred_check_branch
    %11 = sbr.rel (0) target = $region5
  $region4: #{transformer_forward.15} parent=0 // pred_region
    _
  $region5: #{transformer_forward.15} parent=0 // pred_fallthru
    _
  // Predicated region
  $region6: #{transformer_forward.15} parent=0 // pred_check
    _
  $region7: #{transformer_forward.15} parent=0 // pred_check_branch
    %13 = sbr.rel (0) target = $region9
  $region8: #{transformer_forward.15} parent=0 // pred_region
    _
  $region9: #{transformer_forward.15} parent=0 // pred_fallthru
    _
  // Predicated region
  $region10: #{transformer_forward.15} parent=0 // pred_check
    _
  $region11: #{transformer_forward.15} parent=0 // pred_check_branch
    %15 = sbr.rel (0) target = $region13
  $region12: #{transformer_forward.15} parent=0 // pred_region
    _
  $region13: #{transformer_forward.15} parent=0 // pred_fallthru
    _
  // Predicated region
  $region14: #{transformer_forward.15} parent=0 // pred_check
    _
  $region15: #{transformer_forward.15} parent=0 // pred_check_branch
    %17 = sbr.rel (0) target = $region17
  $region16: #{transformer_forward.15} parent=0 // pred_region
    _
  $region17: #{transformer_forward.15} parent=0 // pred_fallthru
    _
  // Predicated region
  $region18: #{transformer_forward.15} parent=0 // pred_check
    _
  $region19: #{transformer_forward.15} parent=0 // pred_check_branch
    %19 = sbr.rel (0) target = $region21
  $region20: #{transformer_forward.15} parent=0 // pred_region
    _
  $region21: #{transformer_forward.15} parent=0 // pred_fallthru
    _
  %v21 = vld [vmem:[%s0] sm:$0xff]
  %v22 = vld [vmem:[%s0 + $0x8] sm:$0xff]
  %vm23 = vcmask 130048
  %v24 = vsel %vm23, %v21, 0.0
  %25 = vadd.xlane.f32.xlu0 %v24
  %v26 = vpop.xlane.xlu0 %25
  %v27 = vsel %vm23, %v22, 0.0
  %28 = vadd.xlane.f32.xlu0 %v27
  %v29 = vpop.xlane.xlu0 %28
  %v30 = vrcp.pop 16.0
  %v31 = vmul.f32 %v26, %v30
  %v32 = vmul.f32 %v29, %v30
  %v33 = vsub.f32 %v21, %v31
  %v34 = vsub.f32 %v22, %v32
  %v35 = vmul.f32 %v33, %v33
  %v36 = vmul.f32 %v34, %v34
  %v37 = vsel %vm23, %v35, 0.0
  %38 = vadd.xlane.f32.xlu0 %v37
  %v39 = vpop.xlane.xlu0 %38
  %v40 = vsel %vm23, %v36, 0.0
  %41 = vadd.xlane.f32.xlu0 %v40
  %v42 = vpop.xlane.xlu0 %41
  %v43 = vmul.f32 %v39, %v30
  %v44 = vmul.f32 %v42, %v30
  %v45 = vadd.f32 %v43, 1e-05
  %v46 = vadd.f32 %v44, 1e-05
  %v47 = vrsqrt.pop %v45
  %v48 = vrsqrt.pop %v46
  %v49 = vmul.f32 %v33, %v47
  %v50 = vmul.f32 %v34, %v48
  %v51 = vld [vmem:[%s1] sm:$0x1]
  %v53 = vlaneseq
  %v54 = vshrl.u32 %v53, 7
  %v55 = vsub.s32 0, %v54
  %v56 = vrot.slane %v51, %v55
  %v58 = vmul.f32 %v49, %v56
  %v59 = vmul.f32 %v50, %v56
  %v60 = vld [vmem:[%s2] sm:$0x1]
  %v62 = vlaneseq
  %v63 = vshrl.u32 %v62, 7
  %v64 = vsub.s32 0, %v63
  %v65 = vrot.slane %v60, %v64
  %v67 = vadd.f32 %v58, %v65
  %v68 = vadd.f32 %v59, %v65
  %v69 = vpack.c.bf16 %v68, %v67
  %v70 = vld [vmem:[%s3] sm:$0xff]
  %v71 = vld [vmem:[%s3 + $0x8] sm:$0xff]
  %v72 = vpack.c.bf16 %v71, %v70
  %v74 = vsel %vm23, %v69, 0
  %76 = vmatprep.subr.bf16.mxu0 0
  %77 = vmatpush1.bf16.msra.mxu0 %v72
  %78 = vmatprep.subr.bf16.mxu0 0
  %79 = vmatpush1.bf16.msra.mxu0 0
  %80 = vmatprep.subr.bf16.mxu0 0
  %81 = vmatpush1.bf16.msra.mxu0 0
  %82 = vmatprep.subr.bf16.mxu0 0
  %83 = vmatpush1.bf16.msra.mxu0 0
  %84 = vmatprep.subr.bf16.mxu0 0
  %85 = vmatpush1.bf16.msra.mxu0 0
  %86 = vmatprep.subr.bf16.mxu0 0
  %87 = vmatpush1.bf16.msra.mxu0 0
  %88 = vmatprep.subr.bf16.mxu0 0
  %89 = vmatpush1.bf16.msra.mxu0 0
  %90 = vmatprep.subr.bf16.mxu0 0
  %91 = vmatpush1.bf16.msra.mxu0 0
  %92 = vmatprep.subr.bf16.mxu0 0
  %93 = vmatpush1.bf16.msra.mxu0 0
  %94 = vmatprep.subr.bf16.mxu0 0
  %95 = vmatpush1.bf16.msra.mxu0 0
  %96 = vmatprep.subr.bf16.mxu0 0
  %97 = vmatpush1.bf16.msra.mxu0 0
  %98 = vmatprep.subr.bf16.mxu0 0
  %99 = vmatpush1.bf16.msra.mxu0 0
  %100 = vmatprep.subr.bf16.mxu0 0
  %101 = vmatpush1.bf16.msra.mxu0 0
  %102 = vmatprep.subr.bf16.mxu0 0
  %103 = vmatpush1.bf16.msra.mxu0 0
  %104 = vmatprep.subr.bf16.mxu0 0
  %105 = vmatpush1.bf16.msra.mxu0 0
  %106 = vmatprep.subr.bf16.mxu0 0
  %107 = vmatpush1.bf16.msra.mxu0 0
  %108 = vmatprep.mubr.bf16.mxu0 0
  %109 = vmatmul.mubr.bf16.gmra.mrb[0].mxu0 %v74
  %v110 = vpop.f32.mrb[0].mxu0
  %v111 = vadd.f32 0.0, %v110
  %v112 = vpop.f32.mrb[0].mxu0
  %v113 = vpop.f32.mrb[0].mxu0
  %v114 = vadd.f32 0.0, %v113
  %v115 = vpop.f32.mrb[0].mxu0
  %116 = vdwg.mxu0
  %v117 = vmul.f32 %v111, 0.5
  %v118 = vmul.f32 %v114, 0.5
  %v119 = vmul.f32 %v111, 0.70710677
  %v120 = vmul.f32 %v114, 0.70710677
  %vm121 = vcmp.ge.f32.partialorder %v119, 0.0
  %vm122 = vcmp.ge.f32.partialorder %v120, 0.0
  %v123 = vsel %vm121, 1.0, -1.0
  %v124 = vsel %vm122, 1.0, -1.0
  %v125 = vand.u32 2147483647, %v119
  %v126 = vand.u32 2147483647, %v120
  %v127 = vmul.f32 %v125, 0.3275911
  %v128 = vmul.f32 %v126, 0.3275911
  %v129 = vadd.f32 %v127, 1.0
  %v130 = vadd.f32 %v128, 1.0
  %v131 = vrcp.pop %v129
  %v132 = vmul.f32 1.0, %v131
  %v133 = vrcp.pop %v130
  %v134 = vmul.f32 1.0, %v133
  %v135 = vmul.f32 %v132, 1.0614054
  %v136 = vmul.f32 %v134, 1.0614054
  %v137 = vadd.f32 %v135, -1.4531521
  %v138 = vadd.f32 %v136, -1.4531521
  %v139 = vmul.f32 %v137, %v132
  %v140 = vmul.f32 %v138, %v134
  %v141 = vadd.f32 %v139, 1.4214138
  %v142 = vadd.f32 %v140, 1.4214138
  %v143 = vmul.f32 %v141, %v132
  %v144 = vmul.f32 %v142, %v134
  %v145 = vadd.f32 %v143, -0.28449672
  %v146 = vadd.f32 %v144, -0.28449672
  %v147 = vmul.f32 %v145, %v132
  %v148 = vmul.f32 %v146, %v134
  %v149 = vadd.f32 %v147, 0.2548296
  %v150 = vadd.f32 %v148, 0.2548296
  %v151 = vmul.f32 %v149, %v132
  %v152 = vmul.f32 %v150, %v134
  %v153 = vsub.f32 0.0, %v125
  %v154 = vsub.f32 0.0, %v126
  %v155 = vmul.f32 %v153, %v125
  %v156 = vmul.f32 %v154, %v126
  %v157 = vmul.f32 %v155, 1.442695
  %v158 = vpow.pop %v157
  %v159 = vmul.f32 %v156, 1.442695
  %v160 = vpow.pop %v159
  %v161 = vmul.f32 %v151, %v158
  %v162 = vmul.f32 %v152, %v160
  %v163 = vsub.f32 1.0, %v161
  %v164 = vsub.f32 1.0, %v162
  %v165 = vmul.f32 %v123, %v163
  %v166 = vmul.f32 %v124, %v164
  %v167 = vadd.f32 %v165, 1.0
  %v168 = vadd.f32 %v166, 1.0
  %v169 = vmul.f32 %v117, %v167
  %v170 = vmul.f32 %v118, %v168
  %v171 = vpack.c.bf16 %v170, %v169
  %v172 = vld [vmem:[%s4] sm:$0xff]
  %v173 = vld [vmem:[%s4 + $0x8] sm:$0xff]
  %v174 = vld [vmem:[%s4 + $0x10] sm:$0xff]
  %v175 = vld [vmem:[%s4 + $0x18] sm:$0xff]
  %v176 = vld [vmem:[%s4 + $0x20] sm:$0xff]
  %v177 = vld [vmem:[%s4 + $0x28] sm:$0xff]
  %v178 = vld [vmem:[%s4 + $0x30] sm:$0xff]
  %v179 = vld [vmem:[%s4 + $0x38] sm:$0xff]
  %v180 = vpack.c.bf16 %v173, %v172
  %v181 = vpack.c.bf16 %v175, %v174
  %v182 = vpack.c.bf16 %v177, %v176
  %v183 = vpack.c.bf16 %v179, %v178
  %vm184 = vcmask 523264
  %v186 = vsel %vm184, %v171, 0
  %188 = vmatprep.subr.bf16.mxu0 0
  %189 = vmatpush1.bf16.msra.mxu0 %v180
  %190 = vmatprep.subr.bf16.mxu0 0
  %191 = vmatpush1.bf16.msra.mxu0 %v181
  %192 = vmatprep.subr.bf16.mxu0 0
  %193 = vmatpush1.bf16.msra.mxu0 %v182
  %194 = vmatprep.subr.bf16.mxu0 0
  %195 = vmatpush1.bf16.msra.mxu0 %v183
  %196 = vmatprep.subr.bf16.mxu0 0
  %197 = vmatpush1.bf16.msra.mxu0 0
  %198 = vmatprep.subr.bf16.mxu0 0
  %199 = vmatpush1.bf16.msra.mxu0 0
  %200 = vmatprep.subr.bf16.mxu0 0
  %201 = vmatpush1.bf16.msra.mxu0 0
  %202 = vmatprep.subr.bf16.mxu0 0
  %203 = vmatpush1.bf16.msra.mxu0 0
  %204 = vmatprep.subr.bf16.mxu0 0
  %205 = vmatpush1.bf16.msra.mxu0 0
  %206 = vmatprep.subr.bf16.mxu0 0
  %207 = vmatpush1.bf16.msra.mxu0 0
  %208 = vmatprep.subr.bf16.mxu0 0
  %209 = vmatpush1.bf16.msra.mxu0 0
  %210 = vmatprep.subr.bf16.mxu0 0
  %211 = vmatpush1.bf16.msra.mxu0 0
  %212 = vmatprep.subr.bf16.mxu0 0
  %213 = vmatpush1.bf16.msra.mxu0 0
  %214 = vmatprep.subr.bf16.mxu0 0
  %215 = vmatpush1.bf16.msra.mxu0 0
  %216 = vmatprep.subr.bf16.mxu0 0
  %217 = vmatpush1.bf16.msra.mxu0 0
  %218 = vmatprep.subr.bf16.mxu0 0
  %219 = vmatpush1.bf16.msra.mxu0 0
  %220 = vmatprep.mubr.bf16.mxu0 0
  %221 = vmatmul.mubr.bf16.gmra.mrb[0].mxu0 %v186
  %v222 = vpop.f32.mrb[0].mxu0
  %v223 = vadd.f32 0.0, %v222
  %v224 = vpop.f32.mrb[0].mxu0
  %v225 = vpop.f32.mrb[0].mxu0
  %v226 = vadd.f32 0.0, %v225
  %v227 = vpop.f32.mrb[0].mxu0
  %228 = vdwg.mxu0
  %v229 = vadd.f32 %v21, %v223
  %v230 = vadd.f32 %v22, %v226
  %231 = vst.msk [vmem:[%s5] sm:$0xff] %vm23, %v229
  %232 = vst.msk [vmem:[%s5 + $0x8] sm:$0xff] %vm23, %v230
  // Predicated region
  $region22: #{transformer_forward.15} parent=0 // pred_check
    _
  $region23: #{transformer_forward.15} parent=0 // pred_check_branch
    %234 = sbr.rel (0) target = $region25
  $region24: #{transformer_forward.15} parent=0 // pred_region
    _
  $region25: #{transformer_forward.15} parent=0 // pred_fallthru
    _
  // Predicated region
  $region26: #{transformer_forward.15} parent=0 // pred_check
    _
  $region27: #{transformer_forward.15} parent=0 // pred_check_branch
    %236 = sbr.rel (0) target = $region29
  $region28: #{transformer_forward.15} parent=0 // pred_region
    _
  $region29: #{transformer_forward.15} parent=0 // pred_fallthru
    _

// kernel: transformer_forward.19
$region0: #{transformer_forward.19}
  #allocation0 [shape = 'u32[]', space=smem, size = 0x4, offset = 0x4, fixed_abs, tag = 'smem constant byte address 0x4 - core index']
  #allocation1 [shape = 'u32[144,128]{1,0:T(1,128)}', space=vmem, size = 0x12000, scoped, tag = 'internal scratch']
  %s0 = inlined_call_operand.vmem [shape: f32[16,16], index: 0, kind: input, shape index: {}]
  %s1 = inlined_call_operand.vmem [shape: f32[16,64], index: 1, kind: input, shape index: {}]
  %s2 = inlined_call_operand.vmem [shape: f32[1,64], index: 2, kind: input, shape index: {}]
  %s3 = inlined_call_operand.vmem [shape: f32[64,4], index: 3, kind: input, shape index: {}]
  %s4 = inlined_call_operand.vmem [shape: f32[1,4], index: 4, kind: input, shape index: {}]
  %s5 = inlined_call_operand.vmem [shape: f32[16,4], index: 5, kind: output, shape index: {}]
  %s6 = sld [smem:[#allocation0]]
  $region30: #{transformer_forward.19} parent=0
    _
  %s8 = ssub.s32 1, %s6
  %s9 = scalar_select 0, %s8, %s6
  // Predicated region
  $region2: #{transformer_forward.19} parent=0 // pred_check
    _
  $region3: #{transformer_forward.19} parent=0 // pred_check_branch
    %11 = sbr.rel (0) target = $region5
  $region4: #{transformer_forward.19} parent=0 // pred_region
    _
  $region5: #{transformer_forward.19} parent=0 // pred_fallthru
    _
  // Predicated region
  $region6: #{transformer_forward.19} parent=0 // pred_check
    _
  $region7: #{transformer_forward.19} parent=0 // pred_check_branch
    %13 = sbr.rel (0) target = $region9
  $region8: #{transformer_forward.19} parent=0 // pred_region
    _
  $region9: #{transformer_forward.19} parent=0 // pred_fallthru
    _
  // Predicated region
  $region10: #{transformer_forward.19} parent=0 // pred_check
    _
  $region11: #{transformer_forward.19} parent=0 // pred_check_branch
    %15 = sbr.rel (0) target = $region13
  $region12: #{transformer_forward.19} parent=0 // pred_region
    _
  $region13: #{transformer_forward.19} parent=0 // pred_fallthru
    _
  // Predicated region
  $region14: #{transformer_forward.19} parent=0 // pred_check
    _
  $region15: #{transformer_forward.19} parent=0 // pred_check_branch
    %17 = sbr.rel (0) target = $region17
  $region16: #{transformer_forward.19} parent=0 // pred_region
    _
  $region17: #{transformer_forward.19} parent=0 // pred_fallthru
    _
  // Predicated region
  $region18: #{transformer_forward.19} parent=0 // pred_check
    _
  $region19: #{transformer_forward.19} parent=0 // pred_check_branch
    %19 = sbr.rel (0) target = $region21
  $region20: #{transformer_forward.19} parent=0 // pred_region
    _
  $region21: #{transformer_forward.19} parent=0 // pred_fallthru
    _
  %v21 = vld [vmem:[%s0] sm:$0xff]
  %v22 = vld [vmem:[%s0 + $0x8] sm:$0xff]
  %v23 = vpack.c.bf16 %v22, %v21
  %v24 = vld [vmem:[%s1] sm:$0xff]
  %v25 = vld [vmem:[%s1 + $0x8] sm:$0xff]
  %v26 = vpack.c.bf16 %v25, %v24
  %v27 = vld [vmem:[%s2] sm:$0x1]
  %v29 = vlaneseq
  %v30 = vshrl.u32 %v29, 7
  %v31 = vsub.s32 0, %v30
  %v32 = vrot.slane %v27, %v31
  %vm34 = vcmask 130048
  %v36 = vsel %vm34, %v23, 0
  %38 = vmatprep.subr.bf16.mxu0 0
  %39 = vmatpush1.bf16.msra.mxu0 %v26
  %40 = vmatprep.subr.bf16.mxu0 0
  %41 = vmatpush1.bf16.msra.mxu0 0
  %42 = vmatprep.subr.bf16.mxu0 0
  %43 = vmatpush1.bf16.msra.mxu0 0
  %44 = vmatprep.subr.bf16.mxu0 0
  %45 = vmatpush1.bf16.msra.mxu0 0
  %46 = vmatprep.subr.bf16.mxu0 0
  %47 = vmatpush1.bf16.msra.mxu0 0
  %48 = vmatprep.subr.bf16.mxu0 0
  %49 = vmatpush1.bf16.msra.mxu0 0
  %50 = vmatprep.subr.bf16.mxu0 0
  %51 = vmatpush1.bf16.msra.mxu0 0
  %52 = vmatprep.subr.bf16.mxu0 0
  %53 = vmatpush1.bf16.msra.mxu0 0
  %54 = vmatprep.subr.bf16.mxu0 0
  %55 = vmatpush1.bf16.msra.mxu0 0
  %56 = vmatprep.subr.bf16.mxu0 0
  %57 = vmatpush1.bf16.msra.mxu0 0
  %58 = vmatprep.subr.bf16.mxu0 0
  %59 = vmatpush1.bf16.msra.mxu0 0
  %60 = vmatprep.subr.bf16.mxu0 0
  %61 = vmatpush1.bf16.msra.mxu0 0
  %62 = vmatprep.subr.bf16.mxu0 0
  %63 = vmatpush1.bf16.msra.mxu0 0
  %64 = vmatprep.subr.bf16.mxu0 0
  %65 = vmatpush1.bf16.msra.mxu0 0
  %66 = vmatprep.subr.bf16.mxu0 0
  %67 = vmatpush1.bf16.msra.mxu0 0
  %68 = vmatprep.subr.bf16.mxu0 0
  %69 = vmatpush1.bf16.msra.mxu0 0
  %70 = vmatprep.mubr.bf16.mxu0 0
  %71 = vmatmul.mubr.bf16.gmra.mrb[0].mxu0 %v36
  %v72 = vpop.f32.mrb[0].mxu0
  %v73 = vadd.f32 %v32, %v72
  %v74 = vpop.f32.mrb[0].mxu0
  %v75 = vpop.f32.mrb[0].mxu0
  %v76 = vadd.f32 %v32, %v75
  %v77 = vpop.f32.mrb[0].mxu0
  %78 = vdwg.mxu0
  %v79 = vmul.f32 %v73, 0.5
  %v80 = vmul.f32 %v76, 0.5
  %v81 = vmul.f32 %v73, 0.70710677
  %v82 = vmul.f32 %v76, 0.70710677
  %vm83 = vcmp.ge.f32.partialorder %v81, 0.0
  %vm84 = vcmp.ge.f32.partialorder %v82, 0.0
  %v85 = vsel %vm83, 1.0, -1.0
  %v86 = vsel %vm84, 1.0, -1.0
  %v87 = vand.u32 2147483647, %v81
  %v88 = vand.u32 2147483647, %v82
  %v89 = vmul.f32 %v87, 0.3275911
  %v90 = vmul.f32 %v88, 0.3275911
  %v91 = vadd.f32 %v89, 1.0
  %v92 = vadd.f32 %v90, 1.0
  %v93 = vrcp.pop %v91
  %v94 = vmul.f32 1.0, %v93
  %v95 = vrcp.pop %v92
  %v96 = vmul.f32 1.0, %v95
  %v97 = vmul.f32 %v94, 1.0614054
  %v98 = vmul.f32 %v96, 1.0614054
  %v99 = vadd.f32 %v97, -1.4531521
  %v100 = vadd.f32 %v98, -1.4531521
  %v101 = vmul.f32 %v99, %v94
  %v102 = vmul.f32 %v100, %v96
  %v103 = vadd.f32 %v101, 1.4214138
  %v104 = vadd.f32 %v102, 1.4214138
  %v105 = vmul.f32 %v103, %v94
  %v106 = vmul.f32 %v104, %v96
  %v107 = vadd.f32 %v105, -0.28449672
  %v108 = vadd.f32 %v106, -0.28449672
  %v109 = vmul.f32 %v107, %v94
  %v110 = vmul.f32 %v108, %v96
  %v111 = vadd.f32 %v109, 0.2548296
  %v112 = vadd.f32 %v110, 0.2548296
  %v113 = vmul.f32 %v111, %v94
  %v114 = vmul.f32 %v112, %v96
  %v115 = vsub.f32 0.0, %v87
  %v116 = vsub.f32 0.0, %v88
  %v117 = vmul.f32 %v115, %v87
  %v118 = vmul.f32 %v116, %v88
  %v119 = vmul.f32 %v117, 1.442695
  %v120 = vpow.pop %v119
  %v121 = vmul.f32 %v118, 1.442695
  %v122 = vpow.pop %v121
  %v123 = vmul.f32 %v113, %v120
  %v124 = vmul.f32 %v114, %v122
  %v125 = vsub.f32 1.0, %v123
  %v126 = vsub.f32 1.0, %v124
  %v127 = vmul.f32 %v85, %v125
  %v128 = vmul.f32 %v86, %v126
  %v129 = vadd.f32 %v127, 1.0
  %v130 = vadd.f32 %v128, 1.0
  %v131 = vmul.f32 %v79, %v129
  %v132 = vmul.f32 %v80, %v130
  %v133 = vpack.c.bf16 %v132, %v131
  %v134 = vld [vmem:[%s3] sm:$0xff]
  %v135 = vld [vmem:[%s3 + $0x8] sm:$0xff]
  %v136 = vld [vmem:[%s3 + $0x10] sm:$0xff]
  %v137 = vld [vmem:[%s3 + $0x18] sm:$0xff]
  %v138 = vld [vmem:[%s3 + $0x20] sm:$0xff]
  %v139 = vld [vmem:[%s3 + $0x28] sm:$0xff]
  %v140 = vld [vmem:[%s3 + $0x30] sm:$0xff]
  %v141 = vld [vmem:[%s3 + $0x38] sm:$0xff]
  %v142 = vpack.c.bf16 %v135, %v134
  %v143 = vpack.c.bf16 %v137, %v136
  %v144 = vpack.c.bf16 %v139, %v138
  %v145 = vpack.c.bf16 %v141, %v140
  %v146 = vld [vmem:[%s4] sm:$0x1]
  %v148 = vlaneseq
  %v149 = vshrl.u32 %v148, 7
  %v150 = vsub.s32 0, %v149
  %v151 = vrot.slane %v146, %v150
  %vm153 = vcmask 523264
  %v155 = vsel %vm153, %v133, 0
  %157 = vmatprep.subr.bf16.mxu0 0
  %158 = vmatpush1.bf16.msra.mxu0 %v142
  %159 = vmatprep.subr.bf16.mxu0 0
  %160 = vmatpush1.bf16.msra.mxu0 %v143
  %161 = vmatprep.subr.bf16.mxu0 0
  %162 = vmatpush1.bf16.msra.mxu0 %v144
  %163 = vmatprep.subr.bf16.mxu0 0
  %164 = vmatpush1.bf16.msra.mxu0 %v145
  %165 = vmatprep.subr.bf16.mxu0 0
  %166 = vmatpush1.bf16.msra.mxu0 0
  %167 = vmatprep.subr.bf16.mxu0 0
  %168 = vmatpush1.bf16.msra.mxu0 0
  %169 = vmatprep.subr.bf16.mxu0 0
  %170 = vmatpush1.bf16.msra.mxu0 0
  %171 = vmatprep.subr.bf16.mxu0 0
  %172 = vmatpush1.bf16.msra.mxu0 0
  %173 = vmatprep.subr.bf16.mxu0 0
  %174 = vmatpush1.bf16.msra.mxu0 0
  %175 = vmatprep.subr.bf16.mxu0 0
  %176 = vmatpush1.bf16.msra.mxu0 0
  %177 = vmatprep.subr.bf16.mxu0 0
  %178 = vmatpush1.bf16.msra.mxu0 0
  %179 = vmatprep.subr.bf16.mxu0 0
  %180 = vmatpush1.bf16.msra.mxu0 0
  %181 = vmatprep.subr.bf16.mxu0 0
  %182 = vmatpush1.bf16.msra.mxu0 0
  %183 = vmatprep.subr.bf16.mxu0 0
  %184 = vmatpush1.bf16.msra.mxu0 0
  %185 = vmatprep.subr.bf16.mxu0 0
  %186 = vmatpush1.bf16.msra.mxu0 0
  %187 = vmatprep.subr.bf16.mxu0 0
  %188 = vmatpush1.bf16.msra.mxu0 0
  %189 = vmatprep.mubr.bf16.mxu0 0
  %190 = vmatmul.mubr.bf16.gmra.mrb[0].mxu0 %v155
  %v191 = vpop.f32.mrb[0].mxu0
  %v192 = vadd.f32 %v151, %v191
  %v193 = vpop.f32.mrb[0].mxu0
  %v194 = vpop.f32.mrb[0].mxu0
  %v195 = vadd.f32 %v151, %v194
  %v196 = vpop.f32.mrb[0].mxu0
  %197 = vdwg.mxu0
  %vm198 = vcmask 31744
  %199 = vst.msk [vmem:[%s5] sm:$0xff] %vm198, %v192
  %200 = vst.msk [vmem:[%s5 + $0x8] sm:$0xff] %vm198, %v195
  // Predicated region
  $region22: #{transformer_forward.19} parent=0 // pred_check
    _
  $region23: #{transformer_forward.19} parent=0 // pred_check_branch
    %202 = sbr.rel (0) target = $region25
  $region24: #{transformer_forward.19} parent=0 // pred_region
    _
  $region25: #{transformer_forward.19} parent=0 // pred_fallthru
    _
  // Predicated region
  $region26: #{transformer_forward.19} parent=0 // pred_check
    _
  $region27: #{transformer_forward.19} parent=0 // pred_check_branch
    %204 = sbr.rel (0) target = $region29
  $region28: #{transformer_forward.19} parent=0 // pred_region
    _
  $region29: #{transformer_forward.19} parent=0 // pred_fallthru
    _

// kernel: transformer_forward.14
$region0: #{transformer_forward.14}
  #allocation0 [shape = 'u32[]', space=smem, size = 0x4, offset = 0x4, fixed_abs, tag = 'smem constant byte address 0x4 - core index']
  #allocation1 [shape = 'u32[144,128]{1,0:T(1,128)}', space=vmem, size = 0x12000, scoped, tag = 'internal scratch']
  #allocation2 [shape = 'f32[8,32]{1,0:T(8,128)}', space=vmem, size = 0x1000, scoped, tag = 'scratch operand']
  #allocation3 [shape = 'f32[2,8,1]{2,1,0:T(8,128)}', space=vmem, size = 0x2000, scoped, tag = 'scratch operand']
  #allocation4 [shape = 'f32[2,8,1]{2,1,0:T(8,128)}', space=vmem, size = 0x2000, scoped, tag = 'scratch operand']
  #allocation5 [shape = 'f32[8,16]{1,0:T(8,128)}', space=vmem, size = 0x1000, scoped, tag = 'scratch operand']
  %s0 = inlined_call_operand.vmem [shape: f32[2,8,16], index: 0, kind: input, shape index: {}, may-alias: {0,2}]
  %s1 = inlined_call_operand.vmem [shape: f32[8,16], index: 1, kind: input, shape index: {}, may-alias: {1,3}]
  %s2 = inlined_call_operand.vmem [shape: f32[2,8,16], index: 2, kind: input, shape index: {}, may-alias: {0,2}]
  %s3 = inlined_call_operand.vmem [shape: f32[8,16], index: 3, kind: input, shape index: {}, may-alias: {1,3}]
  %s4 = inlined_call_operand.vmem [shape: bf16[2,8,8,16], index: 4, kind: input, shape index: {}]
  %s5 = inlined_call_operand.vmem [shape: f32[16,32], index: 5, kind: input, shape index: {}]
  %s6 = inlined_call_operand.vmem [shape: f32[16,32], index: 6, kind: input, shape index: {}]
  %s7 = inlined_call_operand.vmem [shape: f32[1,32], index: 7, kind: input, shape index: {}]
  %s8 = inlined_call_operand.vmem [shape: f32[16,16], index: 8, kind: input, shape index: {}]
  %s9 = inlined_call_operand.vmem [shape: f32[1,16], index: 9, kind: input, shape index: {}]
  %s10 = inlined_call_operand.vmem [shape: f32[2,8,16], index: 10, kind: output, shape index: {}]
  %s11 = sld [smem:[#allocation0]]
  $region85: #{transformer_forward.14} parent=0
    _
  %s13 = ssub.s32 1, %s11
  %s14 = scalar_select 0, %s13, %s11
  loop: start=0, step=1, limit=4
  $region2: #{transformer_forward.14} parent=0 // loop_pre_header
    _
  $region3: #{transformer_forward.14} parent=0 // loop_header
    %s16 = sphi 0, %s20
    %p17 = scmp.ge.s32.totalorder %s16, 4
    %s23 = sphi 0, %s42
    %s24 = sphi 0, %s38
    %s25 = sphi 0, %s34
    %s26 = sphi 0, %s23
    %s27 = sphi 0, %s24
    %s28 = sphi 0, %s25
    %s29 = sphi 0, %s26
    %s30 = sphi 0, %s27
    %s31 = sphi 0, %s28
    %s47 = sphi 0, %s49
    %s50 = sphi 0, %s47
    %s51 = sphi 0, %s50
    %s67 = sphi 0, %s51
    %s73 = sphi 0, %s75
    %s76 = sphi 0, %s73
    %s77 = sphi 0, %s76
    %s93 = sphi 0, %s77
    %s105 = sphi 0, %s107
    %s108 = sphi 0, %s105
    %s109 = sphi 0, %s108
    %s125 = sphi 0, %s109
    %s135 = sphi 0, %s137
    %s138 = sphi 0, %s135
    %s139 = sphi 0, %s138
    %s155 = sphi 0, %s139
    %s167 = sphi 0, %s169
    %s170 = sphi 0, %s167
    %s171 = sphi 0, %s170
    %s187 = sphi 0, %s171
    %s191 = sphi 0, %s191
    %s193 = sphi 0, %s191
    %s194 = sphi 0, %s193
    %s208 = sphi 0, %s194
    %s212 = sphi 0, %s212
    %s214 = sphi 0, %s212
    %s215 = sphi 0, %s214
    %s229 = sphi 0, %s215
    %s233 = sphi 0, %s233
    %s235 = sphi 0, %s233
    %s236 = sphi 0, %s235
    %s250 = sphi 0, %s236
    %s254 = sphi 0, %s254
    %s256 = sphi 0, %s254
    %s257 = sphi 0, %s256
    %s271 = sphi 0, %s257
    %s275 = sphi 0, %s275
    %s277 = sphi 0, %s275
    %s278 = sphi 0, %s277
    %s292 = sphi 0, %s278
    %s300 = sphi 0, %s302
    %s303 = sphi 0, %s300
    %s304 = sphi 0, %s303
    %s320 = sphi 0, %s304
  $region4: #{transformer_forward.14} parent=0 // loop_header_branch
    %19 = sbr.rel (%p17) target = $region8
  $region5: #{transformer_forward.14} parent=0 // loop_body
    %s21 = ssub.s32 %s16, 1
    %s22 = ssub.s32 %s16, 2
    %s32 = sadd.s32 1, %s25
    %p33 = scmp.ge.s32.totalorder %s32, 1
    %s34 = scalar_select %p33, 0, %s32
    %s35 = sadd.s32 1, %s24
    %s36 = scalar_select %p33, %s35, %s24
    %p37 = scmp.ge.s32.totalorder %s36, 1
    %s38 = scalar_select %p37, 0, %s36
    %s39 = sadd.s32 1, %s23
    %s40 = scalar_select %p37, %s39, %s23
    %p41 = scmp.ge.s32.totalorder %s40, 2
    %s42 = scalar_select %p41, 0, %s40
    %s43 = ssub.s32 %s23, %s42
    %s44 = ssub.s32 %s24, %s38
    %s45 = sor.u32 %s43, %s44
    %p46 = scmp.eq.s32.totalorder %s45, 0
    %s48 = sadd.s32 %s47, 1
    %s49 = scalar_select %p46, %s47, %s48
    %p52 = pneg %p46
    %p53 = scmp.eq.s32.totalorder %s16, 1
    %p54 = por %p52, %p53
    %p55 = scmp.ne.s32.totalorder %s47, %s50
    %p56 = scmp.eq.s32.totalorder %s16, 0
    %p57 = por %p55, %p56
    %p58 = scmp.ne.s32.totalorder %s47, %s50
    %p59 = scmp.eq.s32.totalorder %s21, 1
    %p60 = por %p58, %p59
    %p61 = scmp.ne.s32.totalorder %s50, %s51
    %p62 = scmp.eq.s32.totalorder %s21, 0
    %p63 = por %p61, %p62
    %p64 = scmp.ne.s32.totalorder %s50, %s51
    %p65 = scmp.eq.s32.totalorder %s22, 1
    %p66 = por %p64, %p65
    %p68 = scmp.ne.s32.totalorder %s51, %s67
    %p69 = scmp.eq.s32.totalorder %s22, 0
    %p70 = por %p68, %p69
    %s71 = ssub.s32 %s24, %s38
    %p72 = scmp.eq.s32.totalorder %s71, 0
    %s74 = sadd.s32 %s73, 1
    %s75 = scalar_select %p72, %s73, %s74
    %p78 = pneg %p72
    %p79 = scmp.eq.s32.totalorder %s16, 1
    %p80 = por %p78, %p79
    %p81 = scmp.ne.s32.totalorder %s73, %s76
    %p82 = scmp.eq.s32.totalorder %s16, 0
    %p83 = por %p81, %p82
    %p84 = scmp.ne.s32.totalorder %s73, %s76
    %p85 = scmp.eq.s32.totalorder %s21, 1
    %p86 = por %p84, %p85
    %p87 = scmp.ne.s32.totalorder %s76, %s77
    %p88 = scmp.eq.s32.totalorder %s21, 0
    %p89 = por %p87, %p88
    %p90 = scmp.ne.s32.totalorder %s76, %s77
    %p91 = scmp.eq.s32.totalorder %s22, 1
    %p92 = por %p90, %p91
    %p94 = scmp.ne.s32.totalorder %s77, %s93
    %p95 = scmp.eq.s32.totalorder %s22, 0
    %p96 = por %p94, %p95
    %p97 = scmp.lt.s32.totalorder %s25, %s24
    %s98 = scalar_select %p97, %s25, %s24
    %p99 = scmp.lt.s32.totalorder %s34, %s38
    %s100 = scalar_select %p99, %s34, %s38
    %s101 = ssub.s32 %s23, %s42
    %s102 = ssub.s32 %s98, %s100
    %s103 = sor.u32 %s101, %s102
    %p104 = scmp.eq.s32.totalorder %s103, 0
    %s106 = sadd.s32 %s105, 1
    %s107 = scalar_select %p104, %s105, %s106
    %p110 = pneg %p104
    %p111 = scmp.eq.s32.totalorder %s16, 1
    %p112 = por %p110, %p111
    %p113 = scmp.ne.s32.totalorder %s105, %s108
    %p114 = scmp.eq.s32.totalorder %s16, 0
    %p115 = por %p113, %p114
    %p116 = scmp.ne.s32.totalorder %s105, %s108
    %p117 = scmp.eq.s32.totalorder %s21, 1
    %p118 = por %p116, %p117
    %p119 = scmp.ne.s32.totalorder %s108, %s109
    %p120 = scmp.eq.s32.totalorder %s21, 0
    %p121 = por %p119, %p120
    %p122 = scmp.ne.s32.totalorder %s108, %s109
    %p123 = scmp.eq.s32.totalorder %s22, 1
    %p124 = por %p122, %p123
    %p126 = scmp.ne.s32.totalorder %s109, %s125
    %p127 = scmp.eq.s32.totalorder %s22, 0
    %p128 = por %p126, %p127
    %p129 = scmp.lt.s32.totalorder %s25, %s24
    %s130 = scalar_select %p129, %s25, %s24
    %p131 = scmp.lt.s32.totalorder %s34, %s38
    %s132 = scalar_select %p131, %s34, %s38
    %s133 = ssub.s32 %s130, %s132
    %p134 = scmp.eq.s32.totalorder %s133, 0
    %s136 = sadd.s32 %s135, 1
    %s137 = scalar_select %p134, %s135, %s136
    %p140 = pneg %p134
    %p141 = scmp.eq.s32.totalorder %s16, 1
    %p142 = por %p140, %p141
    %p143 = scmp.ne.s32.totalorder %s135, %s138
    %p144 = scmp.eq.s32.totalorder %s16, 0
    %p145 = por %p143, %p144
    %p146 = scmp.ne.s32.totalorder %s135, %s138
    %p147 = scmp.eq.s32.totalorder %s21, 1
    %p148 = por %p146, %p147
    %p149 = scmp.ne.s32.totalorder %s138, %s139
    %p150 = scmp.eq.s32.totalorder %s21, 0
    %p151 = por %p149, %p150
    %p152 = scmp.ne.s32.totalorder %s138, %s139
    %p153 = scmp.eq.s32.totalorder %s22, 1
    %p154 = por %p152, %p153
    %p156 = scmp.ne.s32.totalorder %s139, %s155
    %p157 = scmp.eq.s32.totalorder %s22, 0
    %p158 = por %p156, %p157
    %p159 = scmp.lt.s32.totalorder %s25, %s24
    %s160 = scalar_select %p159, %s25, %s24
    %p161 = scmp.lt.s32.totalorder %s34, %s38
    %s162 = scalar_select %p161, %s34, %s38
    %s163 = ssub.s32 %s24, %s38
    %s164 = ssub.s32 %s160, %s162
    %s165 = sor.u32 %s163, %s164
    %p166 = scmp.eq.s32.totalorder %s165, 0
    %s168 = sadd.s32 %s167, 1
    %s169 = scalar_select %p166, %s167, %s168
    %p172 = pneg %p166
    %p173 = scmp.eq.s32.totalorder %s16, 1
    %p174 = por %p172, %p173
    %p175 = scmp.ne.s32.totalorder %s167, %s170
    %p176 = scmp.eq.s32.totalorder %s16, 0
    %p177 = por %p175, %p176
    %p178 = scmp.ne.s32.totalorder %s167, %s170
    %p179 = scmp.eq.s32.totalorder %s21, 1
    %p180 = por %p178, %p179
    %p181 = scmp.ne.s32.totalorder %s170, %s171
    %p182 = scmp.eq.s32.totalorder %s21, 0
    %p183 = por %p181, %p182
    %p184 = scmp.ne.s32.totalorder %s170, %s171
    %p185 = scmp.eq.s32.totalorder %s22, 1
    %p186 = por %p184, %p185
    %p188 = scmp.ne.s32.totalorder %s171, %s187
    %p189 = scmp.eq.s32.totalorder %s22, 0
    %p190 = por %p188, %p189
    %s192 = sadd.s32 %s191, 1
    %p195 = scmp.eq.s32.totalorder %s16, 1
    %p196 = scmp.ne.s32.totalorder %s191, %s193
    %p197 = scmp.eq.s32.totalorder %s16, 0
    %p198 = por %p196, %p197
    %p199 = scmp.ne.s32.totalorder %s191, %s193
    %p200 = scmp.eq.s32.totalorder %s21, 1
    %p201 = por %p199, %p200
    %p202 = scmp.ne.s32.totalorder %s193, %s194
    %p203 = scmp.eq.s32.totalorder %s21, 0
    %p204 = por %p202, %p203
    %p205 = scmp.ne.s32.totalorder %s193, %s194
    %p206 = scmp.eq.s32.totalorder %s22, 1
    %p207 = por %p205, %p206
    %p209 = scmp.ne.s32.totalorder %s194, %s208
    %p210 = scmp.eq.s32.totalorder %s22, 0
    %p211 = por %p209, %p210
    %s213 = sadd.s32 %s212, 1
    %p216 = scmp.eq.s32.totalorder %s16, 1
    %p217 = scmp.ne.s32.totalorder %s212, %s214
    %p218 = scmp.eq.s32.totalorder %s16, 0
    %p219 = por %p217, %p218
    %p220 = scmp.ne.s32.totalorder %s212, %s214
    %p221 = scmp.eq.s32.totalorder %s21, 1
    %p222 = por %p220, %p221
    %p223 = scmp.ne.s32.totalorder %s214, %s215
    %p224 = scmp.eq.s32.totalorder %s21, 0
    %p225 = por %p223, %p224
    %p226 = scmp.ne.s32.totalorder %s214, %s215
    %p227 = scmp.eq.s32.totalorder %s22, 1
    %p228 = por %p226, %p227
    %p230 = scmp.ne.s32.totalorder %s215, %s229
    %p231 = scmp.eq.s32.totalorder %s22, 0
    %p232 = por %p230, %p231
    %s234 = sadd.s32 %s233, 1
    %p237 = scmp.eq.s32.totalorder %s16, 1
    %p238 = scmp.ne.s32.totalorder %s233, %s235
    %p239 = scmp.eq.s32.totalorder %s16, 0
    %p240 = por %p238, %p239
    %p241 = scmp.ne.s32.totalorder %s233, %s235
    %p242 = scmp.eq.s32.totalorder %s21, 1
    %p243 = por %p241, %p242
    %p244 = scmp.ne.s32.totalorder %s235, %s236
    %p245 = scmp.eq.s32.totalorder %s21, 0
    %p246 = por %p244, %p245
    %p247 = scmp.ne.s32.totalorder %s235, %s236
    %p248 = scmp.eq.s32.totalorder %s22, 1
    %p249 = por %p247, %p248
    %p251 = scmp.ne.s32.totalorder %s236, %s250
    %p252 = scmp.eq.s32.totalorder %s22, 0
    %p253 = por %p251, %p252
    %s255 = sadd.s32 %s254, 1
    %p258 = scmp.eq.s32.totalorder %s16, 1
    %p259 = scmp.ne.s32.totalorder %s254, %s256
    %p260 = scmp.eq.s32.totalorder %s16, 0
    %p261 = por %p259, %p260
    %p262 = scmp.ne.s32.totalorder %s254, %s256
    %p263 = scmp.eq.s32.totalorder %s21, 1
    %p264 = por %p262, %p263
    %p265 = scmp.ne.s32.totalorder %s256, %s257
    %p266 = scmp.eq.s32.totalorder %s21, 0
    %p267 = por %p265, %p266
    %p268 = scmp.ne.s32.totalorder %s256, %s257
    %p269 = scmp.eq.s32.totalorder %s22, 1
    %p270 = por %p268, %p269
    %p272 = scmp.ne.s32.totalorder %s257, %s271
    %p273 = scmp.eq.s32.totalorder %s22, 0
    %p274 = por %p272, %p273
    %s276 = sadd.s32 %s275, 1
    %p279 = scmp.eq.s32.totalorder %s16, 1
    %p280 = scmp.ne.s32.totalorder %s275, %s277
    %p281 = scmp.eq.s32.totalorder %s16, 0
    %p282 = por %p280, %p281
    %p283 = scmp.ne.s32.totalorder %s275, %s277
    %p284 = scmp.eq.s32.totalorder %s21, 1
    %p285 = por %p283, %p284
    %p286 = scmp.ne.s32.totalorder %s277, %s278
    %p287 = scmp.eq.s32.totalorder %s21, 0
    %p288 = por %p286, %p287
    %p289 = scmp.ne.s32.totalorder %s277, %s278
    %p290 = scmp.eq.s32.totalorder %s22, 1
    %p291 = por %p289, %p290
    %p293 = scmp.ne.s32.totalorder %s278, %s292
    %p294 = scmp.eq.s32.totalorder %s22, 0
    %p295 = por %p293, %p294
    %s296 = ssub.s32 %s23, %s42
    %s297 = ssub.s32 %s24, %s38
    %s298 = sor.u32 %s296, %s297
    %p299 = scmp.eq.s32.totalorder %s298, 0
    %s301 = sadd.s32 %s300, 1
    %s302 = scalar_select %p299, %s300, %s301
    %p305 = pneg %p299
    %p306 = scmp.eq.s32.totalorder %s16, 1
    %p307 = por %p305, %p306
    %p308 = scmp.ne.s32.totalorder %s300, %s303
    %p309 = scmp.eq.s32.totalorder %s16, 0
    %p310 = por %p308, %p309
    %p311 = scmp.ne.s32.totalorder %s300, %s303
    %p312 = scmp.eq.s32.totalorder %s21, 1
    %p313 = por %p311, %p312
    %p314 = scmp.ne.s32.totalorder %s303, %s304
    %p315 = scmp.eq.s32.totalorder %s21, 0
    %p316 = por %p314, %p315
    %p317 = scmp.ne.s32.totalorder %s303, %s304
    %p318 = scmp.eq.s32.totalorder %s22, 1
    %p319 = por %p317, %p318
    %p321 = scmp.ne.s32.totalorder %s304, %s320
    %p322 = scmp.eq.s32.totalorder %s22, 0
    %p323 = por %p321, %p322
    %p324 = scmp.le.s32.totalorder 1, %s16
    %p325 = scmp.lt.s32.totalorder %s16, 3
    %p326 = pnand %p324, %p325
    %p327 = pneg %p326
    // Predicated region
    $region9: #{transformer_forward.14} parent=5 // pred_check
      _
    $region10: #{transformer_forward.14} parent=5 // pred_check_branch
      %329 = sbr.rel (%p326) target = $region12
    $region11: #{transformer_forward.14} parent=5 // pred_region
      %s330 = ssub.s32 %s16, 1
      // Predicated region
      $region13: #{transformer_forward.14} parent=11 // pred_check
        %p331 = pneg %p89
      $region14: #{transformer_forward.14} parent=11 // pred_check_branch
        %333 = sbr.rel (%p331) target = $region16
      $region15: #{transformer_forward.14} parent=11 // pred_region
        %p334 = scmp.lt.s32.totalorder %s27, 0
        %s335 = scalar_select %p334, %s27, 0
        %s336 = smul.addr %s335, 8
        %s337 = scalar_lea.vmem %s1, %s336
      $region16: #{transformer_forward.14} parent=11 // pred_fallthru
        _
      // Predicated region
      $region17: #{transformer_forward.14} parent=11 // pred_check
        %p338 = pneg %p151
      $region18: #{transformer_forward.14} parent=11 // pred_check_branch
        %340 = sbr.rel (%p338) target = $region20
      $region19: #{transformer_forward.14} parent=11 // pred_region
        %p341 = scmp.lt.s32.totalorder %s28, %s27
        %s342 = scalar_select %p341, %s28, %s27
        %p343 = scmp.lt.s32.totalorder %s342, 0
        %s344 = scalar_select %p343, %s342, 0
        %s345 = smul.addr %s344, 8
        %s346 = scalar_lea.vmem %s3, %s345
        %p347 = scmp.lt.s32.totalorder %s28, %s27
        %s348 = scalar_select %p347, %s28, %s27
      $region20: #{transformer_forward.14} parent=11 // pred_fallthru
        _
      // Predicated region
      $region21: #{transformer_forward.14} parent=11 // pred_check
        %p349 = pneg %p183
      $region22: #{transformer_forward.14} parent=11 // pred_check_branch
        %351 = sbr.rel (%p349) target = $region24
      $region23: #{transformer_forward.14} parent=11 // pred_region
        %p352 = scmp.lt.s32.totalorder %s28, %s27
        %s353 = scalar_select %p352, %s28, %s27
        %s354 = smul.u32 8, %s27
        %p355 = scmp.lt.s32.totalorder %s354, 7
        %s356 = scalar_select %p355, %s354, 7
        %p357 = scmp.lt.s32.totalorder %s353, 0
        %s358 = scalar_select %p357, %s353, 0
        %s359 = sadd.s32 %s358, %s356
        %s360 = smul.addr %s359, 4
        %s361 = scalar_lea.vmem %s4, %s360
        %p362 = scmp.lt.s32.totalorder %s28, %s27
        %s363 = scalar_select %p362, %s28, %s27
        %s364 = smul.u32 8, %s27
      $region24: #{transformer_forward.14} parent=11 // pred_fallthru
        _
      // Predicated region
      $region25: #{transformer_forward.14} parent=11 // pred_check
        %p365 = pneg %p204
      $region26: #{transformer_forward.14} parent=11 // pred_check_branch
        %367 = sbr.rel (%p365) target = $region28
      $region27: #{transformer_forward.14} parent=11 // pred_region
        _
      $region28: #{transformer_forward.14} parent=11 // pred_fallthru
        _
      // Predicated region
      $region29: #{transformer_forward.14} parent=11 // pred_check
        %p368 = pneg %p225
      $region30: #{transformer_forward.14} parent=11 // pred_check_branch
        %370 = sbr.rel (%p368) target = $region32
      $region31: #{transformer_forward.14} parent=11 // pred_region
        _
      $region32: #{transformer_forward.14} parent=11 // pred_fallthru
        _
      // Predicated region
      $region33: #{transformer_forward.14} parent=11 // pred_check
        %p371 = pneg %p246
      $region34: #{transformer_forward.14} parent=11 // pred_check_branch
        %373 = sbr.rel (%p371) target = $region36
      $region35: #{transformer_forward.14} parent=11 // pred_region
        _
      $region36: #{transformer_forward.14} parent=11 // pred_fallthru
        _
      // Predicated region
      $region37: #{transformer_forward.14} parent=11 // pred_check
        %p374 = pneg %p267
      $region38: #{transformer_forward.14} parent=11 // pred_check_branch
        %376 = sbr.rel (%p374) target = $region40
      $region39: #{transformer_forward.14} parent=11 // pred_region
        _
      $region40: #{transformer_forward.14} parent=11 // pred_fallthru
        _
      // Predicated region
      $region41: #{transformer_forward.14} parent=11 // pred_check
        %p377 = pneg %p288
      $region42: #{transformer_forward.14} parent=11 // pred_check_branch
        %379 = sbr.rel (%p377) target = $region44
      $region43: #{transformer_forward.14} parent=11 // pred_region
        _
      $region44: #{transformer_forward.14} parent=11 // pred_fallthru
        _
    $region12: #{transformer_forward.14} parent=5 // pred_fallthru
      _
    %p380 = scmp.lt.s32.totalorder %s16, 2
    // Predicated region
    $region45: #{transformer_forward.14} parent=5 // pred_check
      %p381 = pneg %p380
    $region46: #{transformer_forward.14} parent=5 // pred_check_branch
      %383 = sbr.rel (%p381) target = $region48
    $region47: #{transformer_forward.14} parent=5 // pred_region
      // Predicated region
      $region49: #{transformer_forward.14} parent=47 // pred_check
        %p384 = pneg %p57
      $region50: #{transformer_forward.14} parent=47 // pred_check_branch
        %386 = sbr.rel (%p384) target = $region52
      $region51: #{transformer_forward.14} parent=47 // pred_region
        %p387 = scmp.lt.s32.totalorder %s23, 1
        %s388 = scalar_select %p387, %s23, 1
        %p389 = scmp.lt.s32.totalorder %s24, 0
        %s390 = scalar_select %p389, %s24, 0
        %s391 = sadd.s32 %s390, %s388
        %s392 = smul.addr %s391, 8
        %s393 = scalar_lea.vmem %s0, %s392
      $region52: #{transformer_forward.14} parent=47 // pred_fallthru
        _
      // Predicated region
      $region53: #{transformer_forward.14} parent=47 // pred_check
        %p394 = pneg %p115
      $region54: #{transformer_forward.14} parent=47 // pred_check_branch
        %396 = sbr.rel (%p394) target = $region56
      $region55: #{transformer_forward.14} parent=47 // pred_region
        %p397 = scmp.lt.s32.totalorder %s25, %s24
        %s398 = scalar_select %p397, %s25, %s24
        %p399 = scmp.lt.s32.totalorder %s23, 1
        %s400 = scalar_select %p399, %s23, 1
        %p401 = scmp.lt.s32.totalorder %s398, 0
        %s402 = scalar_select %p401, %s398, 0
        %s403 = sadd.s32 %s402, %s400
        %s404 = smul.addr %s403, 8
        %s405 = scalar_lea.vmem %s2, %s404
        %p406 = scmp.lt.s32.totalorder %s25, %s24
        %s407 = scalar_select %p406, %s25, %s24
      $region56: #{transformer_forward.14} parent=47 // pred_fallthru
        _
    $region48: #{transformer_forward.14} parent=5 // pred_fallthru
      _
    %p408 = scmp.le.s32.totalorder 1, %s16
    %p409 = scmp.lt.s32.totalorder %s16, 3
    %p410 = pnand %p408, %p409
    %p411 = pneg %p410
    // Predicated region
    $region57: #{transformer_forward.14} parent=5 // pred_check
      _
    $region58: #{transformer_forward.14} parent=5 // pred_check_branch
      %413 = sbr.rel (%p410) target = $region60
    $region59: #{transformer_forward.14} parent=5 // pred_region
      %s414 = ssub.s32 %s16, 1
      %p415 = scmp.lt.s32.totalorder %s26, 1
      %s416 = scalar_select %p415, %s26, 1
      %p417 = scmp.lt.s32.totalorder %s27, 0
      %s418 = scalar_select %p417, %s27, 0
      %s419 = sadd.s32 %s418, %s416
      %s420 = smul.addr %s419, 8
      %s421 = scalar_lea.vmem %s0, %s420
      %p422 = pneg %p63
      %p423 = pneg %p60
      %p424 = scmp.lt.s32.totalorder %s27, 0
      %s425 = scalar_select %p424, %s27, 0
      %s426 = smul.addr %s425, 8
      %s427 = scalar_lea.vmem %s1, %s426
      %p428 = pneg %p89
      %p429 = pneg %p86
      %p430 = scmp.lt.s32.totalorder %s28, %s27
      %s431 = scalar_select %p430, %s28, %s27
      %p432 = scmp.lt.s32.totalorder %s26, 1
      %s433 = scalar_select %p432, %s26, 1
      %p434 = scmp.lt.s32.totalorder %s431, 0
      %s435 = scalar_select %p434, %s431, 0
      %s436 = sadd.s32 %s435, %s433
      %s437 = smul.addr %s436, 8
      %s438 = scalar_lea.vmem %s2, %s437
      %p439 = pneg %p121
      %p440 = pneg %p118
      %p441 = scmp.lt.s32.totalorder %s28, %s27
      %s442 = scalar_select %p441, %s28, %s27
      %p443 = scmp.lt.s32.totalorder %s442, 0
      %s444 = scalar_select %p443, %s442, 0
      %s445 = smul.addr %s444, 8
      %s446 = scalar_lea.vmem %s3, %s445
      %p447 = pneg %p151
      %p448 = pneg %p148
      %p449 = scmp.lt.s32.totalorder %s28, %s27
      %s450 = scalar_select %p449, %s28, %s27
      %s451 = smul.u32 8, %s27
      %p452 = scmp.lt.s32.totalorder %s451, 7
      %s453 = scalar_select %p452, %s451, 7
      %p454 = scmp.lt.s32.totalorder %s450, 0
      %s455 = scalar_select %p454, %s450, 0
      %s456 = sadd.s32 %s455, %s453
      %s457 = smul.addr %s456, 4
      %s458 = scalar_lea.vmem %s4, %s457
      %p459 = pneg %p183
      %p460 = pneg %p180
      %p461 = pneg %p204
      %p462 = pneg %p201
      %p463 = pneg %p225
      %p464 = pneg %p222
      %p465 = pneg %p246
      %p466 = pneg %p243
      %p467 = pneg %p267
      %p468 = pneg %p264
      %p469 = pneg %p288
      %p470 = pneg %p285
      %p471 = pneg %p316
      %p472 = pneg %p313
      %p473 = scmp.lt.s32.totalorder %s26, 1
      %s474 = scalar_select %p473, %s26, 1
      %p475 = scmp.lt.s32.totalorder %s27, 0
      %s476 = scalar_select %p475, %s27, 0
      %s477 = sadd.s32 %s476, %s474
      %s478 = smul.addr %s477, 8
      %s479 = scalar_lea.vmem %s10, %s478
      %p480 = scmp.lt.s32.totalorder %s26, 1
      %s481 = scalar_select %p480, %s26, 1
      %p482 = scmp.lt.s32.totalorder %s27, 0
      %s483 = scalar_select %p482, %s27, 0
      %s484 = sadd.s32 %s483, %s481
      %s485 = smul.addr %s484, 8
      %s486 = scalar_lea.vmem %s0, %s485
      %p487 = scmp.lt.s32.totalorder %s27, 0
      %s488 = scalar_select %p487, %s27, 0
      %s489 = smul.addr %s488, 8
      %s490 = scalar_lea.vmem %s1, %s489
      %p491 = scmp.lt.s32.totalorder %s28, %s27
      %s492 = scalar_select %p491, %s28, %s27
      %p493 = scmp.lt.s32.totalorder %s26, 1
      %s494 = scalar_select %p493, %s26, 1
      %p495 = scmp.lt.s32.totalorder %s492, 0
      %s496 = scalar_select %p495, %s492, 0
      %s497 = sadd.s32 %s496, %s494
      %s498 = smul.addr %s497, 8
      %s499 = scalar_lea.vmem %s2, %s498
      %p500 = scmp.lt.s32.totalorder %s28, %s27
      %s501 = scalar_select %p500, %s28, %s27
      %p502 = scmp.lt.s32.totalorder %s28, %s27
      %s503 = scalar_select %p502, %s28, %s27
      %p504 = scmp.lt.s32.totalorder %s503, 0
      %s505 = scalar_select %p504, %s503, 0
      %s506 = smul.addr %s505, 8
      %s507 = scalar_lea.vmem %s3, %s506
      %p508 = scmp.lt.s32.totalorder %s28, %s27
      %s509 = scalar_select %p508, %s28, %s27
      %p510 = scmp.lt.s32.totalorder %s28, %s27
      %s511 = scalar_select %p510, %s28, %s27
      %s512 = smul.u32 8, %s27
      %p513 = scmp.lt.s32.totalorder %s512, 7
      %s514 = scalar_select %p513, %s512, 7
      %p515 = scmp.lt.s32.totalorder %s511, 0
      %s516 = scalar_select %p515, %s511, 0
      %s517 = sadd.s32 %s516, %s514
      %s518 = smul.addr %s517, 4
      %s519 = scalar_lea.vmem %s4, %s518
      %p520 = scmp.lt.s32.totalorder %s28, %s27
      %s521 = scalar_select %p520, %s28, %s27
      %s522 = smul.u32 8, %s27
      %p523 = scmp.lt.s32.totalorder %s26, 1
      %s524 = scalar_select %p523, %s26, 1
      %p525 = scmp.lt.s32.totalorder %s27, 0
      %s526 = scalar_select %p525, %s27, 0
      %s527 = sadd.s32 %s526, %s524
      %s528 = smul.addr %s527, 8
      %s529 = scalar_lea.vmem %s10, %s528
      %p531 = scmp.eq.s32.totalorder %s28, 0
      // Predicated region
      $region61: #{transformer_forward.14} parent=59 // pred_check
        %p532 = pneg %p531
      $region62: #{transformer_forward.14} parent=59 // pred_check_branch
        %534 = sbr.rel (%p532) target = $region64
      $region63: #{transformer_forward.14} parent=59 // pred_region
        %v535 = vld [vmem:[%s486] sm:$0xff]
        %v536 = vld [vmem:[%s490] sm:$0xff]
        %v537 = vadd.f32 %v535, %v536
        %v538 = vpack.c.bf16 %v537, %v537
        %v539 = vld [vmem:[%s6] sm:$0xff]
        %v540 = vld [vmem:[%s6 + $0x8] sm:$0xff]
        %v541 = vpack.c.bf16 %v540, %v539
        %vm542 = vcmask 130048
        %v544 = vsel %vm542, %v538, 0
        %546 = vmatprep.subr.bf16.mxu0 0
        %547 = vmatpush1.bf16.msra.mxu0 %v541
        %548 = vmatprep.subr.bf16.mxu0 0
        %549 = vmatpush1.bf16.msra.mxu0 0
        %550 = vmatprep.subr.bf16.mxu0 0
        %551 = vmatpush1.bf16.msra.mxu0 0
        %552 = vmatprep.subr.bf16.mxu0 0
        %553 = vmatpush1.bf16.msra.mxu0 0
        %554 = vmatprep.subr.bf16.mxu0 0
        %555 = vmatpush1.bf16.msra.mxu0 0
        %556 = vmatprep.subr.bf16.mxu0 0
        %557 = vmatpush1.bf16.msra.mxu0 0
        %558 = vmatprep.subr.bf16.mxu0 0
        %559 = vmatpush1.bf16.msra.mxu0 0
        %560 = vmatprep.subr.bf16.mxu0 0
        %561 = vmatpush1.bf16.msra.mxu0 0
        %562 = vmatprep.subr.bf16.mxu0 0
        %563 = vmatpush1.bf16.msra.mxu0 0
        %564 = vmatprep.subr.bf16.mxu0 0
        %565 = vmatpush1.bf16.msra.mxu0 0
        %566 = vmatprep.subr.bf16.mxu0 0
        %567 = vmatpush1.bf16.msra.mxu0 0
        %568 = vmatprep.subr.bf16.mxu0 0
        %569 = vmatpush1.bf16.msra.mxu0 0
        %570 = vmatprep.subr.bf16.mxu0 0
        %571 = vmatpush1.bf16.msra.mxu0 0
        %572 = vmatprep.subr.bf16.mxu0 0
        %573 = vmatpush1.bf16.msra.mxu0 0
        %574 = vmatprep.subr.bf16.mxu0 0
        %575 = vmatpush1.bf16.msra.mxu0 0
        %576 = vmatprep.subr.bf16.mxu0 0
        %577 = vmatpush1.bf16.msra.mxu0 0
        %578 = vmatprep.mubr.bf16.mxu0 0
        %579 = vmatmul.mubr.bf16.gmra.mrb[0].mxu0 %v544
        %v580 = vpop.f32.mrb[0].mxu0
        %v581 = vadd.f32 0.0, %v580
        %v582 = vpop.f32.mrb[0].mxu0
        %v583 = vpop.f32.mrb[0].mxu0
        %v584 = vpop.f32.mrb[0].mxu0
        %585 = vdwg.mxu0
        %vm586 = vcmask 261120
        %587 = vst.msk [vmem:[#allocation2] sm:$0xff] %vm586, %v581
        %vm588 = vcmask 7168
        %589 = vst.msk [vmem:[#allocation3] sm:$0xff] %vm588, -1e+30
        %590 = vst.msk [vmem:[#allocation3 + $0x8] sm:$0xff] %vm588, -1e+30
        %591 = vst.msk [vmem:[#allocation4] sm:$0xff] %vm588, 0.0
        %592 = vst.msk [vmem:[#allocation4 + $0x8] sm:$0xff] %vm588, 0.0
        %593 = vst.msk [vmem:[#allocation5] sm:$0xff] %vm542, 0.0
      $region64: #{transformer_forward.14} parent=59 // pred_fallthru
        _
      %p594 = scmp.le.s32.totalorder %s28, %s27
      // Predicated region
      $region65: #{transformer_forward.14} parent=59 // pred_check
        %p595 = pneg %p594
      $region66: #{transformer_forward.14} parent=59 // pred_check_branch
        %597 = sbr.rel (%p595) target = $region68
      $region67: #{transformer_forward.14} parent=59 // pred_region
        %v598 = vld [vmem:[%s499] sm:$0xff]
        %v599 = vld [vmem:[%s507] sm:$0xff]
        %v600 = vadd.f32 %v598, %v599
        %v601 = vpack.c.bf16 %v600, %v600
        %v602 = vld [vmem:[%s5] sm:$0xff]
        %v603 = vld [vmem:[%s5 + $0x8] sm:$0xff]
        %v604 = vpack.c.bf16 %v603, %v602
        %vm605 = vcmask 130048
        %v607 = vsel %vm605, %v601, 0
        %609 = vmatprep.subr.bf16.mxu0 0
        %610 = vmatpush1.bf16.msra.mxu0 %v604
        %611 = vmatprep.subr.bf16.mxu0 0
        %612 = vmatpush1.bf16.msra.mxu0 0
        %613 = vmatprep.subr.bf16.mxu0 0
        %614 = vmatpush1.bf16.msra.mxu0 0
        %615 = vmatprep.subr.bf16.mxu0 0
        %616 = vmatpush1.bf16.msra.mxu0 0
        %617 = vmatprep.subr.bf16.mxu0 0
        %618 = vmatpush1.bf16.msra.mxu0 0
        %619 = vmatprep.subr.bf16.mxu0 0
        %620 = vmatpush1.bf16.msra.mxu0 0
        %621 = vmatprep.subr.bf16.mxu0 0
        %622 = vmatpush1.bf16.msra.mxu0 0
        %623 = vmatprep.subr.bf16.mxu0 0
        %624 = vmatpush1.bf16.msra.mxu0 0
        %625 = vmatprep.subr.bf16.mxu0 0
        %626 = vmatpush1.bf16.msra.mxu0 0
        %627 = vmatprep.subr.bf16.mxu0 0
        %628 = vmatpush1.bf16.msra.mxu0 0
        %629 = vmatprep.subr.bf16.mxu0 0
        %630 = vmatpush1.bf16.msra.mxu0 0
        %631 = vmatprep.subr.bf16.mxu0 0
        %632 = vmatpush1.bf16.msra.mxu0 0
        %633 = vmatprep.subr.bf16.mxu0 0
        %634 = vmatpush1.bf16.msra.mxu0 0
        %635 = vmatprep.subr.bf16.mxu0 0
        %636 = vmatpush1.bf16.msra.mxu0 0
        %637 = vmatprep.subr.bf16.mxu0 0
        %638 = vmatpush1.bf16.msra.mxu0 0
        %639 = vmatprep.subr.bf16.mxu0 0
        %640 = vmatpush1.bf16.msra.mxu0 0
        %641 = vmatprep.mubr.bf16.mxu0 0
        %642 = vmatmul.mubr.bf16.gmra.mrb[0].mxu0 %v607
        %v643 = vpop.f32.mrb[0].mxu0
        %v644 = vadd.f32 0.0, %v643
        %v645 = vpop.f32.mrb[0].mxu0
        %v646 = vpop.f32.mrb[0].mxu0
        %v647 = vpop.f32.mrb[0].mxu0
        %648 = vdwg.mxu0
        %v649 = vpack.c.bf16 %v598, %v598
        %v650 = vld [vmem:[%s8] sm:$0xff]
        %v651 = vld [vmem:[%s8 + $0x8] sm:$0xff]
        %v652 = vpack.c.bf16 %v651, %v650
        %v653 = vld [vmem:[%s9] sm:$0x1]
        %v655 = vlaneseq
        %v656 = vshrl.u32 %v655, 7
        %v657 = vsub.s32 0, %v656
        %v658 = vrot.slane %v653, %v657
        %v661 = vsel %vm605, %v649, 0
        %663 = vmatprep.subr.bf16.mxu0 0
        %664 = vmatpush1.bf16.msra.mxu0 %v652
        %665 = vmatprep.subr.bf16.mxu0 0
        %666 = vmatpush1.bf16.msra.mxu0 0
        %667 = vmatprep.subr.bf16.mxu0 0
        %668 = vmatpush1.bf16.msra.mxu0 0
        %669 = vmatprep.subr.bf16.mxu0 0
        %670 = vmatpush1.bf16.msra.mxu0 0
        %671 = vmatprep.subr.bf16.mxu0 0
        %672 = vmatpush1.bf16.msra.mxu0 0
        %673 = vmatprep.subr.bf16.mxu0 0
        %674 = vmatpush1.bf16.msra.mxu0 0
        %675 = vmatprep.subr.bf16.mxu0 0
        %676 = vmatpush1.bf16.msra.mxu0 0
        %677 = vmatprep.subr.bf16.mxu0 0
        %678 = vmatpush1.bf16.msra.mxu0 0
        %679 = vmatprep.subr.bf16.mxu0 0
        %680 = vmatpush1.bf16.msra.mxu0 0
        %681 = vmatprep.subr.bf16.mxu0 0
        %682 = vmatpush1.bf16.msra.mxu0 0
        %683 = vmatprep.subr.bf16.mxu0 0
        %684 = vmatpush1.bf16.msra.mxu0 0
        %685 = vmatprep.subr.bf16.mxu0 0
        %686 = vmatpush1.bf16.msra.mxu0 0
        %687 = vmatprep.subr.bf16.mxu0 0
        %688 = vmatpush1.bf16.msra.mxu0 0
        %689 = vmatprep.subr.bf16.mxu0 0
        %690 = vmatpush1.bf16.msra.mxu0 0
        %691 = vmatprep.subr.bf16.mxu0 0
        %692 = vmatpush1.bf16.msra.mxu0 0
        %693 = vmatprep.subr.bf16.mxu0 0
        %694 = vmatpush1.bf16.msra.mxu0 0
        %695 = vmatprep.mubr.bf16.mxu0 0
        %696 = vmatmul.mubr.bf16.gmra.mrb[0].mxu0 %v661
        %v697 = vpop.f32.mrb[0].mxu0
        %v698 = vadd.f32 %v658, %v697
        %v699 = vpop.f32.mrb[0].mxu0
        %v700 = vpop.f32.mrb[0].mxu0
        %v701 = vpop.f32.mrb[0].mxu0
        %702 = vdwg.mxu0
        %s703 = smul.u32 %s27, 8
        %v704 = vlaneseq
        %v705 = vshrl.u32 %v704, 7
        %v706 = vstv %s703
        %v707 = vadd.s32 %v706, %v705
        %s708 = smul.u32 %s28, 8
        %v709 = vlaneseq
        %v710 = vand.u32 %v709, 127
        %v711 = vstv %s708
        %v712 = vadd.s32 %v711, %v710
        %vm713 = vcmp.le.s32.totalorder %v712, %v707
        %v714 = vld [vmem:[#allocation2] sm:$0xff]
        %v715 = vld [vmem:[%s7] sm:$0x1]
        %v717 = vcombine.high %v714, %v714
        %v719 = vunpack.c.l.s4 1966171168
        %v720 = vunpack.c.0.s8 %v719
        %v721 = vlaneseq
        %v722 = vshrl.u32 %v721, 7
        %v723 = vsub.s32 %v720, %v722
        %v724 = vrot.slane %v714, %v723
        %v726 = vunpack.c.l.s4 1966171168
        %v727 = vunpack.c.0.s8 %v726
        %v728 = vlaneseq
        %v729 = vshrl.u32 %v728, 7
        %v730 = vsub.s32 %v727, %v729
        %v731 = vrot.slane %v717, %v730
        %v732 = vcombine.high %v724, %v724
        %v733 = vcombine.high %v731, %v731
        %v735 = vunpack.c.l.s4 1966171168
        %v736 = vunpack.c.0.s8 %v735
        %v737 = vlaneseq
        %v738 = vshrl.u32 %v737, 7
        %v739 = vsub.s32 %v736, %v738
        %v740 = vrot.slane %v724, %v739
        %v742 = vunpack.c.l.s4 1966171168
        %v743 = vunpack.c.0.s8 %v742
        %v744 = vlaneseq
        %v745 = vshrl.u32 %v744, 7
        %v746 = vsub.s32 %v743, %v745
        %v747 = vrot.slane %v731, %v746
        %v749 = vunpack.c.l.s4 1966171168
        %v750 = vunpack.c.0.s8 %v749
        %v751 = vlaneseq
        %v752 = vshrl.u32 %v751, 7
        %v753 = vsub.s32 %v750, %v752
        %v754 = vrot.slane %v732, %v753
        %v756 = vunpack.c.l.s4 1966171168
        %v757 = vunpack.c.0.s8 %v756
        %v758 = vlaneseq
        %v759 = vshrl.u32 %v758, 7
        %v760 = vsub.s32 %v757, %v759
        %v761 = vrot.slane %v733, %v760
        %v762 = vcombine.high %v740, %v740
        %v763 = vcombine.high %v747, %v747
        %v764 = vcombine.high %v754, %v754
        %v765 = vcombine.high %v761, %v761
        %v766 = vlaneseq
        %v767 = vshrl.u32 %v766, 7
        %v768 = vsub.s32 0, %v767
        %v769 = vrot.slane %v740, %v768
        %v770 = vlaneseq
        %v771 = vshrl.u32 %v770, 7
        %v772 = vsub.s32 0, %v771
        %v773 = vrot.slane %v754, %v772
        %v774 = vlaneseq
        %v775 = vshrl.u32 %v774, 7
        %v776 = vsub.s32 0, %v775
        %v777 = vrot.slane %v762, %v776
        %v778 = vlaneseq
        %v779 = vshrl.u32 %v778, 7
        %v780 = vsub.s32 0, %v779
        %v781 = vrot.slane %v764, %v780
        %v782 = vlaneseq
        %v783 = vshrl.u32 %v782, 7
        %v784 = vsub.s32 0, %v783
        %v785 = vrot.slane %v747, %v784
        %v786 = vlaneseq
        %v787 = vshrl.u32 %v786, 7
        %v788 = vsub.s32 0, %v787
        %v789 = vrot.slane %v761, %v788
        %v790 = vlaneseq
        %v791 = vshrl.u32 %v790, 7
        %v792 = vsub.s32 0, %v791
        %v793 = vrot.slane %v763, %v792
        %v794 = vlaneseq
        %v795 = vshrl.u32 %v794, 7
        %v796 = vsub.s32 0, %v795
        %v797 = vrot.slane %v765, %v796
        %v806 = vadd.f32 %v769, %v644
        %v807 = vadd.f32 %v773, %v644
        %v808 = vadd.f32 %v777, %v644
        %v809 = vadd.f32 %v781, %v644
        %v810 = vadd.f32 %v785, %v644
        %v811 = vadd.f32 %v789, %v644
        %v812 = vadd.f32 %v793, %v644
        %v813 = vadd.f32 %v797, %v644
        %v814 = vld [vmem:[%s519] sm:$0xf]
        %v815 = vld [vmem:[%s519 + $0x4] sm:$0xf]
        %v816 = vld [vmem:[%s519 + $0x8] sm:$0xf]
        %v817 = vld [vmem:[%s519 + $0xc] sm:$0xf]
        %v818 = vld [vmem:[%s519 + $0x10] sm:$0xf]
        %v819 = vld [vmem:[%s519 + $0x14] sm:$0xf]
        %v820 = vld [vmem:[%s519 + $0x18] sm:$0xf]
        %v821 = vld [vmem:[%s519 + $0x1c] sm:$0xf]
        %v822 = vunpack.c.l.bf16 %v814
        %v823 = vunpack.c.l.bf16 %v815
        %v824 = vunpack.c.l.bf16 %v816
        %v825 = vunpack.c.l.bf16 %v817
        %v826 = vunpack.c.l.bf16 %v818
        %v827 = vunpack.c.l.bf16 %v819
        %v828 = vunpack.c.l.bf16 %v820
        %v829 = vunpack.c.l.bf16 %v821
        %v830 = vadd.f32 %v806, %v822
        %v831 = vadd.f32 %v807, %v823
        %v832 = vadd.f32 %v808, %v824
        %v833 = vadd.f32 %v809, %v825
        %v834 = vadd.f32 %v810, %v826
        %v835 = vadd.f32 %v811, %v827
        %v836 = vadd.f32 %v812, %v828
        %v837 = vadd.f32 %v813, %v829
        %v838 = vmul.f32 %v830, 0.5
        %v839 = vmul.f32 %v831, 0.5
        %v840 = vmul.f32 %v832, 0.5
        %v841 = vmul.f32 %v833, 0.5
        %v842 = vmul.f32 %v834, 0.5
        %v843 = vmul.f32 %v835, 0.5
        %v844 = vmul.f32 %v836, 0.5
        %v845 = vmul.f32 %v837, 0.5
        %v846 = vmul.f32 %v830, 0.70710677
        %v847 = vmul.f32 %v831, 0.70710677
        %v848 = vmul.f32 %v832, 0.70710677
        %v849 = vmul.f32 %v833, 0.70710677
        %v850 = vmul.f32 %v834, 0.70710677
        %v851 = vmul.f32 %v835, 0.70710677
        %v852 = vmul.f32 %v836, 0.70710677
        %v853 = vmul.f32 %v837, 0.70710677
        %vm854 = vcmp.ge.f32.partialorder %v846, 0.0
        %vm855 = vcmp.ge.f32.partialorder %v847, 0.0
        %vm856 = vcmp.ge.f32.partialorder %v848, 0.0
        %vm857 = vcmp.ge.f32.partialorder %v849, 0.0
        %vm858 = vcmp.ge.f32.partialorder %v850, 0.0
        %vm859 = vcmp.ge.f32.partialorder %v851, 0.0
        %vm860 = vcmp.ge.f32.partialorder %v852, 0.0
        %vm861 = vcmp.ge.f32.partialorder %v853, 0.0
        %v862 = vsel %vm854, 1.0, -1.0
        %v863 = vsel %vm855, 1.0, -1.0
        %v864 = vsel %vm856, 1.0, -1.0
        %v865 = vsel %vm857, 1.0, -1.0
        %v866 = vsel %vm858, 1.0, -1.0
        %v867 = vsel %vm859, 1.0, -1.0
        %v868 = vsel %vm860, 1.0, -1.0
        %v869 = vsel %vm861, 1.0, -1.0
        %v870 = vand.u32 2147483647, %v846
        %v871 = vand.u32 2147483647, %v847
        %v872 = vand.u32 2147483647, %v848
        %v873 = vand.u32 2147483647, %v849
        %v874 = vand.u32 2147483647, %v850
        %v875 = vand.u32 2147483647, %v851
        %v876 = vand.u32 2147483647, %v852
        %v877 = vand.u32 2147483647, %v853
        %v878 = vmul.f32 %v870, 0.3275911
        %v879 = vmul.f32 %v871, 0.3275911
        %v880 = vmul.f32 %v872, 0.3275911
        %v881 = vmul.f32 %v873, 0.3275911
        %v882 = vmul.f32 %v874, 0.3275911
        %v883 = vmul.f32 %v875, 0.3275911
        %v884 = vmul.f32 %v876, 0.3275911
        %v885 = vmul.f32 %v877, 0.3275911
        %v886 = vadd.f32 %v878, 1.0
        %v887 = vadd.f32 %v879, 1.0
        %v888 = vadd.f32 %v880, 1.0
        %v889 = vadd.f32 %v881, 1.0
        %v890 = vadd.f32 %v882, 1.0
        %v891 = vadd.f32 %v883, 1.0
        %v892 = vadd.f32 %v884, 1.0
        %v893 = vadd.f32 %v885, 1.0
        %v894 = vrcp.pop %v886
        %v895 = vmul.f32 1.0, %v894
        %v896 = vrcp.pop %v887
        %v897 = vmul.f32 1.0, %v896
        %v898 = vrcp.pop %v888
        %v899 = vmul.f32 1.0, %v898
        %v900 = vrcp.pop %v889
        %v901 = vmul.f32 1.0, %v900
        %v902 = vrcp.pop %v890
        %v903 = vmul.f32 1.0, %v902
        %v904 = vrcp.pop %v891
        %v905 = vmul.f32 1.0, %v904
        %v906 = vrcp.pop %v892
        %v907 = vmul.f32 1.0, %v906
        %v908 = vrcp.pop %v893
        %v909 = vmul.f32 1.0, %v908
        %v910 = vmul.f32 %v895, 1.0614054
        %v911 = vmul.f32 %v897, 1.0614054
        %v912 = vmul.f32 %v899, 1.0614054
        %v913 = vmul.f32 %v901, 1.0614054
        %v914 = vmul.f32 %v903, 1.0614054
        %v915 = vmul.f32 %v905, 1.0614054
        %v916 = vmul.f32 %v907, 1.0614054
        %v917 = vmul.f32 %v909, 1.0614054
        %v918 = vadd.f32 %v910, -1.4531521
        %v919 = vadd.f32 %v911, -1.4531521
        %v920 = vadd.f32 %v912, -1.4531521
        %v921 = vadd.f32 %v913, -1.4531521
        %v922 = vadd.f32 %v914, -1.4531521
        %v923 = vadd.f32 %v915, -1.4531521
        %v924 = vadd.f32 %v916, -1.4531521
        %v925 = vadd.f32 %v917, -1.4531521
        %v926 = vmul.f32 %v918, %v895
        %v927 = vmul.f32 %v919, %v897
        %v928 = vmul.f32 %v920, %v899
        %v929 = vmul.f32 %v921, %v901
        %v930 = vmul.f32 %v922, %v903
        %v931 = vmul.f32 %v923, %v905
        %v932 = vmul.f32 %v924, %v907
        %v933 = vmul.f32 %v925, %v909
        %v934 = vadd.f32 %v926, 1.4214138
        %v935 = vadd.f32 %v927, 1.4214138
        %v936 = vadd.f32 %v928, 1.4214138
        %v937 = vadd.f32 %v929, 1.4214138
        %v938 = vadd.f32 %v930, 1.4214138
        %v939 = vadd.f32 %v931, 1.4214138
        %v940 = vadd.f32 %v932, 1.4214138
        %v941 = vadd.f32 %v933, 1.4214138
        %v942 = vmul.f32 %v934, %v895
        %v943 = vmul.f32 %v935, %v897
        %v944 = vmul.f32 %v936, %v899
        %v945 = vmul.f32 %v937, %v901
        %v946 = vmul.f32 %v938, %v903
        %v947 = vmul.f32 %v939, %v905
        %v948 = vmul.f32 %v940, %v907
        %v949 = vmul.f32 %v941, %v909
        %v950 = vadd.f32 %v942, -0.28449672
        %v951 = vadd.f32 %v943, -0.28449672
        %v952 = vadd.f32 %v944, -0.28449672
        %v953 = vadd.f32 %v945, -0.28449672
        %v954 = vadd.f32 %v946, -0.28449672
        %v955 = vadd.f32 %v947, -0.28449672
        %v956 = vadd.f32 %v948, -0.28449672
        %v957 = vadd.f32 %v949, -0.28449672
        %v958 = vmul.f32 %v950, %v895
        %v959 = vmul.f32 %v951, %v897
        %v960 = vmul.f32 %v952, %v899
        %v961 = vmul.f32 %v953, %v901
        %v962 = vmul.f32 %v954, %v903
        %v963 = vmul.f32 %v955, %v905
        %v964 = vmul.f32 %v956, %v907
        %v965 = vmul.f32 %v957, %v909
        %v966 = vadd.f32 %v958, 0.2548296
        %v967 = vadd.f32 %v959, 0.2548296
        %v968 = vadd.f32 %v960, 0.2548296
        %v969 = vadd.f32 %v961, 0.2548296
        %v970 = vadd.f32 %v962, 0.2548296
        %v971 = vadd.f32 %v963, 0.2548296
        %v972 = vadd.f32 %v964, 0.2548296
        %v973 = vadd.f32 %v965, 0.2548296
        %v974 = vmul.f32 %v966, %v895
        %v975 = vmul.f32 %v967, %v897
        %v976 = vmul.f32 %v968, %v899
        %v977 = vmul.f32 %v969, %v901
        %v978 = vmul.f32 %v970, %v903
        %v979 = vmul.f32 %v971, %v905
        %v980 = vmul.f32 %v972, %v907
        %v981 = vmul.f32 %v973, %v909
        %v982 = vsub.f32 0.0, %v870
        %v983 = vsub.f32 0.0, %v871
        %v984 = vsub.f32 0.0, %v872
        %v985 = vsub.f32 0.0, %v873
        %v986 = vsub.f32 0.0, %v874
        %v987 = vsub.f32 0.0, %v875
        %v988 = vsub.f32 0.0, %v876
        %v989 = vsub.f32 0.0, %v877
        %v990 = vmul.f32 %v982, %v870
        %v991 = vmul.f32 %v983, %v871
        %v992 = vmul.f32 %v984, %v872
        %v993 = vmul.f32 %v985, %v873
        %v994 = vmul.f32 %v986, %v874
        %v995 = vmul.f32 %v987, %v875
        %v996 = vmul.f32 %v988, %v876
        %v997 = vmul.f32 %v989, %v877
        %v998 = vmul.f32 %v990, 1.442695
        %v999 = vpow.pop %v998
        %v1000 = vmul.f32 %v991, 1.442695
        %v1001 = vpow.pop %v1000
        %v1002 = vmul.f32 %v992, 1.442695
        %v1003 = vpow.pop %v1002
        %v1004 = vmul.f32 %v993, 1.442695
        %v1005 = vpow.pop %v1004
        %v1006 = vmul.f32 %v994, 1.442695
        %v1007 = vpow.pop %v1006
        %v1008 = vmul.f32 %v995, 1.442695
        %v1009 = vpow.pop %v1008
        %v1010 = vmul.f32 %v996, 1.442695
        %v1011 = vpow.pop %v1010
        %v1012 = vmul.f32 %v997, 1.442695
        %v1013 = vpow.pop %v1012
        %v1014 = vmul.f32 %v974, %v999
        %v1015 = vmul.f32 %v975, %v1001
        %v1016 = vmul.f32 %v976, %v1003
        %v1017 = vmul.f32 %v977, %v1005
        %v1018 = vmul.f32 %v978, %v1007
        %v1019 = vmul.f32 %v979, %v1009
        %v1020 = vmul.f32 %v980, %v1011
        %v1021 = vmul.f32 %v981, %v1013
        %v1022 = vsub.f32 1.0, %v1014
        %v1023 = vsub.f32 1.0, %v1015
        %v1024 = vsub.f32 1.0, %v1016
        %v1025 = vsub.f32 1.0, %v1017
        %v1026 = vsub.f32 1.0, %v1018
        %v1027 = vsub.f32 1.0, %v1019
        %v1028 = vsub.f32 1.0, %v1020
        %v1029 = vsub.f32 1.0, %v1021
        %v1030 = vmul.f32 %v862, %v1022
        %v1031 = vmul.f32 %v863, %v1023
        %v1032 = vmul.f32 %v864, %v1024
        %v1033 = vmul.f32 %v865, %v1025
        %v1034 = vmul.f32 %v866, %v1026
        %v1035 = vmul.f32 %v867, %v1027
        %v1036 = vmul.f32 %v868, %v1028
        %v1037 = vmul.f32 %v869, %v1029
        %v1038 = vadd.f32 %v1030, 1.0
        %v1039 = vadd.f32 %v1031, 1.0
        %v1040 = vadd.f32 %v1032, 1.0
        %v1041 = vadd.f32 %v1033, 1.0
        %v1042 = vadd.f32 %v1034, 1.0
        %v1043 = vadd.f32 %v1035, 1.0
        %v1044 = vadd.f32 %v1036, 1.0
        %v1045 = vadd.f32 %v1037, 1.0
        %v1046 = vmul.f32 %v838, %v1038
        %v1047 = vmul.f32 %v839, %v1039
        %v1048 = vmul.f32 %v840, %v1040
        %v1049 = vmul.f32 %v841, %v1041
        %v1050 = vmul.f32 %v842, %v1042
        %v1051 = vmul.f32 %v843, %v1043
        %v1052 = vmul.f32 %v844, %v1044
        %v1053 = vmul.f32 %v845, %v1045
        %v1055 = vlaneseq
        %v1056 = vshrl.u32 %v1055, 7
        %v1057 = vsub.s32 0, %v1056
        %v1058 = vrot.slane %v715, %v1057
        %v1060 = vmul.f32 %v1046, %v1058
        %v1061 = vmul.f32 %v1047, %v1058
        %v1062 = vmul.f32 %v1048, %v1058
        %v1063 = vmul.f32 %v1049, %v1058
        %v1064 = vmul.f32 %v1050, %v1058
        %v1065 = vmul.f32 %v1051, %v1058
        %v1066 = vmul.f32 %v1052, %v1058
        %v1067 = vmul.f32 %v1053, %v1058
        %v1068 = vsel %vm605, %v1060, 0.0
        %1069 = vadd.xlane.f32.xlu0 %v1068
        %v1070 = vpop.xlane.xlu0 %1069
        %v1071 = vsel %vm605, %v1061, 0.0
        %1072 = vadd.xlane.f32.xlu0 %v1071
        %v1073 = vpop.xlane.xlu0 %1072
        %v1074 = vsel %vm605, %v1062, 0.0
        %1075 = vadd.xlane.f32.xlu0 %v1074
        %v1076 = vpop.xlane.xlu0 %1075
        %v1077 = vsel %vm605, %v1063, 0.0
        %1078 = vadd.xlane.f32.xlu0 %v1077
        %v1079 = vpop.xlane.xlu0 %1078
        %v1080 = vsel %vm605, %v1064, 0.0
        %1081 = vadd.xlane.f32.xlu0 %v1080
        %v1082 = vpop.xlane.xlu0 %1081
        %v1083 = vsel %vm605, %v1065, 0.0
        %1084 = vadd.xlane.f32.xlu0 %v1083
        %v1085 = vpop.xlane.xlu0 %1084
        %v1086 = vsel %vm605, %v1066, 0.0
        %1087 = vadd.xlane.f32.xlu0 %v1086
        %v1088 = vpop.xlane.xlu0 %1087
        %v1089 = vsel %vm605, %v1067, 0.0
        %1090 = vadd.xlane.f32.xlu0 %v1089
        %v1091 = vpop.xlane.xlu0 %1090
        %v1100 = vlaneseq
        %v1101 = vshrl.u32 %v1100, 7
        %v1102 = vsub.s32 %v710, %v1101
        %v1103 = vrot.slane %v1070, %v1102
        %v1104 = vlaneseq
        %v1105 = vshrl.u32 %v1104, 7
        %v1106 = vsub.s32 %v710, %v1105
        %v1107 = vrot.slane %v1073, %v1106
        %v1108 = vlaneseq
        %v1109 = vshrl.u32 %v1108, 7
        %v1110 = vsub.s32 %v710, %v1109
        %v1111 = vrot.slane %v1076, %v1110
        %v1112 = vlaneseq
        %v1113 = vshrl.u32 %v1112, 7
        %v1114 = vsub.s32 %v710, %v1113
        %v1115 = vrot.slane %v1079, %v1114
        %v1116 = vlaneseq
        %v1117 = vshrl.u32 %v1116, 7
        %v1118 = vsub.s32 %v710, %v1117
        %v1119 = vrot.slane %v1082, %v1118
        %v1120 = vlaneseq
        %v1121 = vshrl.u32 %v1120, 7
        %v1122 = vsub.s32 %v710, %v1121
        %v1123 = vrot.slane %v1085, %v1122
        %v1124 = vlaneseq
        %v1125 = vshrl.u32 %v1124, 7
        %v1126 = vsub.s32 %v710, %v1125
        %v1127 = vrot.slane %v1088, %v1126
        %v1128 = vlaneseq
        %v1129 = vshrl.u32 %v1128, 7
        %v1130 = vsub.s32 %v710, %v1129
        %v1131 = vrot.slane %v1091, %v1130
        %vm1132 = vcmask 1041409
        %v1133 = vsel %vm1132, %v1107, %v1103
        %vm1134 = vcmask 1042434
        %v1135 = vsel %vm1134, %v1111, %v1133
        %vm1136 = vcmask 1043459
        %v1137 = vsel %vm1136, %v1115, %v1135
        %vm1138 = vcmask 1044484
        %v1139 = vsel %vm1138, %v1119, %v1137
        %vm1140 = vcmask 1045509
        %v1141 = vsel %vm1140, %v1123, %v1139
        %vm1142 = vcmask 1046534
        %v1143 = vsel %vm1142, %v1127, %v1141
        %vm1144 = vcmask 1047559
        %v1145 = vsel %vm1144, %v1131, %v1143
        %v1147 = vsel %vm713, %v1145, -1e+30
        %v1148 = vld [vmem:[#allocation3] sm:$0xff]
        %vm1149 = vcmask 64512
        %v1150 = vsel %vm1149, %v1147, -inf
        %1151 = vmax.xlane.f32.xlu0 %v1150
        %v1152 = vpop.xlane.xlu0 %1151
        %v1153 = vmax.f32 %v1148, %v1152
        %v1154 = vsub.f32 %v1148, %v1153
        %v1155 = vmul.f32 %v1154, 1.442695
        %v1156 = vpow.pop %v1155
        %1158 = vset.pattern.permute.xlu0 0
        %1159 = vperm.xlu0 %1158, %v1153
        %v1160 = vpop.permute.xlu0 %1159
        %v1162 = vsub.f32 %v1147, %v1160
        %v1163 = vmul.f32 %v1162, 1.442695
        %v1164 = vpow.pop %v1163
        %v1165 = vld [vmem:[#allocation4] sm:$0xff]
        %v1166 = vmul.f32 %v1156, %v1165
        %v1167 = vsel %vm1149, %v1164, 0.0
        %1168 = vadd.xlane.f32.xlu0 %v1167
        %v1169 = vpop.xlane.xlu0 %1168
        %v1170 = vadd.f32 %v1166, %v1169
        %vm1171 = vcmask 7168
        %1172 = vst.msk [vmem:[#allocation4] sm:$0xff] %vm1171, %v1170
        %v1173 = vpack.c.bf16 %v1164, %v1164
        %v1174 = vpack.c.bf16 %v698, %v698
        %v1176 = vsel %vm1149, %v1173, 0
        %vm1178 = vcmask 1043456
        %v1180 = vsel %vm1178, %v1174, 0
        %1182 = vmatprep.subr.bf16.mxu0 0
        %1183 = vmatpush1.bf16.msra.mxu0 %v1180
        %1184 = vmatprep.subr.bf16.mxu0 0
        %1185 = vmatpush1.bf16.msra.mxu0 0
        %1186 = vmatprep.subr.bf16.mxu0 0
        %1187 = vmatpush1.bf16.msra.mxu0 0
        %1188 = vmatprep.subr.bf16.mxu0 0
        %1189 = vmatpush1.bf16.msra.mxu0 0
        %1190 = vmatprep.subr.bf16.mxu0 0
        %1191 = vmatpush1.bf16.msra.mxu0 0
        %1192 = vmatprep.subr.bf16.mxu0 0
        %1193 = vmatpush1.bf16.msra.mxu0 0
        %1194 = vmatprep.subr.bf16.mxu0 0
        %1195 = vmatpush1.bf16.msra.mxu0 0
        %1196 = vmatprep.subr.bf16.mxu0 0
        %1197 = vmatpush1.bf16.msra.mxu0 0
        %1198 = vmatprep.subr.bf16.mxu0 0
        %1199 = vmatpush1.bf16.msra.mxu0 0
        %1200 = vmatprep.subr.bf16.mxu0 0
        %1201 = vmatpush1.bf16.msra.mxu0 0
        %1202 = vmatprep.subr.bf16.mxu0 0
        %1203 = vmatpush1.bf16.msra.mxu0 0
        %1204 = vmatprep.subr.bf16.mxu0 0
        %1205 = vmatpush1.bf16.msra.mxu0 0
        %1206 = vmatprep.subr.bf16.mxu0 0
        %1207 = vmatpush1.bf16.msra.mxu0 0
        %1208 = vmatprep.subr.bf16.mxu0 0
        %1209 = vmatpush1.bf16.msra.mxu0 0
        %1210 = vmatprep.subr.bf16.mxu0 0
        %1211 = vmatpush1.bf16.msra.mxu0 0
        %1212 = vmatprep.subr.bf16.mxu0 0
        %1213 = vmatpush1.bf16.msra.mxu0 0
        %1214 = vmatprep.mubr.bf16.mxu0 0
        %1215 = vmatmul.mubr.bf16.gmra.mrb[0].mxu0 %v1176
        %v1216 = vpop.f32.mrb[0].mxu0
        %v1217 = vadd.f32 0.0, %v1216
        %v1218 = vpop.f32.mrb[0].mxu0
        %v1219 = vpop.f32.mrb[0].mxu0
        %v1220 = vpop.f32.mrb[0].mxu0
        %1221 = vdwg.mxu0
        %v1222 = vld [vmem:[#allocation5] sm:$0xff]
        %1224 = vset.pattern.permute.xlu0 0
        %1225 = vperm.xlu0 %1224, %v1156
        %v1226 = vpop.permute.xlu0 %1225
        %v1228 = vmul.f32 %v1226, %v1222
        %v1229 = vadd.f32 %v1228, %v1217
        %1230 = vst.msk [vmem:[#allocation5] sm:$0xff] %vm1149, %v1229
        %1231 = vst.msk [vmem:[#allocation3] sm:$0xff] %vm1171, %v1153
        %s1232 = scalar_lea.vmem %s519, 32
        %v1233 = vld [vmem:[%s1232] sm:$0xf]
        %v1234 = vld [vmem:[%s1232 + $0x4] sm:$0xf]
        %v1235 = vld [vmem:[%s1232 + $0x8] sm:$0xf]
        %v1236 = vld [vmem:[%s1232 + $0xc] sm:$0xf]
        %v1237 = vld [vmem:[%s1232 + $0x10] sm:$0xf]
        %v1238 = vld [vmem:[%s1232 + $0x14] sm:$0xf]
        %v1239 = vld [vmem:[%s1232 + $0x18] sm:$0xf]
        %v1240 = vld [vmem:[%s1232 + $0x1c] sm:$0xf]
        %v1241 = vunpack.c.l.bf16 %v1233
        %v1242 = vunpack.c.l.bf16 %v1234
        %v1243 = vunpack.c.l.bf16 %v1235
        %v1244 = vunpack.c.l.bf16 %v1236
        %v1245 = vunpack.c.l.bf16 %v1237
        %v1246 = vunpack.c.l.bf16 %v1238
        %v1247 = vunpack.c.l.bf16 %v1239
        %v1248 = vunpack.c.l.bf16 %v1240
        %1257 = vrot.lane.b32.xlu0 %v1241, 16
        %v1258 = vpop.permute.xlu0 %1257
        %1259 = vrot.lane.b32.xlu0 %v1242, 16
        %v1260 = vpop.permute.xlu0 %1259
        %1261 = vrot.lane.b32.xlu0 %v1243, 16
        %v1262 = vpop.permute.xlu0 %1261
        %1263 = vrot.lane.b32.xlu0 %v1244, 16
        %v1264 = vpop.permute.xlu0 %1263
        %1265 = vrot.lane.b32.xlu0 %v1245, 16
        %v1266 = vpop.permute.xlu0 %1265
        %1267 = vrot.lane.b32.xlu0 %v1246, 16
        %v1268 = vpop.permute.xlu0 %1267
        %1269 = vrot.lane.b32.xlu0 %v1247, 16
        %v1270 = vpop.permute.xlu0 %1269
        %1271 = vrot.lane.b32.xlu0 %v1248, 16
        %v1272 = vpop.permute.xlu0 %1271
        %v1281 = vadd.f32 %v806, %v1258
        %v1282 = vadd.f32 %v807, %v1260
        %v1283 = vadd.f32 %v808, %v1262
        %v1284 = vadd.f32 %v809, %v1264
        %v1285 = vadd.f32 %v810, %v1266
        %v1286 = vadd.f32 %v811, %v1268
        %v1287 = vadd.f32 %v812, %v1270
        %v1288 = vadd.f32 %v813, %v1272
        %v1289 = vmul.f32 %v1281, 0.5
        %v1290 = vmul.f32 %v1282, 0.5
        %v1291 = vmul.f32 %v1283, 0.5
        %v1292 = vmul.f32 %v1284, 0.5
        %v1293 = vmul.f32 %v1285, 0.5
        %v1294 = vmul.f32 %v1286, 0.5
        %v1295 = vmul.f32 %v1287, 0.5
        %v1296 = vmul.f32 %v1288, 0.5
        %v1297 = vmul.f32 %v1281, 0.70710677
        %v1298 = vmul.f32 %v1282, 0.70710677
        %v1299 = vmul.f32 %v1283, 0.70710677
        %v1300 = vmul.f32 %v1284, 0.70710677
        %v1301 = vmul.f32 %v1285, 0.70710677
        %v1302 = vmul.f32 %v1286, 0.70710677
        %v1303 = vmul.f32 %v1287, 0.70710677
        %v1304 = vmul.f32 %v1288, 0.70710677
        %vm1305 = vcmp.ge.f32.partialorder %v1297, 0.0
        %vm1306 = vcmp.ge.f32.partialorder %v1298, 0.0
        %vm1307 = vcmp.ge.f32.partialorder %v1299, 0.0
        %vm1308 = vcmp.ge.f32.partialorder %v1300, 0.0
        %vm1309 = vcmp.ge.f32.partialorder %v1301, 0.0
        %vm1310 = vcmp.ge.f32.partialorder %v1302, 0.0
        %vm1311 = vcmp.ge.f32.partialorder %v1303, 0.0
        %vm1312 = vcmp.ge.f32.partialorder %v1304, 0.0
        %v1313 = vsel %vm1305, 1.0, -1.0
        %v1314 = vsel %vm1306, 1.0, -1.0
        %v1315 = vsel %vm1307, 1.0, -1.0
        %v1316 = vsel %vm1308, 1.0, -1.0
        %v1317 = vsel %vm1309, 1.0, -1.0
        %v1318 = vsel %vm1310, 1.0, -1.0
        %v1319 = vsel %vm1311, 1.0, -1.0
        %v1320 = vsel %vm1312, 1.0, -1.0
        %v1321 = vand.u32 2147483647, %v1297
        %v1322 = vand.u32 2147483647, %v1298
        %v1323 = vand.u32 2147483647, %v1299
        %v1324 = vand.u32 2147483647, %v1300
        %v1325 = vand.u32 2147483647, %v1301
        %v1326 = vand.u32 2147483647, %v1302
        %v1327 = vand.u32 2147483647, %v1303
        %v1328 = vand.u32 2147483647, %v1304
        %v1329 = vmul.f32 %v1321, 0.3275911
        %v1330 = vmul.f32 %v1322, 0.3275911
        %v1331 = vmul.f32 %v1323, 0.3275911
        %v1332 = vmul.f32 %v1324, 0.3275911
        %v1333 = vmul.f32 %v1325, 0.3275911
        %v1334 = vmul.f32 %v1326, 0.3275911
        %v1335 = vmul.f32 %v1327, 0.3275911
        %v1336 = vmul.f32 %v1328, 0.3275911
        %v1337 = vadd.f32 %v1329, 1.0
        %v1338 = vadd.f32 %v1330, 1.0
        %v1339 = vadd.f32 %v1331, 1.0
        %v1340 = vadd.f32 %v1332, 1.0
        %v1341 = vadd.f32 %v1333, 1.0
        %v1342 = vadd.f32 %v1334, 1.0
        %v1343 = vadd.f32 %v1335, 1.0
        %v1344 = vadd.f32 %v1336, 1.0
        %v1345 = vrcp.pop %v1337
        %v1346 = vmul.f32 1.0, %v1345
        %v1347 = vrcp.pop %v1338
        %v1348 = vmul.f32 1.0, %v1347
        %v1349 = vrcp.pop %v1339
        %v1350 = vmul.f32 1.0, %v1349
        %v1351 = vrcp.pop %v1340
        %v1352 = vmul.f32 1.0, %v1351
        %v1353 = vrcp.pop %v1341
        %v1354 = vmul.f32 1.0, %v1353
        %v1355 = vrcp.pop %v1342
        %v1356 = vmul.f32 1.0, %v1355
        %v1357 = vrcp.pop %v1343
        %v1358 = vmul.f32 1.0, %v1357
        %v1359 = vrcp.pop %v1344
        %v1360 = vmul.f32 1.0, %v1359
        %v1361 = vmul.f32 %v1346, 1.0614054
        %v1362 = vmul.f32 %v1348, 1.0614054
        %v1363 = vmul.f32 %v1350, 1.0614054
        %v1364 = vmul.f32 %v1352, 1.0614054
        %v1365 = vmul.f32 %v1354, 1.0614054
        %v1366 = vmul.f32 %v1356, 1.0614054
        %v1367 = vmul.f32 %v1358, 1.0614054
        %v1368 = vmul.f32 %v1360, 1.0614054
        %v1369 = vadd.f32 %v1361, -1.4531521
        %v1370 = vadd.f32 %v1362, -1.4531521
        %v1371 = vadd.f32 %v1363, -1.4531521
        %v1372 = vadd.f32 %v1364, -1.4531521
        %v1373 = vadd.f32 %v1365, -1.4531521
        %v1374 = vadd.f32 %v1366, -1.4531521
        %v1375 = vadd.f32 %v1367, -1.4531521
        %v1376 = vadd.f32 %v1368, -1.4531521
        %v1377 = vmul.f32 %v1369, %v1346
        %v1378 = vmul.f32 %v1370, %v1348
        %v1379 = vmul.f32 %v1371, %v1350
        %v1380 = vmul.f32 %v1372, %v1352
        %v1381 = vmul.f32 %v1373, %v1354
        %v1382 = vmul.f32 %v1374, %v1356
        %v1383 = vmul.f32 %v1375, %v1358
        %v1384 = vmul.f32 %v1376, %v1360
        %v1385 = vadd.f32 %v1377, 1.4214138
        %v1386 = vadd.f32 %v1378, 1.4214138
        %v1387 = vadd.f32 %v1379, 1.4214138
        %v1388 = vadd.f32 %v1380, 1.4214138
        %v1389 = vadd.f32 %v1381, 1.4214138
        %v1390 = vadd.f32 %v1382, 1.4214138
        %v1391 = vadd.f32 %v1383, 1.4214138
        %v1392 = vadd.f32 %v1384, 1.4214138
        %v1393 = vmul.f32 %v1385, %v1346
        %v1394 = vmul.f32 %v1386, %v1348
        %v1395 = vmul.f32 %v1387, %v1350
        %v1396 = vmul.f32 %v1388, %v1352
        %v1397 = vmul.f32 %v1389, %v1354
        %v1398 = vmul.f32 %v1390, %v1356
        %v1399 = vmul.f32 %v1391, %v1358
        %v1400 = vmul.f32 %v1392, %v1360
        %v1401 = vadd.f32 %v1393, -0.28449672
        %v1402 = vadd.f32 %v1394, -0.28449672
        %v1403 = vadd.f32 %v1395, -0.28449672
        %v1404 = vadd.f32 %v1396, -0.28449672
        %v1405 = vadd.f32 %v1397, -0.28449672
        %v1406 = vadd.f32 %v1398, -0.28449672
        %v1407 = vadd.f32 %v1399, -0.28449672
        %v1408 = vadd.f32 %v1400, -0.28449672
        %v1409 = vmul.f32 %v1401, %v1346
        %v1410 = vmul.f32 %v1402, %v1348
        %v1411 = vmul.f32 %v1403, %v1350
        %v1412 = vmul.f32 %v1404, %v1352
        %v1413 = vmul.f32 %v1405, %v1354
        %v1414 = vmul.f32 %v1406, %v1356
        %v1415 = vmul.f32 %v1407, %v1358
        %v1416 = vmul.f32 %v1408, %v1360
        %v1417 = vadd.f32 %v1409, 0.2548296
        %v1418 = vadd.f32 %v1410, 0.2548296
        %v1419 = vadd.f32 %v1411, 0.2548296
        %v1420 = vadd.f32 %v1412, 0.2548296
        %v1421 = vadd.f32 %v1413, 0.2548296
        %v1422 = vadd.f32 %v1414, 0.2548296
        %v1423 = vadd.f32 %v1415, 0.2548296
        %v1424 = vadd.f32 %v1416, 0.2548296
        %v1425 = vmul.f32 %v1417, %v1346
        %v1426 = vmul.f32 %v1418, %v1348
        %v1427 = vmul.f32 %v1419, %v1350
        %v1428 = vmul.f32 %v1420, %v1352
        %v1429 = vmul.f32 %v1421, %v1354
        %v1430 = vmul.f32 %v1422, %v1356
        %v1431 = vmul.f32 %v1423, %v1358
        %v1432 = vmul.f32 %v1424, %v1360
        %v1433 = vsub.f32 0.0, %v1321
        %v1434 = vsub.f32 0.0, %v1322
        %v1435 = vsub.f32 0.0, %v1323
        %v1436 = vsub.f32 0.0, %v1324
        %v1437 = vsub.f32 0.0, %v1325
        %v1438 = vsub.f32 0.0, %v1326
        %v1439 = vsub.f32 0.0, %v1327
        %v1440 = vsub.f32 0.0, %v1328
        %v1441 = vmul.f32 %v1433, %v1321
        %v1442 = vmul.f32 %v1434, %v1322
        %v1443 = vmul.f32 %v1435, %v1323
        %v1444 = vmul.f32 %v1436, %v1324
        %v1445 = vmul.f32 %v1437, %v1325
        %v1446 = vmul.f32 %v1438, %v1326
        %v1447 = vmul.f32 %v1439, %v1327
        %v1448 = vmul.f32 %v1440, %v1328
        %v1449 = vmul.f32 %v1441, 1.442695
        %v1450 = vpow.pop %v1449
        %v1451 = vmul.f32 %v1442, 1.442695
        %v1452 = vpow.pop %v1451
        %v1453 = vmul.f32 %v1443, 1.442695
        %v1454 = vpow.pop %v1453
        %v1455 = vmul.f32 %v1444, 1.442695
        %v1456 = vpow.pop %v1455
        %v1457 = vmul.f32 %v1445, 1.442695
        %v1458 = vpow.pop %v1457
        %v1459 = vmul.f32 %v1446, 1.442695
        %v1460 = vpow.pop %v1459
        %v1461 = vmul.f32 %v1447, 1.442695
        %v1462 = vpow.pop %v1461
        %v1463 = vmul.f32 %v1448, 1.442695
        %v1464 = vpow.pop %v1463
        %v1465 = vmul.f32 %v1425, %v1450
        %v1466 = vmul.f32 %v1426, %v1452
        %v1467 = vmul.f32 %v1427, %v1454
        %v1468 = vmul.f32 %v1428, %v1456
        %v1469 = vmul.f32 %v1429, %v1458
        %v1470 = vmul.f32 %v1430, %v1460
        %v1471 = vmul.f32 %v1431, %v1462
        %v1472 = vmul.f32 %v1432, %v1464
        %v1473 = vsub.f32 1.0, %v1465
        %v1474 = vsub.f32 1.0, %v1466
        %v1475 = vsub.f32 1.0, %v1467
        %v1476 = vsub.f32 1.0, %v1468
        %v1477 = vsub.f32 1.0, %v1469
        %v1478 = vsub.f32 1.0, %v1470
        %v1479 = vsub.f32 1.0, %v1471
        %v1480 = vsub.f32 1.0, %v1472
        %v1481 = vmul.f32 %v1313, %v1473
        %v1482 = vmul.f32 %v1314, %v1474
        %v1483 = vmul.f32 %v1315, %v1475
        %v1484 = vmul.f32 %v1316, %v1476
        %v1485 = vmul.f32 %v1317, %v1477
        %v1486 = vmul.f32 %v1318, %v1478
        %v1487 = vmul.f32 %v1319, %v1479
        %v1488 = vmul.f32 %v1320, %v1480
        %v1489 = vadd.f32 %v1481, 1.0
        %v1490 = vadd.f32 %v1482, 1.0
        %v1491 = vadd.f32 %v1483, 1.0
        %v1492 = vadd.f32 %v1484, 1.0
        %v1493 = vadd.f32 %v1485, 1.0
        %v1494 = vadd.f32 %v1486, 1.0
        %v1495 = vadd.f32 %v1487, 1.0
        %v1496 = vadd.f32 %v1488, 1.0
        %v1497 = vmul.f32 %v1289, %v1489
        %v1498 = vmul.f32 %v1290, %v1490
        %v1499 = vmul.f32 %v1291, %v1491
        %v1500 = vmul.f32 %v1292, %v1492
        %v1501 = vmul.f32 %v1293, %v1493
        %v1502 = vmul.f32 %v1294, %v1494
        %v1503 = vmul.f32 %v1295, %v1495
        %v1504 = vmul.f32 %v1296, %v1496
        %v1505 = vmul.f32 %v1497, %v1058
        %v1506 = vmul.f32 %v1498, %v1058
        %v1507 = vmul.f32 %v1499, %v1058
        %v1508 = vmul.f32 %v1500, %v1058
        %v1509 = vmul.f32 %v1501, %v1058
        %v1510 = vmul.f32 %v1502, %v1058
        %v1511 = vmul.f32 %v1503, %v1058
        %v1512 = vmul.f32 %v1504, %v1058
        %1521 = vrot.lane.b32.xlu0 %v1505, 112
        %v1522 = vpop.permute.xlu0 %1521
        %1523 = vrot.lane.b32.xlu0 %v1506, 112
        %v1524 = vpop.permute.xlu0 %1523
        %1525 = vrot.lane.b32.xlu0 %v1507, 112
        %v1526 = vpop.permute.xlu0 %1525
        %1527 = vrot.lane.b32.xlu0 %v1508, 112
        %v1528 = vpop.permute.xlu0 %1527
        %1529 = vrot.lane.b32.xlu0 %v1509, 112
        %v1530 = vpop.permute.xlu0 %1529
        %1531 = vrot.lane.b32.xlu0 %v1510, 112
        %v1532 = vpop.permute.xlu0 %1531
        %1533 = vrot.lane.b32.xlu0 %v1511, 112
        %v1534 = vpop.permute.xlu0 %1533
        %1535 = vrot.lane.b32.xlu0 %v1512, 112
        %v1536 = vpop.permute.xlu0 %1535
        %v1545 = vsel %vm605, %v1522, 0.0
        %1546 = vadd.xlane.f32.xlu0 %v1545
        %v1547 = vpop.xlane.xlu0 %1546
        %v1548 = vsel %vm605, %v1524, 0.0
        %1549 = vadd.xlane.f32.xlu0 %v1548
        %v1550 = vpop.xlane.xlu0 %1549
        %v1551 = vsel %vm605, %v1526, 0.0
        %1552 = vadd.xlane.f32.xlu0 %v1551
        %v1553 = vpop.xlane.xlu0 %1552
        %v1554 = vsel %vm605, %v1528, 0.0
        %1555 = vadd.xlane.f32.xlu0 %v1554
        %v1556 = vpop.xlane.xlu0 %1555
        %v1557 = vsel %vm605, %v1530, 0.0
        %1558 = vadd.xlane.f32.xlu0 %v1557
        %v1559 = vpop.xlane.xlu0 %1558
        %v1560 = vsel %vm605, %v1532, 0.0
        %1561 = vadd.xlane.f32.xlu0 %v1560
        %v1562 = vpop.xlane.xlu0 %1561
        %v1563 = vsel %vm605, %v1534, 0.0
        %1564 = vadd.xlane.f32.xlu0 %v1563
        %v1565 = vpop.xlane.xlu0 %1564
        %v1566 = vsel %vm605, %v1536, 0.0
        %1567 = vadd.xlane.f32.xlu0 %v1566
        %v1568 = vpop.xlane.xlu0 %1567
        %v1577 = vlaneseq
        %v1578 = vshrl.u32 %v1577, 7
        %v1579 = vsub.s32 %v710, %v1578
        %v1580 = vrot.slane %v1547, %v1579
        %v1581 = vlaneseq
        %v1582 = vshrl.u32 %v1581, 7
        %v1583 = vsub.s32 %v710, %v1582
        %v1584 = vrot.slane %v1550, %v1583
        %v1585 = vlaneseq
        %v1586 = vshrl.u32 %v1585, 7
        %v1587 = vsub.s32 %v710, %v1586
        %v1588 = vrot.slane %v1553, %v1587
        %v1589 = vlaneseq
        %v1590 = vshrl.u32 %v1589, 7
        %v1591 = vsub.s32 %v710, %v1590
        %v1592 = vrot.slane %v1556, %v1591
        %v1593 = vlaneseq
        %v1594 = vshrl.u32 %v1593, 7
        %v1595 = vsub.s32 %v710, %v1594
        %v1596 = vrot.slane %v1559, %v1595
        %v1597 = vlaneseq
        %v1598 = vshrl.u32 %v1597, 7
        %v1599 = vsub.s32 %v710, %v1598
        %v1600 = vrot.slane %v1562, %v1599
        %v1601 = vlaneseq
        %v1602 = vshrl.u32 %v1601, 7
        %v1603 = vsub.s32 %v710, %v1602
        %v1604 = vrot.slane %v1565, %v1603
        %v1605 = vlaneseq
        %v1606 = vshrl.u32 %v1605, 7
        %v1607 = vsub.s32 %v710, %v1606
        %v1608 = vrot.slane %v1568, %v1607
        %v1609 = vsel %vm1132, %v1584, %v1580
        %v1610 = vsel %vm1134, %v1588, %v1609
        %v1611 = vsel %vm1136, %v1592, %v1610
        %v1612 = vsel %vm1138, %v1596, %v1611
        %v1613 = vsel %vm1140, %v1600, %v1612
        %v1614 = vsel %vm1142, %v1604, %v1613
        %v1615 = vsel %vm1144, %v1608, %v1614
        %v1617 = vsel %vm713, %v1615, -1e+30
        %s1618 = scalar_lea.vmem [#allocation3], 8
        %v1619 = vld [vmem:[%s1618] sm:$0xff]
        %v1620 = vsel %vm1149, %v1617, -inf
        %1621 = vmax.xlane.f32.xlu0 %v1620
        %v1622 = vpop.xlane.xlu0 %1621
        %v1623 = vmax.f32 %v1619, %v1622
        %v1624 = vsub.f32 %v1619, %v1623
        %v1625 = vmul.f32 %v1624, 1.442695
        %v1626 = vpow.pop %v1625
        %1628 = vset.pattern.permute.xlu0 0
        %1629 = vperm.xlu0 %1628, %v1623
        %v1630 = vpop.permute.xlu0 %1629
        %v1632 = vsub.f32 %v1617, %v1630
        %v1633 = vmul.f32 %v1632, 1.442695
        %v1634 = vpow.pop %v1633
        %s1635 = scalar_lea.vmem [#allocation4], 8
        %v1636 = vld [vmem:[%s1635] sm:$0xff]
        %v1637 = vmul.f32 %v1626, %v1636
        %v1638 = vsel %vm1149, %v1634, 0.0
        %1639 = vadd.xlane.f32.xlu0 %v1638
        %v1640 = vpop.xlane.xlu0 %1639
        %v1641 = vadd.f32 %v1637, %v1640
        %1642 = vst.msk [vmem:[%s1635] sm:$0xff] %vm1171, %v1641
        %v1643 = vpack.c.bf16 %v1634, %v1634
        %1645 = vrot.lane.b32.xlu0 %v1174, 120
        %v1646 = vpop.permute.xlu0 %1645
        %v1648 = vsel %vm1149, %v1643, 0
        %v1651 = vsel %vm1178, %v1646, 0
        %1653 = vmatprep.subr.bf16.mxu0 0
        %1654 = vmatpush1.bf16.msra.mxu0 %v1651
        %1655 = vmatprep.subr.bf16.mxu0 0
        %1656 = vmatpush1.bf16.msra.mxu0 0
        %1657 = vmatprep.subr.bf16.mxu0 0
        %1658 = vmatpush1.bf16.msra.mxu0 0
        %1659 = vmatprep.subr.bf16.mxu0 0
        %1660 = vmatpush1.bf16.msra.mxu0 0
        %1661 = vmatprep.subr.bf16.mxu0 0
        %1662 = vmatpush1.bf16.msra.mxu0 0
        %1663 = vmatprep.subr.bf16.mxu0 0
        %1664 = vmatpush1.bf16.msra.mxu0 0
        %1665 = vmatprep.subr.bf16.mxu0 0
        %1666 = vmatpush1.bf16.msra.mxu0 0
        %1667 = vmatprep.subr.bf16.mxu0 0
        %1668 = vmatpush1.bf16.msra.mxu0 0
        %1669 = vmatprep.subr.bf16.mxu0 0
        %1670 = vmatpush1.bf16.msra.mxu0 0
        %1671 = vmatprep.subr.bf16.mxu0 0
        %1672 = vmatpush1.bf16.msra.mxu0 0
        %1673 = vmatprep.subr.bf16.mxu0 0
        %1674 = vmatpush1.bf16.msra.mxu0 0
        %1675 = vmatprep.subr.bf16.mxu0 0
        %1676 = vmatpush1.bf16.msra.mxu0 0
        %1677 = vmatprep.subr.bf16.mxu0 0
        %1678 = vmatpush1.bf16.msra.mxu0 0
        %1679 = vmatprep.subr.bf16.mxu0 0
        %1680 = vmatpush1.bf16.msra.mxu0 0
        %1681 = vmatprep.subr.bf16.mxu0 0
        %1682 = vmatpush1.bf16.msra.mxu0 0
        %1683 = vmatprep.subr.bf16.mxu0 0
        %1684 = vmatpush1.bf16.msra.mxu0 0
        %1685 = vmatprep.mubr.bf16.mxu0 0
        %1686 = vmatmul.mubr.bf16.gmra.mrb[0].mxu0 %v1648
        %v1687 = vpop.f32.mrb[0].mxu0
        %v1688 = vadd.f32 0.0, %v1687
        %v1689 = vpop.f32.mrb[0].mxu0
        %v1690 = vpop.f32.mrb[0].mxu0
        %v1691 = vpop.f32.mrb[0].mxu0
        %1692 = vdwg.mxu0
        %v1693 = vld [vmem:[#allocation5] sm:$0xff]
        %1695 = vset.pattern.permute.xlu0 0
        %1696 = vperm.xlu0 %1695, %v1626
        %v1697 = vpop.permute.xlu0 %1696
        %v1699 = vmul.f32 %v1697, %v1693
        %1701 = vrot.lane.b32.xlu0 %v1688, 8
        %v1702 = vpop.permute.xlu0 %1701
        %v1704 = vadd.f32 %v1699, %v1702
        %vm1705 = vcmask 130112
        %1706 = vst.msk [vmem:[#allocation5] sm:$0xff] %vm1705, %v1704
        %1707 = vst.msk [vmem:[%s1618] sm:$0xff] %vm1171, %v1623
      $region68: #{transformer_forward.14} parent=59 // pred_fallthru
        _
      %p1708 = scmp.eq.s32.totalorder %s28, %s27
      // Predicated region
      $region69: #{transformer_forward.14} parent=59 // pred_check
        %p1709 = pneg %p1708
      $region70: #{transformer_forward.14} parent=59 // pred_check_branch
        %1711 = sbr.rel (%p1709) target = $region72
      $region71: #{transformer_forward.14} parent=59 // pred_region
        %v1712 = vld [vmem:[#allocation4] sm:$0xff]
        %v1713 = vrcp.pop %v1712
        %v1714 = vld [vmem:[#allocation5] sm:$0xff]
        %1716 = vset.pattern.permute.xlu0 0
        %1717 = vperm.xlu0 %1716, %v1713
        %v1718 = vpop.permute.xlu0 %1717
        %v1720 = vmul.f32 %v1714, %v1718
        %s1721 = scalar_lea.vmem [#allocation4], 8
        %v1722 = vld [vmem:[%s1721] sm:$0xff]
        %v1723 = vrcp.pop %v1722
        %1725 = vset.pattern.permute.xlu0 0
        %1726 = vperm.xlu0 %1725, %v1723
        %v1727 = vpop.permute.xlu0 %1726
        %v1729 = vmul.f32 %v1714, %v1727
        %v1730 = vld [vmem:[%s486] sm:$0xff]
        %vm1731 = vcmask 64512
        %v1732 = vsel %vm1731, %v1720, %v1729
        %v1733 = vadd.f32 %v1730, %v1732
        %vm1734 = vcmask 130048
        %1735 = vst.msk [vmem:[%s529] sm:$0xff] %vm1734, %v1733
      $region72: #{transformer_forward.14} parent=59 // pred_fallthru
        _
      %p1736 = scmp.lt.s32.totalorder %s26, 1
      %s1737 = scalar_select %p1736, %s26, 1
      %p1738 = scmp.lt.s32.totalorder %s27, 0
      %s1739 = scalar_select %p1738, %s27, 0
      %s1740 = sadd.s32 %s1739, %s1737
      %s1741 = smul.addr %s1740, 8
      %s1742 = scalar_lea.vmem %s10, %s1741
      // Predicated region
      $region73: #{transformer_forward.14} parent=59 // pred_check
        %p1743 = pneg %p313
      $region74: #{transformer_forward.14} parent=59 // pred_check_branch
        %1745 = sbr.rel (%p1743) target = $region76
      $region75: #{transformer_forward.14} parent=59 // pred_region
        _
      $region76: #{transformer_forward.14} parent=59 // pred_fallthru
        _
    $region60: #{transformer_forward.14} parent=5 // pred_fallthru
      _
    %p1746 = scmp.le.s32.totalorder 2, %s16
    // Predicated region
    $region77: #{transformer_forward.14} parent=5 // pred_check
      %p1747 = pneg %p1746
    $region78: #{transformer_forward.14} parent=5 // pred_check_branch
      %1749 = sbr.rel (%p1747) target = $region80
    $region79: #{transformer_forward.14} parent=5 // pred_region
      %s1750 = ssub.s32 %s16, 2
      // Predicated region
      $region81: #{transformer_forward.14} parent=79 // pred_check
        %p1751 = pneg %p319
      $region82: #{transformer_forward.14} parent=79 // pred_check_branch
        %1753 = sbr.rel (%p1751) target = $region84
      $region83: #{transformer_forward.14} parent=79 // pred_region
        %p1754 = scmp.lt.s32.totalorder %s29, 1
        %s1755 = scalar_select %p1754, %s29, 1
        %p1756 = scmp.lt.s32.totalorder %s30, 0
        %s1757 = scalar_select %p1756, %s30, 0
        %s1758 = sadd.s32 %s1757, %s1755
        %s1759 = smul.addr %s1758, 8
        %s1760 = scalar_lea.vmem %s10, %s1759
      $region84: #{transformer_forward.14} parent=79 // pred_fallthru
        _
    $region80: #{transformer_forward.14} parent=5 // pred_fallthru
      _
  $region6: #{transformer_forward.14} parent=0 // loop_footer
    %s20 = sadd.s32 1, %s16
  $region7: #{transformer_forward.14} parent=0 // loop_footer_branch
    %15 = sbr.rel target = $region3
  $region8: #{transformer_forward.14} parent=0 // loop_exit
    _

</llo_original>
